<compile_context>
chip_gen: v7x
topology: tpu7x:2x2x1
jax: 0.10.0
libtpu: 0.0.40
codegen_flags: <defaults>
</compile_context>

<pallas_src>
import functools

import numpy as np

import jax
import jax.numpy as jnp
from jax.experimental import pallas as pl
from jax.experimental.pallas import tpu as pltpu


# ------------------------------ fused kernel ------------------------------- #

def _lenet_kernel(lhs_ref, w1e_ref, w1o_ref, b1_ref, w2e_ref, w2o_ref, b2_ref,
                  wf1_ref, bf1_ref, wf2_ref, bf2_ref, out_ref,
                  s_pe, s_po, *, bb, k2):
    """One grid step = one block of `bb` samples; all ops are lane-dense."""
    f32 = jnp.float32
    pad2 = k2 // 2
    padq = (pad2 + 1) // 2                    # zero rows per side, per parity

    lhs = lhs_ref[0]                                            # (28*bb, k1*28)

    # ---- conv1: even / odd output columns via Toeplitz weights ('same'
    # x-padding folded into zero weight entries) -> two MXU dots, one LHS.
    a_even = jnp.dot(lhs, w1e_ref[...], preferred_element_type=f32)  # (28bb,224)
    a_odd = jnp.dot(lhs, w1o_ref[...], preferred_element_type=f32)

    # 2x2 maxpool: x-pool is elementwise (even vs odd columns); y-pool is a max
    # of the two contiguous row-parity halves (rows ordered (y%2, (y//2)%2, ...)).
    xpool = jnp.maximum(a_even, a_odd)                               # (28bb,224)
    pool1 = jnp.maximum(xpool[:14 * bb, :], xpool[14 * bb:, :])      # (14bb,224)
    # bias is per-channel and relu is monotone -> both commute with the maxes.
    pool1 = jnp.maximum(pool1 + b1_ref[...], 0.0)

    # ---- pool1 output, split by output-row parity (rows ordered (row, n)),
    # with `padq` zero rows on each side so every conv2 tap below reads a
    # contiguous (7*bb, 224) slice.  Two wide stores, no scatter.
    s_pe[...] = jnp.zeros_like(s_pe)
    s_po[...] = jnp.zeros_like(s_po)
    s_pe[padq * bb:(padq + 7) * bb, :] = pool1[:7 * bb, :]           # even rows
    s_po[padq * bb:(padq + 7) * bb, :] = pool1[7 * bb:, :]           # odd rows

    # ---- conv2 fused with 2x2 maxpool: accumulate k2 row-taps for the four
    # output quadrants (row parity ay, column parity bx) directly; pool2 is
    # then a max over the four accumulators.
    bufs = (s_pe, s_po)
    taps = []
    for s in range(k2 + 1):                   # distinct shifted input slices
        d = s - pad2
        start = (padq + d // 2) * bb
        taps.append(bufs[d % 2][start:start + 7 * bb, :])            # (7bb,224)

    acc = [[jnp.zeros((7 * bb, 224), f32) for _ in range(2)] for _ in range(2)]
    for dy in range(k2):
        w_e = w2e_ref[dy * 224:(dy + 1) * 224, :]                    # (224,224)
        w_o = w2o_ref[dy * 224:(dy + 1) * 224, :]
        for ay in range(2):
            l = taps[ay + dy]
            acc[ay][0] += jnp.dot(l, w_e, preferred_element_type=f32)
            acc[ay][1] += jnp.dot(l, w_o, preferred_element_type=f32)

    pooled2 = jnp.maximum(jnp.maximum(acc[0][0], acc[0][1]),
                          jnp.maximum(acc[1][0], acc[1][1]))         # (7bb,224)
    pooled2 = jnp.maximum(pooled2 + b2_ref[...], 0.0)

    # ---- fc1 as a sum of 7 row-block matmuls (fc1 weight rows pre-permuted to
    # the kernel's (yo, xo, c) flatten order) -> no flatten / scatter needed.
    h1 = jnp.zeros((bb, 128), f32)
    for q in range(7):
        h1 += jnp.dot(pooled2[q * bb:(q + 1) * bb, :],
                      wf1_ref[q * 224:(q + 1) * 224, :],
                      preferred_element_type=f32)
    h1 = jnp.maximum(h1 + bf1_ref[...], 0.0)

    # ---- fc2 + log_softmax epilogue.
    logits = jnp.dot(h1, wf2_ref[...], preferred_element_type=f32) + bf2_ref[...]
    mx = jnp.max(logits, axis=-1, keepdims=True)
    sh = logits - mx
    lse = jnp.log(jnp.sum(jnp.exp(sh), axis=-1, keepdims=True))
    out_ref[0] = sh - lse


# ------------------------------ wrapper (JAX) ------------------------------ #

def _conv1_lhs(x2d, k1, bb):
    """(N,28,28) -> (N//bb, 28*bb, k1*28) conv1 Toeplitz LHS.

    Rows within a block are ordered (a=y%2, g=(y//2)%2, r=y//4, n) so that the
    2x2 pool after conv1 is a max of two contiguous halves and the resulting
    pool1 rows come out already parity-split for conv2."""
    n = x2d.shape[0]
    p1 = k1 // 2
    xp = jnp.pad(x2d, ((0, 0), (p1, p1), (0, 0)))                    # y-pad only
    slabs = jnp.stack([xp[:, dy:dy + 28, :] for dy in range(k1)], axis=2)
    slabs = slabs.reshape(n // bb, bb, 7, 2, 2, k1, 28)   # (blk,nl,r,g,a,dy,u)
    lhs = jnp.transpose(slabs, (0, 4, 3, 2, 1, 5, 6))     # (blk,a,g,r,nl,dy,u)
    return lhs.reshape(n // bb, 28 * bb, k1 * 28)


def init_torch_like_params(key, k1, k2):
    """Random params in PyTorch layouts (forward correctness only)."""
    ks = jax.random.split(key, 8)

    def rnd(k, shape, fan_in):
        return jax.random.normal(k, shape, jnp.float32) / jnp.sqrt(fan_in)

    return {
        "conv1_w": rnd(ks[0], (16, 1, k1, k1), k1 * k1),
        "conv1_b": rnd(ks[1], (16,), 16.0),
        "conv2_w": rnd(ks[2], (32, 16, k2, k2), k2 * k2 * 16),
        "conv2_b": rnd(ks[3], (32,), 32.0),
        "fc1_w": rnd(ks[4], (128, 1568), 1568.0),
        "fc1_b": rnd(ks[5], (128,), 128.0),
        "fc2_w": rnd(ks[6], (10, 128), 128.0),
        "fc2_b": rnd(ks[7], (10,), 10.0),
    }


def prepare_kernel_params(p, k1, k2):
    """One-time host-side re-layout of PyTorch weights into kernel layouts."""
    p1, p2 = k1 // 2, k2 // 2
    w1 = np.asarray(p["conv1_w"], np.float32)          # (16, 1, k1, k1)
    w2 = np.asarray(p["conv2_w"], np.float32)          # (32, 16, k2, k2)
    fc1_w = np.asarray(p["fc1_w"], np.float32)         # (128, 1568)
    fc2_w = np.asarray(p["fc2_w"], np.float32)         # (10, 128)
    b1 = np.asarray(p["conv1_b"], np.float32)
    b2 = np.asarray(p["conv2_b"], np.float32)

    # conv1 Toeplitz weights (even / odd output columns): (k1*28, 14*16).
    w1t = np.zeros((2, k1, 28, 14, 16), np.float32)     # [bx, dy, u, xo, c]
    for bx in range(2):
        for dy in range(k1):
            for u in range(28):
                for xo in range(14):
                    dx = u - (2 * xo + bx) + p1
                    if 0 <= dx < k1:
                        w1t[bx, dy, u, xo, :] = w1[:, 0, dy, dx]

    # conv2 Toeplitz weights (even / odd output columns), stacked over dy:
    # (k2*224, 7*32); x 'same' padding is folded into zero entries.
    w2t = np.zeros((2, k2, 14, 16, 7, 32), np.float32)  # [bx,dy,xin,ci,xo2,co]
    for bx in range(2):
        for dy in range(k2):
            for xin in range(14):
                for xo2 in range(7):
                    dx = xin - (2 * xo2 + bx) + p2
                    if 0 <= dx < k2:
                        w2t[bx, dy, xin, :, xo2, :] = w2[:, :, dy, dx].T

    # fc1 rows permuted from torch's (c, yo, xo) flatten to the kernel's
    # (yo, xo, c) order; fc2 transposed.
    wf1 = np.transpose(fc1_w.reshape(128, 32, 7, 7), (2, 3, 1, 0)).reshape(1568, 128)

    return {
        "w1e": jnp.asarray(w1t[0].reshape(k1 * 28, 224)),
        "w1o": jnp.asarray(w1t[1].reshape(k1 * 28, 224)),
        "b1": jnp.asarray(np.tile(b1, 14).reshape(1, 224)),
        "w2e": jnp.asarray(w2t[0].reshape(k2 * 224, 224)),
        "w2o": jnp.asarray(w2t[1].reshape(k2 * 224, 224)),
        "b2": jnp.asarray(np.tile(b2, 7).reshape(1, 224)),
        "wf1": jnp.asarray(wf1),
        "bf1": jnp.asarray(np.asarray(p["fc1_b"], np.float32).reshape(1, 128)),
        "wf2": jnp.asarray(fc2_w.T),
        "bf2": jnp.asarray(np.asarray(p["fc2_b"], np.float32).reshape(1, 10)),
    }


@functools.partial(jax.jit, static_argnames=("k1", "k2", "block_batch"))
def lenet_multi_forward(kp, x_nchw, *, k1, k2, block_batch=1):
    """x_nchw: (N, 1, 28, 28) float32 -> (N, 10) log-probabilities."""
    assert k1 % 2 == 1 and k2 % 2 == 1, "'same' conv assumes odd kernels"
    n = x_nchw.shape[0]
    assert x_nchw.shape[1:] == (1, 28, 28), x_nchw.shape
    bb = block_batch
    assert n % bb == 0, (n, bb)
    nb = n // bb
    pad2 = k2 // 2
    padq = (pad2 + 1) // 2
    kdim1 = k1 * 28

    lhs = _conv1_lhs(x_nchw.reshape(n, 28, 28), k1, bb)

    weight_args = (kp["w1e"], kp["w1o"], kp["b1"], kp["w2e"], kp["w2o"],
                   kp["b2"], kp["wf1"], kp["bf1"], kp["wf2"], kp["bf2"])
    in_specs = ([pl.BlockSpec((1, 28 * bb, kdim1), lambda i: (i, 0, 0))] +
                [pl.BlockSpec(w.shape, lambda i: (0, 0)) for w in weight_args])
    out_spec = pl.BlockSpec((1, bb, 10), lambda i: (i, 0, 0))

    flops = 2 * n * (2 * 28 * kdim1 * 224 + 4 * k2 * 7 * 224 * 224
                     + 1568 * 128 + 128 * 10)
    bytes_accessed = 4 * (int(lhs.size) + sum(int(w.size) for w in weight_args)
                          + n * 10)

    kernel = functools.partial(_lenet_kernel, bb=bb, k2=k2)
    out = pl.pallas_call(
        kernel,
        out_shape=jax.ShapeDtypeStruct((nb, bb, 10), jnp.float32),
        grid=(nb,),
        in_specs=in_specs,
        out_specs=out_spec,
        scratch_shapes=[
            pltpu.VMEM(((7 + 2 * padq) * bb, 224), jnp.float32),   # even rows
            pltpu.VMEM(((7 + 2 * padq) * bb, 224), jnp.float32),   # odd rows
        ],
        compiler_params=pltpu.CompilerParams(
            dimension_semantics=("parallel",)),
        cost_estimate=pl.CostEstimate(
            flops=flops, transcendentals=16 * n, bytes_accessed=bytes_accessed),
    )(lhs, *weight_args)
    return out.reshape(n, 10)


# --------------------------- pure-JAX reference ----------------------------- #

def reference_forward(p, x):
    dn = ("NCHW", "OIHW", "NCHW")
    hi = jax.lax.Precision.HIGHEST
    z = jax.lax.conv_general_dilated(x, p["conv1_w"], (1, 1), "SAME",
                                     dimension_numbers=dn, precision=hi)
    z = jnp.maximum(z + p["conv1_b"].reshape(1, -1, 1, 1), 0.0)
    z = jax.lax.reduce_window(z, -jnp.inf, jax.lax.max, (1, 1, 2, 2), (1, 1, 2, 2), "VALID")
    z = jax.lax.conv_general_dilated(z, p["conv2_w"], (1, 1), "SAME",
                                     dimension_numbers=dn, precision=hi)
    z = jnp.maximum(z + p["conv2_b"].reshape(1, -1, 1, 1), 0.0)
    z = jax.lax.reduce_window(z, -jnp.inf, jax.lax.max, (1, 1, 2, 2), (1, 1, 2, 2), "VALID")
    z = z.reshape(z.shape[0], -1)
    z = jnp.maximum(jnp.dot(z, p["fc1_w"].T, precision=hi) + p["fc1_b"], 0.0)
    z = jnp.dot(z, p["fc2_w"].T, precision=hi) + p["fc2_b"]
    return jax.nn.log_softmax(z, axis=-1)


if __name__ == "__main__":
    # Spatial size 28 is forced by the module (fc1 expects 1568 = 32*7*7).
    # Search-space choice: kernel1=3, kernel2=5; batch kept small (2).
    KERNEL1, KERNEL2 = 3, 5

    key = jax.random.PRNGKey(0)
    k_params, k_input = jax.random.split(key)
    tparams = init_torch_like_params(k_params, KERNEL1, KERNEL2)
    kparams = prepare_kernel_params(tparams, KERNEL1, KERNEL2)
    x = jax.random.normal(k_input, (2, 1, 28, 28), jnp.float32)

    out = lenet_multi_forward(kparams, x, k1=KERNEL1, k2=KERNEL2)
    out = jax.block_until_ready(out)

    assert out.shape == (2, 10), out.shape
    assert bool(jnp.all(jnp.isfinite(out)))
    # log_softmax rows must sum (in prob space) to 1.
    assert bool(jnp.allclose(jnp.sum(jnp.exp(out), axis=1), 1.0, atol=1e-4))
    # Full numerical check against a pure-JAX (lax.conv) reference.
    ref = jax.jit(reference_forward)(tparams, x)
    max_diff = float(jnp.max(jnp.abs(out - ref)))
    assert bool(jnp.allclose(out, ref, rtol=2e-2, atol=2e-2)), max_diff
    print("KERNEL_OK")
</pallas_src>

<mosaic_0001>
module attributes {stable_mosaic.version = 11 : i64} {
  func.func @_lenet_kernel(%arg0: i32, %arg1: memref<1x28x84xf32, #tpu.memory_space<vmem>>, %arg2: memref<84x224xf32, #tpu.memory_space<vmem>>, %arg3: memref<84x224xf32, #tpu.memory_space<vmem>>, %arg4: memref<1x224xf32, #tpu.memory_space<vmem>>, %arg5: memref<1120x224xf32, #tpu.memory_space<vmem>>, %arg6: memref<1120x224xf32, #tpu.memory_space<vmem>>, %arg7: memref<1x224xf32, #tpu.memory_space<vmem>>, %arg8: memref<1568x128xf32, #tpu.memory_space<vmem>>, %arg9: memref<1x128xf32, #tpu.memory_space<vmem>>, %arg10: memref<128x10xf32, #tpu.memory_space<vmem>>, %arg11: memref<1x10xf32, #tpu.memory_space<vmem>>, %arg12: memref<1x1x10xf32, #tpu.memory_space<vmem>>, %arg13: memref<9x224xf32, #tpu.memory_space<vmem>>, %arg14: memref<9x224xf32, #tpu.memory_space<vmem>>) attributes {dimension_semantics = [#tpu.dimension_semantics<parallel>], iteration_bounds = array<i64: 2>, scalar_prefetch = 0 : i64, scratch_operands = 2 : i64, tpu.core_type = #tpu.core_type<tc>, window_params = [{transform_indices = @transform_0, window_bounds = array<i64: 1, 28, 84>}, {pipeline_mode = #tpu.pipeline_mode<synchronous>, transform_indices = @transform_1, window_bounds = array<i64: 84, 224>}, {pipeline_mode = #tpu.pipeline_mode<synchronous>, transform_indices = @transform_2, window_bounds = array<i64: 84, 224>}, {pipeline_mode = #tpu.pipeline_mode<synchronous>, transform_indices = @transform_3, window_bounds = array<i64: 1, 224>}, {pipeline_mode = #tpu.pipeline_mode<synchronous>, transform_indices = @transform_4, window_bounds = array<i64: 1120, 224>}, {pipeline_mode = #tpu.pipeline_mode<synchronous>, transform_indices = @transform_5, window_bounds = array<i64: 1120, 224>}, {pipeline_mode = #tpu.pipeline_mode<synchronous>, transform_indices = @transform_6, window_bounds = array<i64: 1, 224>}, {pipeline_mode = #tpu.pipeline_mode<synchronous>, transform_indices = @transform_7, window_bounds = array<i64: 1568, 128>}, {pipeline_mode = #tpu.pipeline_mode<synchronous>, transform_indices = @transform_8, window_bounds = array<i64: 1, 128>}, {pipeline_mode = #tpu.pipeline_mode<synchronous>, transform_indices = @transform_9, window_bounds = array<i64: 128, 10>}, {pipeline_mode = #tpu.pipeline_mode<synchronous>, transform_indices = @transform_10, window_bounds = array<i64: 1, 10>}, {transform_indices = @transform_11, window_bounds = array<i64: 1, 1, 10>}]} {
    %c0 = arith.constant 0 : index
    %c0_0 = arith.constant 0 : index
    %c0_1 = arith.constant 0 : index
    %0 = vector.load %arg1[%c0, %c0_0, %c0_1] : memref<1x28x84xf32, #tpu.memory_space<vmem>>, vector<1x28x84xf32>
    %1 = vector.shape_cast %0 : vector<1x28x84xf32> to vector<28x84xf32>
    %c0_2 = arith.constant 0 : index
    %c0_3 = arith.constant 0 : index
    %2 = vector.load %arg2[%c0_2, %c0_3] : memref<84x224xf32, #tpu.memory_space<vmem>>, vector<84x224xf32>
    %cst = arith.constant dense<0.000000e+00> : vector<28x224xf32>
    %3 = tpu.matmul %1, %2, %cst {dimension_numbers = #tpu.dot_dimension_numbers<[1], [0], [0], [1], [0, 0, 1, 1], [], []>} : vector<28x84xf32>, vector<84x224xf32>, vector<28x224xf32> -> vector<28x224xf32>
    %c0_4 = arith.constant 0 : index
    %c0_5 = arith.constant 0 : index
    %4 = vector.load %arg3[%c0_4, %c0_5] : memref<84x224xf32, #tpu.memory_space<vmem>>, vector<84x224xf32>
    %cst_6 = arith.constant dense<0.000000e+00> : vector<28x224xf32>
    %5 = tpu.matmul %1, %4, %cst_6 {dimension_numbers = #tpu.dot_dimension_numbers<[1], [0], [0], [1], [0, 0, 1, 1], [], []>} : vector<28x84xf32>, vector<84x224xf32>, vector<28x224xf32> -> vector<28x224xf32>
    %6 = arith.maximumf %3, %5 : vector<28x224xf32>
    %7 = vector.extract_strided_slice %6 {offsets = [0, 0], sizes = [14, 224], strides = [1, 1]} : vector<28x224xf32> to vector<14x224xf32>
    %8 = vector.extract_strided_slice %6 {offsets = [14, 0], sizes = [14, 224], strides = [1, 1]} : vector<28x224xf32> to vector<14x224xf32>
    %9 = arith.maximumf %7, %8 : vector<14x224xf32>
    %c0_7 = arith.constant 0 : index
    %c0_8 = arith.constant 0 : index
    %10 = vector.load %arg4[%c0_7, %c0_8] : memref<1x224xf32, #tpu.memory_space<vmem>>, vector<1x224xf32>
    %11 = vector.broadcast %10 : vector<1x224xf32> to vector<14x224xf32>
    %12 = arith.addf %9, %11 : vector<14x224xf32>
    %cst_9 = arith.constant 0.000000e+00 : f32
    %13 = vector.broadcast %cst_9 : f32 to vector<14x224xf32>
    %14 = arith.maximumf %12, %13 : vector<14x224xf32>
    %cst_10 = arith.constant 0.000000e+00 : f32
    %15 = vector.broadcast %cst_10 : f32 to vector<9x224xf32>
    %c0_11 = arith.constant 0 : index
    %c0_12 = arith.constant 0 : index
    %16 = vector.load %arg13[%c0_11, %c0_12] : memref<9x224xf32, #tpu.memory_space<vmem>>, vector<9x224xf32>
    tpu.vector_store %arg13[%c0_11, %c0_12], %15 {strides = array<i32>} : memref<9x224xf32, #tpu.memory_space<vmem>>, vector<9x224xf32>,
    %cst_13 = arith.constant 0.000000e+00 : f32
    %17 = vector.broadcast %cst_13 : f32 to vector<9x224xf32>
    %c0_14 = arith.constant 0 : index
    %c0_15 = arith.constant 0 : index
    %18 = vector.load %arg14[%c0_14, %c0_15] : memref<9x224xf32, #tpu.memory_space<vmem>>, vector<9x224xf32>
    tpu.vector_store %arg14[%c0_14, %c0_15], %17 {strides = array<i32>} : memref<9x224xf32, #tpu.memory_space<vmem>>, vector<9x224xf32>,
    %19 = vector.extract_strided_slice %14 {offsets = [0, 0], sizes = [7, 224], strides = [1, 1]} : vector<14x224xf32> to vector<7x224xf32>
    %c1 = arith.constant 1 : index
    %c0_16 = arith.constant 0 : index
    %20 = vector.load %arg13[%c1, %c0_16] : memref<9x224xf32, #tpu.memory_space<vmem>>, vector<7x224xf32>
    tpu.vector_store %arg13[%c1, %c0_16], %19 {strides = array<i32>} : memref<9x224xf32, #tpu.memory_space<vmem>>, vector<7x224xf32>,
    %21 = vector.extract_strided_slice %14 {offsets = [7, 0], sizes = [7, 224], strides = [1, 1]} : vector<14x224xf32> to vector<7x224xf32>
    %c1_17 = arith.constant 1 : index
    %c0_18 = arith.constant 0 : index
    %22 = vector.load %arg14[%c1_17, %c0_18] : memref<9x224xf32, #tpu.memory_space<vmem>>, vector<7x224xf32>
    tpu.vector_store %arg14[%c1_17, %c0_18], %21 {strides = array<i32>} : memref<9x224xf32, #tpu.memory_space<vmem>>, vector<7x224xf32>,
    %c0_19 = arith.constant 0 : index
    %c0_20 = arith.constant 0 : index
    %23 = vector.load %arg13[%c0_19, %c0_20] : memref<9x224xf32, #tpu.memory_space<vmem>>, vector<7x224xf32>
    %c0_21 = arith.constant 0 : index
    %c0_22 = arith.constant 0 : index
    %24 = vector.load %arg14[%c0_21, %c0_22] : memref<9x224xf32, #tpu.memory_space<vmem>>, vector<7x224xf32>
    %c1_23 = arith.constant 1 : index
    %c0_24 = arith.constant 0 : index
    %25 = vector.load %arg13[%c1_23, %c0_24] : memref<9x224xf32, #tpu.memory_space<vmem>>, vector<7x224xf32>
    %c1_25 = arith.constant 1 : index
    %c0_26 = arith.constant 0 : index
    %26 = vector.load %arg14[%c1_25, %c0_26] : memref<9x224xf32, #tpu.memory_space<vmem>>, vector<7x224xf32>
    %c2 = arith.constant 2 : index
    %c0_27 = arith.constant 0 : index
    %27 = vector.load %arg13[%c2, %c0_27] : memref<9x224xf32, #tpu.memory_space<vmem>>, vector<7x224xf32>
    %c2_28 = arith.constant 2 : index
    %c0_29 = arith.constant 0 : index
    %28 = vector.load %arg14[%c2_28, %c0_29] : memref<9x224xf32, #tpu.memory_space<vmem>>, vector<7x224xf32>
    %cst_30 = arith.constant 0.000000e+00 : f32
    %29 = vector.broadcast %cst_30 : f32 to vector<7x224xf32>
    %cst_31 = arith.constant 0.000000e+00 : f32
    %30 = vector.broadcast %cst_31 : f32 to vector<7x224xf32>
    %cst_32 = arith.constant 0.000000e+00 : f32
    %31 = vector.broadcast %cst_32 : f32 to vector<7x224xf32>
    %cst_33 = arith.constant 0.000000e+00 : f32
    %32 = vector.broadcast %cst_33 : f32 to vector<7x224xf32>
    %c0_34 = arith.constant 0 : index
    %c0_35 = arith.constant 0 : index
    %33 = vector.load %arg5[%c0_34, %c0_35] : memref<1120x224xf32, #tpu.memory_space<vmem>>, vector<224x224xf32>
    %c0_36 = arith.constant 0 : index
    %c0_37 = arith.constant 0 : index
    %34 = vector.load %arg6[%c0_36, %c0_37] : memref<1120x224xf32, #tpu.memory_space<vmem>>, vector<224x224xf32>
    %cst_38 = arith.constant dense<0.000000e+00> : vector<7x224xf32>
    %35 = tpu.matmul %23, %33, %cst_38 {dimension_numbers = #tpu.dot_dimension_numbers<[1], [0], [0], [1], [0, 0, 1, 1], [], []>} : vector<7x224xf32>, vector<224x224xf32>, vector<7x224xf32> -> vector<7x224xf32>
    %36 = arith.addf %29, %35 : vector<7x224xf32>
    %cst_39 = arith.constant dense<0.000000e+00> : vector<7x224xf32>
    %37 = tpu.matmul %23, %34, %cst_39 {dimension_numbers = #tpu.dot_dimension_numbers<[1], [0], [0], [1], [0, 0, 1, 1], [], []>} : vector<7x224xf32>, vector<224x224xf32>, vector<7x224xf32> -> vector<7x224xf32>
    %38 = arith.addf %30, %37 : vector<7x224xf32>
    %cst_40 = arith.constant dense<0.000000e+00> : vector<7x224xf32>
    %39 = tpu.matmul %24, %33, %cst_40 {dimension_numbers = #tpu.dot_dimension_numbers<[1], [0], [0], [1], [0, 0, 1, 1], [], []>} : vector<7x224xf32>, vector<224x224xf32>, vector<7x224xf32> -> vector<7x224xf32>
    %40 = arith.addf %31, %39 : vector<7x224xf32>
    %cst_41 = arith.constant dense<0.000000e+00> : vector<7x224xf32>
    %41 = tpu.matmul %24, %34, %cst_41 {dimension_numbers = #tpu.dot_dimension_numbers<[1], [0], [0], [1], [0, 0, 1, 1], [], []>} : vector<7x224xf32>, vector<224x224xf32>, vector<7x224xf32> -> vector<7x224xf32>
    %42 = arith.addf %32, %41 : vector<7x224xf32>
    %c224 = arith.constant 224 : index
    %c0_42 = arith.constant 0 : index
    %43 = vector.load %arg5[%c224, %c0_42] : memref<1120x224xf32, #tpu.memory_space<vmem>>, vector<224x224xf32>
    %c224_43 = arith.constant 224 : index
    %c0_44 = arith.constant 0 : index
    %44 = vector.load %arg6[%c224_43, %c0_44] : memref<1120x224xf32, #tpu.memory_space<vmem>>, vector<224x224xf32>
    %cst_45 = arith.constant dense<0.000000e+00> : vector<7x224xf32>
    %45 = tpu.matmul %24, %43, %cst_45 {dimension_numbers = #tpu.dot_dimension_numbers<[1], [0], [0], [1], [0, 0, 1, 1], [], []>} : vector<7x224xf32>, vector<224x224xf32>, vector<7x224xf32> -> vector<7x224xf32>
    %46 = arith.addf %36, %45 : vector<7x224xf32>
    %cst_46 = arith.constant dense<0.000000e+00> : vector<7x224xf32>
    %47 = tpu.matmul %24, %44, %cst_46 {dimension_numbers = #tpu.dot_dimension_numbers<[1], [0], [0], [1], [0, 0, 1, 1], [], []>} : vector<7x224xf32>, vector<224x224xf32>, vector<7x224xf32> -> vector<7x224xf32>
    %48 = arith.addf %38, %47 : vector<7x224xf32>
    %cst_47 = arith.constant dense<0.000000e+00> : vector<7x224xf32>
    %49 = tpu.matmul %25, %43, %cst_47 {dimension_numbers = #tpu.dot_dimension_numbers<[1], [0], [0], [1], [0, 0, 1, 1], [], []>} : vector<7x224xf32>, vector<224x224xf32>, vector<7x224xf32> -> vector<7x224xf32>
    %50 = arith.addf %40, %49 : vector<7x224xf32>
    %cst_48 = arith.constant dense<0.000000e+00> : vector<7x224xf32>
    %51 = tpu.matmul %25, %44, %cst_48 {dimension_numbers = #tpu.dot_dimension_numbers<[1], [0], [0], [1], [0, 0, 1, 1], [], []>} : vector<7x224xf32>, vector<224x224xf32>, vector<7x224xf32> -> vector<7x224xf32>
    %52 = arith.addf %42, %51 : vector<7x224xf32>
    %c448 = arith.constant 448 : index
    %c0_49 = arith.constant 0 : index
    %53 = vector.load %arg5[%c448, %c0_49] : memref<1120x224xf32, #tpu.memory_space<vmem>>, vector<224x224xf32>
    %c448_50 = arith.constant 448 : index
    %c0_51 = arith.constant 0 : index
    %54 = vector.load %arg6[%c448_50, %c0_51] : memref<1120x224xf32, #tpu.memory_space<vmem>>, vector<224x224xf32>
    %cst_52 = arith.constant dense<0.000000e+00> : vector<7x224xf32>
    %55 = tpu.matmul %25, %53, %cst_52 {dimension_numbers = #tpu.dot_dimension_numbers<[1], [0], [0], [1], [0, 0, 1, 1], [], []>} : vector<7x224xf32>, vector<224x224xf32>, vector<7x224xf32> -> vector<7x224xf32>
    %56 = arith.addf %46, %55 : vector<7x224xf32>
    %cst_53 = arith.constant dense<0.000000e+00> : vector<7x224xf32>
    %57 = tpu.matmul %25, %54, %cst_53 {dimension_numbers = #tpu.dot_dimension_numbers<[1], [0], [0], [1], [0, 0, 1, 1], [], []>} : vector<7x224xf32>, vector<224x224xf32>, vector<7x224xf32> -> vector<7x224xf32>
    %58 = arith.addf %48, %57 : vector<7x224xf32>
    %cst_54 = arith.constant dense<0.000000e+00> : vector<7x224xf32>
    %59 = tpu.matmul %26, %53, %cst_54 {dimension_numbers = #tpu.dot_dimension_numbers<[1], [0], [0], [1], [0, 0, 1, 1], [], []>} : vector<7x224xf32>, vector<224x224xf32>, vector<7x224xf32> -> vector<7x224xf32>
    %60 = arith.addf %50, %59 : vector<7x224xf32>
    %cst_55 = arith.constant dense<0.000000e+00> : vector<7x224xf32>
    %61 = tpu.matmul %26, %54, %cst_55 {dimension_numbers = #tpu.dot_dimension_numbers<[1], [0], [0], [1], [0, 0, 1, 1], [], []>} : vector<7x224xf32>, vector<224x224xf32>, vector<7x224xf32> -> vector<7x224xf32>
    %62 = arith.addf %52, %61 : vector<7x224xf32>
    %c672 = arith.constant 672 : index
    %c0_56 = arith.constant 0 : index
    %63 = vector.load %arg5[%c672, %c0_56] : memref<1120x224xf32, #tpu.memory_space<vmem>>, vector<224x224xf32>
    %c672_57 = arith.constant 672 : index
    %c0_58 = arith.constant 0 : index
    %64 = vector.load %arg6[%c672_57, %c0_58] : memref<1120x224xf32, #tpu.memory_space<vmem>>, vector<224x224xf32>
    %cst_59 = arith.constant dense<0.000000e+00> : vector<7x224xf32>
    %65 = tpu.matmul %26, %63, %cst_59 {dimension_numbers = #tpu.dot_dimension_numbers<[1], [0], [0], [1], [0, 0, 1, 1], [], []>} : vector<7x224xf32>, vector<224x224xf32>, vector<7x224xf32> -> vector<7x224xf32>
    %66 = arith.addf %56, %65 : vector<7x224xf32>
    %cst_60 = arith.constant dense<0.000000e+00> : vector<7x224xf32>
    %67 = tpu.matmul %26, %64, %cst_60 {dimension_numbers = #tpu.dot_dimension_numbers<[1], [0], [0], [1], [0, 0, 1, 1], [], []>} : vector<7x224xf32>, vector<224x224xf32>, vector<7x224xf32> -> vector<7x224xf32>
    %68 = arith.addf %58, %67 : vector<7x224xf32>
    %cst_61 = arith.constant dense<0.000000e+00> : vector<7x224xf32>
    %69 = tpu.matmul %27, %63, %cst_61 {dimension_numbers = #tpu.dot_dimension_numbers<[1], [0], [0], [1], [0, 0, 1, 1], [], []>} : vector<7x224xf32>, vector<224x224xf32>, vector<7x224xf32> -> vector<7x224xf32>
    %70 = arith.addf %60, %69 : vector<7x224xf32>
    %cst_62 = arith.constant dense<0.000000e+00> : vector<7x224xf32>
    %71 = tpu.matmul %27, %64, %cst_62 {dimension_numbers = #tpu.dot_dimension_numbers<[1], [0], [0], [1], [0, 0, 1, 1], [], []>} : vector<7x224xf32>, vector<224x224xf32>, vector<7x224xf32> -> vector<7x224xf32>
    %72 = arith.addf %62, %71 : vector<7x224xf32>
    %c896 = arith.constant 896 : index
    %c0_63 = arith.constant 0 : index
    %73 = vector.load %arg5[%c896, %c0_63] : memref<1120x224xf32, #tpu.memory_space<vmem>>, vector<224x224xf32>
    %c896_64 = arith.constant 896 : index
    %c0_65 = arith.constant 0 : index
    %74 = vector.load %arg6[%c896_64, %c0_65] : memref<1120x224xf32, #tpu.memory_space<vmem>>, vector<224x224xf32>
    %cst_66 = arith.constant dense<0.000000e+00> : vector<7x224xf32>
    %75 = tpu.matmul %27, %73, %cst_66 {dimension_numbers = #tpu.dot_dimension_numbers<[1], [0], [0], [1], [0, 0, 1, 1], [], []>} : vector<7x224xf32>, vector<224x224xf32>, vector<7x224xf32> -> vector<7x224xf32>
    %76 = arith.addf %66, %75 : vector<7x224xf32>
    %cst_67 = arith.constant dense<0.000000e+00> : vector<7x224xf32>
    %77 = tpu.matmul %27, %74, %cst_67 {dimension_numbers = #tpu.dot_dimension_numbers<[1], [0], [0], [1], [0, 0, 1, 1], [], []>} : vector<7x224xf32>, vector<224x224xf32>, vector<7x224xf32> -> vector<7x224xf32>
    %78 = arith.addf %68, %77 : vector<7x224xf32>
    %cst_68 = arith.constant dense<0.000000e+00> : vector<7x224xf32>
    %79 = tpu.matmul %28, %73, %cst_68 {dimension_numbers = #tpu.dot_dimension_numbers<[1], [0], [0], [1], [0, 0, 1, 1], [], []>} : vector<7x224xf32>, vector<224x224xf32>, vector<7x224xf32> -> vector<7x224xf32>
    %80 = arith.addf %70, %79 : vector<7x224xf32>
    %cst_69 = arith.constant dense<0.000000e+00> : vector<7x224xf32>
    %81 = tpu.matmul %28, %74, %cst_69 {dimension_numbers = #tpu.dot_dimension_numbers<[1], [0], [0], [1], [0, 0, 1, 1], [], []>} : vector<7x224xf32>, vector<224x224xf32>, vector<7x224xf32> -> vector<7x224xf32>
    %82 = arith.addf %72, %81 : vector<7x224xf32>
    %83 = arith.maximumf %76, %78 : vector<7x224xf32>
    %84 = arith.maximumf %80, %82 : vector<7x224xf32>
    %85 = arith.maximumf %83, %84 : vector<7x224xf32>
    %c0_70 = arith.constant 0 : index
    %c0_71 = arith.constant 0 : index
    %86 = vector.load %arg7[%c0_70, %c0_71] : memref<1x224xf32, #tpu.memory_space<vmem>>, vector<1x224xf32>
    %87 = vector.broadcast %86 : vector<1x224xf32> to vector<7x224xf32>
    %88 = arith.addf %85, %87 : vector<7x224xf32>
    %cst_72 = arith.constant 0.000000e+00 : f32
    %89 = vector.broadcast %cst_72 : f32 to vector<7x224xf32>
    %90 = arith.maximumf %88, %89 : vector<7x224xf32>
    %cst_73 = arith.constant 0.000000e+00 : f32
    %91 = vector.broadcast %cst_73 : f32 to vector<1x128xf32>
    %92 = vector.extract_strided_slice %90 {offsets = [0, 0], sizes = [1, 224], strides = [1, 1]} : vector<7x224xf32> to vector<1x224xf32>
    %c0_74 = arith.constant 0 : index
    %c0_75 = arith.constant 0 : index
    %93 = vector.load %arg8[%c0_74, %c0_75] : memref<1568x128xf32, #tpu.memory_space<vmem>>, vector<224x128xf32>
    %cst_76 = arith.constant dense<0.000000e+00> : vector<1x128xf32>
    %94 = tpu.matmul %92, %93, %cst_76 {dimension_numbers = #tpu.dot_dimension_numbers<[1], [0], [0], [1], [0, 0, 1, 1], [], []>} : vector<1x224xf32>, vector<224x128xf32>, vector<1x128xf32> -> vector<1x128xf32>
    %95 = arith.addf %91, %94 : vector<1x128xf32>
    %96 = vector.extract_strided_slice %90 {offsets = [1, 0], sizes = [1, 224], strides = [1, 1]} : vector<7x224xf32> to vector<1x224xf32>
    %c224_77 = arith.constant 224 : index
    %c0_78 = arith.constant 0 : index
    %97 = vector.load %arg8[%c224_77, %c0_78] : memref<1568x128xf32, #tpu.memory_space<vmem>>, vector<224x128xf32>
    %cst_79 = arith.constant dense<0.000000e+00> : vector<1x128xf32>
    %98 = tpu.matmul %96, %97, %cst_79 {dimension_numbers = #tpu.dot_dimension_numbers<[1], [0], [0], [1], [0, 0, 1, 1], [], []>} : vector<1x224xf32>, vector<224x128xf32>, vector<1x128xf32> -> vector<1x128xf32>
    %99 = arith.addf %95, %98 : vector<1x128xf32>
    %100 = vector.extract_strided_slice %90 {offsets = [2, 0], sizes = [1, 224], strides = [1, 1]} : vector<7x224xf32> to vector<1x224xf32>
    %c448_80 = arith.constant 448 : index
    %c0_81 = arith.constant 0 : index
    %101 = vector.load %arg8[%c448_80, %c0_81] : memref<1568x128xf32, #tpu.memory_space<vmem>>, vector<224x128xf32>
    %cst_82 = arith.constant dense<0.000000e+00> : vector<1x128xf32>
    %102 = tpu.matmul %100, %101, %cst_82 {dimension_numbers = #tpu.dot_dimension_numbers<[1], [0], [0], [1], [0, 0, 1, 1], [], []>} : vector<1x224xf32>, vector<224x128xf32>, vector<1x128xf32> -> vector<1x128xf32>
    %103 = arith.addf %99, %102 : vector<1x128xf32>
    %104 = vector.extract_strided_slice %90 {offsets = [3, 0], sizes = [1, 224], strides = [1, 1]} : vector<7x224xf32> to vector<1x224xf32>
    %c672_83 = arith.constant 672 : index
    %c0_84 = arith.constant 0 : index
    %105 = vector.load %arg8[%c672_83, %c0_84] : memref<1568x128xf32, #tpu.memory_space<vmem>>, vector<224x128xf32>
    %cst_85 = arith.constant dense<0.000000e+00> : vector<1x128xf32>
    %106 = tpu.matmul %104, %105, %cst_85 {dimension_numbers = #tpu.dot_dimension_numbers<[1], [0], [0], [1], [0, 0, 1, 1], [], []>} : vector<1x224xf32>, vector<224x128xf32>, vector<1x128xf32> -> vector<1x128xf32>
    %107 = arith.addf %103, %106 : vector<1x128xf32>
    %108 = vector.extract_strided_slice %90 {offsets = [4, 0], sizes = [1, 224], strides = [1, 1]} : vector<7x224xf32> to vector<1x224xf32>
    %c896_86 = arith.constant 896 : index
    %c0_87 = arith.constant 0 : index
    %109 = vector.load %arg8[%c896_86, %c0_87] : memref<1568x128xf32, #tpu.memory_space<vmem>>, vector<224x128xf32>
    %cst_88 = arith.constant dense<0.000000e+00> : vector<1x128xf32>
    %110 = tpu.matmul %108, %109, %cst_88 {dimension_numbers = #tpu.dot_dimension_numbers<[1], [0], [0], [1], [0, 0, 1, 1], [], []>} : vector<1x224xf32>, vector<224x128xf32>, vector<1x128xf32> -> vector<1x128xf32>
    %111 = arith.addf %107, %110 : vector<1x128xf32>
    %112 = vector.extract_strided_slice %90 {offsets = [5, 0], sizes = [1, 224], strides = [1, 1]} : vector<7x224xf32> to vector<1x224xf32>
    %c1120 = arith.constant 1120 : index
    %c0_89 = arith.constant 0 : index
    %113 = vector.load %arg8[%c1120, %c0_89] : memref<1568x128xf32, #tpu.memory_space<vmem>>, vector<224x128xf32>
    %cst_90 = arith.constant dense<0.000000e+00> : vector<1x128xf32>
    %114 = tpu.matmul %112, %113, %cst_90 {dimension_numbers = #tpu.dot_dimension_numbers<[1], [0], [0], [1], [0, 0, 1, 1], [], []>} : vector<1x224xf32>, vector<224x128xf32>, vector<1x128xf32> -> vector<1x128xf32>
    %115 = arith.addf %111, %114 : vector<1x128xf32>
    %116 = vector.extract_strided_slice %90 {offsets = [6, 0], sizes = [1, 224], strides = [1, 1]} : vector<7x224xf32> to vector<1x224xf32>
    %c1344 = arith.constant 1344 : index
    %c0_91 = arith.constant 0 : index
    %117 = vector.load %arg8[%c1344, %c0_91] : memref<1568x128xf32, #tpu.memory_space<vmem>>, vector<224x128xf32>
    %cst_92 = arith.constant dense<0.000000e+00> : vector<1x128xf32>
    %118 = tpu.matmul %116, %117, %cst_92 {dimension_numbers = #tpu.dot_dimension_numbers<[1], [0], [0], [1], [0, 0, 1, 1], [], []>} : vector<1x224xf32>, vector<224x128xf32>, vector<1x128xf32> -> vector<1x128xf32>
    %119 = arith.addf %115, %118 : vector<1x128xf32>
    %c0_93 = arith.constant 0 : index
    %c0_94 = arith.constant 0 : index
    %120 = vector.load %arg9[%c0_93, %c0_94] : memref<1x128xf32, #tpu.memory_space<vmem>>, vector<1x128xf32>
    %121 = arith.addf %119, %120 : vector<1x128xf32>
    %cst_95 = arith.constant 0.000000e+00 : f32
    %122 = vector.broadcast %cst_95 : f32 to vector<1x128xf32>
    %123 = arith.maximumf %121, %122 : vector<1x128xf32>
    %c0_96 = arith.constant 0 : index
    %c0_97 = arith.constant 0 : index
    %124 = vector.load %arg10[%c0_96, %c0_97] : memref<128x10xf32, #tpu.memory_space<vmem>>, vector<128x10xf32>
    %cst_98 = arith.constant dense<0.000000e+00> : vector<1x10xf32>
    %125 = tpu.matmul %123, %124, %cst_98 {dimension_numbers = #tpu.dot_dimension_numbers<[1], [0], [0], [1], [0, 0, 1, 1], [], []>} : vector<1x128xf32>, vector<128x10xf32>, vector<1x10xf32> -> vector<1x10xf32>
    %c0_99 = arith.constant 0 : index
    %c0_100 = arith.constant 0 : index
    %126 = vector.load %arg11[%c0_99, %c0_100] : memref<1x10xf32, #tpu.memory_space<vmem>>, vector<1x10xf32>
    %127 = arith.addf %125, %126 : vector<1x10xf32>
    %cst_101 = arith.constant dense<0xFF800000> : vector<1xf32>
    %128 = vector.multi_reduction <maximumf>, %127, %cst_101 [1] : vector<1x10xf32> to vector<1xf32>
    %129 = vector.shape_cast %128 : vector<1xf32> to vector<1x1xf32>
    %130 = vector.broadcast %129 : vector<1x1xf32> to vector<1x10xf32>
    %131 = arith.subf %127, %130 : vector<1x10xf32>
    %132 = math.exp %131 : vector<1x10xf32>
    %cst_102 = arith.constant dense<0.000000e+00> : vector<1xf32>
    %133 = vector.multi_reduction <add>, %132, %cst_102 [1] : vector<1x10xf32> to vector<1xf32>
    %134 = vector.shape_cast %133 : vector<1xf32> to vector<1x1xf32>
    %135 = math.log %134 : vector<1x1xf32>
    %136 = vector.broadcast %135 : vector<1x1xf32> to vector<1x10xf32>
    %137 = arith.subf %131, %136 : vector<1x10xf32>
    %c0_103 = arith.constant 0 : index
    %c0_104 = arith.constant 0 : index
    %c0_105 = arith.constant 0 : index
    %138 = vector.load %arg12[%c0_103, %c0_104, %c0_105] : memref<1x1x10xf32, #tpu.memory_space<vmem>>, vector<1x1x10xf32>
    %139 = vector.shape_cast %138 : vector<1x1x10xf32> to vector<1x10xf32>
    %140 = vector.shape_cast %137 : vector<1x10xf32> to vector<1x1x10xf32>
    tpu.vector_store %arg12[%c0_103, %c0_104, %c0_105], %140 {strides = array<i32>} : memref<1x1x10xf32, #tpu.memory_space<vmem>>, vector<1x1x10xf32>,
    return
  }
  func.func @transform_0(%arg0: i32) -> (i32, i32, i32) {
    %c0_i32 = arith.constant 0 : i32
    %c0_i32_0 = arith.constant 0 : i32
    %c0_i32_1 = arith.constant 0 : i32
    return %arg0, %c0_i32, %c0_i32_0 : i32, i32, i32
  }
  func.func @transform_1(%arg0: i32) -> (i32, i32) {
    %c0_i32 = arith.constant 0 : i32
    %c0_i32_0 = arith.constant 0 : i32
    %c0_i32_1 = arith.constant 0 : i32
    return %c0_i32, %c0_i32_0 : i32, i32
  }
  func.func @transform_2(%arg0: i32) -> (i32, i32) {
    %c0_i32 = arith.constant 0 : i32
    %c0_i32_0 = arith.constant 0 : i32
    %c0_i32_1 = arith.constant 0 : i32
    return %c0_i32, %c0_i32_0 : i32, i32
  }
  func.func @transform_3(%arg0: i32) -> (i32, i32) {
    %c0_i32 = arith.constant 0 : i32
    %c0_i32_0 = arith.constant 0 : i32
    %c0_i32_1 = arith.constant 0 : i32
    return %c0_i32, %c0_i32_0 : i32, i32
  }
  func.func @transform_4(%arg0: i32) -> (i32, i32) {
    %c0_i32 = arith.constant 0 : i32
    %c0_i32_0 = arith.constant 0 : i32
    %c0_i32_1 = arith.constant 0 : i32
    return %c0_i32, %c0_i32_0 : i32, i32
  }
  func.func @transform_5(%arg0: i32) -> (i32, i32) {
    %c0_i32 = arith.constant 0 : i32
    %c0_i32_0 = arith.constant 0 : i32
    %c0_i32_1 = arith.constant 0 : i32
    return %c0_i32, %c0_i32_0 : i32, i32
  }
  func.func @transform_6(%arg0: i32) -> (i32, i32) {
    %c0_i32 = arith.constant 0 : i32
    %c0_i32_0 = arith.constant 0 : i32
    %c0_i32_1 = arith.constant 0 : i32
    return %c0_i32, %c0_i32_0 : i32, i32
  }
  func.func @transform_7(%arg0: i32) -> (i32, i32) {
    %c0_i32 = arith.constant 0 : i32
    %c0_i32_0 = arith.constant 0 : i32
    %c0_i32_1 = arith.constant 0 : i32
    return %c0_i32, %c0_i32_0 : i32, i32
  }
  func.func @transform_8(%arg0: i32) -> (i32, i32) {
    %c0_i32 = arith.constant 0 : i32
    %c0_i32_0 = arith.constant 0 : i32
    %c0_i32_1 = arith.constant 0 : i32
    return %c0_i32, %c0_i32_0 : i32, i32
  }
  func.func @transform_9(%arg0: i32) -> (i32, i32) {
    %c0_i32 = arith.constant 0 : i32
    %c0_i32_0 = arith.constant 0 : i32
    %c0_i32_1 = arith.constant 0 : i32
    return %c0_i32, %c0_i32_0 : i32, i32
  }
  func.func @transform_10(%arg0: i32) -> (i32, i32) {
    %c0_i32 = arith.constant 0 : i32
    %c0_i32_0 = arith.constant 0 : i32
    %c0_i32_1 = arith.constant 0 : i32
    return %c0_i32, %c0_i32_0 : i32, i32
  }
  func.func @transform_11(%arg0: i32) -> (i32, i32, i32) {
    %c0_i32 = arith.constant 0 : i32
    %c0_i32_0 = arith.constant 0 : i32
    %c0_i32_1 = arith.constant 0 : i32
    return %arg0, %c0_i32, %c0_i32_0 : i32, i32, i32
  }
}

</mosaic_0001>

<llo_original>
// kernel: lenet_multi_forward.1
$region0: #{lenet_multi_forward.1}
  #allocation0 [shape = 'u32[]', space=smem, size = 0x4, offset = 0x4, fixed_abs, tag = 'smem constant byte address 0x4 - core index']
  #allocation1 [shape = 'u32[144,128]{1,0:T(1,128)}', space=vmem, size = 0x12000, scoped, tag = 'internal scratch']
  #allocation2 [shape = 'f32[9,224]{1,0:T(8,128)}', space=vmem, size = 0x4000, scoped, tag = 'scratch operand']
  #allocation3 [shape = 'f32[9,224]{1,0:T(8,128)}', space=vmem, size = 0x4000, scoped, tag = 'scratch operand']
  %s0 = inlined_call_operand.vmem [shape: f32[2,28,84], index: 0, kind: input, shape index: {}]
  %s1 = inlined_call_operand.vmem [shape: f32[84,224], index: 1, kind: input, shape index: {}]
  %s2 = inlined_call_operand.vmem [shape: f32[84,224], index: 2, kind: input, shape index: {}]
  %s3 = inlined_call_operand.vmem [shape: f32[1,224], index: 3, kind: input, shape index: {}]
  %s4 = inlined_call_operand.vmem [shape: f32[1120,224], index: 4, kind: input, shape index: {}]
  %s5 = inlined_call_operand.vmem [shape: f32[1120,224], index: 5, kind: input, shape index: {}]
  %s6 = inlined_call_operand.vmem [shape: f32[1,224], index: 6, kind: input, shape index: {}]
  %s7 = inlined_call_operand.vmem [shape: f32[1568,128], index: 7, kind: input, shape index: {}]
  %s8 = inlined_call_operand.vmem [shape: f32[1,128], index: 8, kind: input, shape index: {}]
  %s9 = inlined_call_operand.vmem [shape: f32[128,10], index: 9, kind: input, shape index: {}]
  %s10 = inlined_call_operand.vmem [shape: f32[1,10], index: 10, kind: input, shape index: {}]
  %s11 = inlined_call_operand.hbm [shape: f32[2,1,10], index: 11, kind: output, shape index: {}]
  %s12 = sld [smem:[#allocation0]]
  $region77: #{lenet_multi_forward.1} parent=0
    _
  %s14 = ssub.s32 1, %s12
  %s15 = scalar_select 0, %s14, %s12
  $region1: #{lenet_multi_forward.1} parent=0
    #allocation4 [shape = 'u8[1024]{0}', space=vmem, size = 0x400, scoped, tag = 'output window, operand 0']
    #allocation5 [shape = 's32[2]{0}', space=sflag, size = 0x8, scoped, tag = 'scoped memory for lenet_multi_forward.1']
    %16 = vsyncpa [#allocation5], 0
    %s17 = scalar_lea.sflag [#allocation5], 1
    %18 = vsyncpa %s17, 0
    loop: start=0, step=1, limit=4
    $region2: #{lenet_multi_forward.1} parent=1 // loop_pre_header
      _
    $region3: #{lenet_multi_forward.1} parent=1 // loop_header
      %s20 = sphi 0, %s24
      %p21 = scmp.ge.s32.totalorder %s20, 4
      %s30 = sphi 0, %s32
      %s33 = sphi 0, %s30
      %s34 = sphi 0, %s33
      %s50 = sphi 0, %s34
      %s54 = sphi 0, %s54
      %s56 = sphi 0, %s54
      %s57 = sphi 0, %s56
      %s71 = sphi 0, %s57
      %s75 = sphi 0, %s75
      %s77 = sphi 0, %s75
      %s78 = sphi 0, %s77
      %s92 = sphi 0, %s78
      %s96 = sphi 0, %s96
      %s98 = sphi 0, %s96
      %s99 = sphi 0, %s98
      %s113 = sphi 0, %s99
      %s117 = sphi 0, %s117
      %s119 = sphi 0, %s117
      %s120 = sphi 0, %s119
      %s134 = sphi 0, %s120
      %s138 = sphi 0, %s138
      %s140 = sphi 0, %s138
      %s141 = sphi 0, %s140
      %s155 = sphi 0, %s141
      %s159 = sphi 0, %s159
      %s161 = sphi 0, %s159
      %s162 = sphi 0, %s161
      %s176 = sphi 0, %s162
      %s180 = sphi 0, %s180
      %s182 = sphi 0, %s180
      %s183 = sphi 0, %s182
      %s197 = sphi 0, %s183
      %s201 = sphi 0, %s201
      %s203 = sphi 0, %s201
      %s204 = sphi 0, %s203
      %s218 = sphi 0, %s204
      %s222 = sphi 0, %s222
      %s224 = sphi 0, %s222
      %s225 = sphi 0, %s224
      %s239 = sphi 0, %s225
      %s243 = sphi 0, %s243
      %s245 = sphi 0, %s243
      %s246 = sphi 0, %s245
      %s260 = sphi 0, %s246
      %s266 = sphi 0, %s268
      %s269 = sphi 0, %s266
      %s270 = sphi 0, %s269
      %s286 = sphi 0, %s270
    $region4: #{lenet_multi_forward.1} parent=1 // loop_header_branch
      %23 = sbr.rel (%p21) target = $region8
    $region5: #{lenet_multi_forward.1} parent=1 // loop_body
      %s25 = ssub.s32 %s20, 1
      %s26 = ssub.s32 %s20, 2
      %s27 = sadd.s32 %s20, 1
      %s28 = ssub.s32 %s20, %s27
      %p29 = scmp.eq.s32.totalorder %s28, 0
      %s31 = sadd.s32 %s30, 1
      %s32 = scalar_select %p29, %s30, %s31
      %p35 = pneg %p29
      %p36 = scmp.eq.s32.totalorder %s20, 1
      %p37 = por %p35, %p36
      %p38 = scmp.ne.s32.totalorder %s30, %s33
      %p39 = scmp.eq.s32.totalorder %s20, 0
      %p40 = por %p38, %p39
      %p41 = scmp.ne.s32.totalorder %s30, %s33
      %p42 = scmp.eq.s32.totalorder %s25, 1
      %p43 = por %p41, %p42
      %p44 = scmp.ne.s32.totalorder %s33, %s34
      %p45 = scmp.eq.s32.totalorder %s25, 0
      %p46 = por %p44, %p45
      %p47 = scmp.ne.s32.totalorder %s33, %s34
      %p48 = scmp.eq.s32.totalorder %s26, 1
      %p49 = por %p47, %p48
      %p51 = scmp.ne.s32.totalorder %s34, %s50
      %p52 = scmp.eq.s32.totalorder %s26, 0
      %p53 = por %p51, %p52
      %s55 = sadd.s32 %s54, 1
      %p58 = scmp.eq.s32.totalorder %s20, 1
      %p59 = scmp.ne.s32.totalorder %s54, %s56
      %p60 = scmp.eq.s32.totalorder %s20, 0
      %p61 = por %p59, %p60
      %p62 = scmp.ne.s32.totalorder %s54, %s56
      %p63 = scmp.eq.s32.totalorder %s25, 1
      %p64 = por %p62, %p63
      %p65 = scmp.ne.s32.totalorder %s56, %s57
      %p66 = scmp.eq.s32.totalorder %s25, 0
      %p67 = por %p65, %p66
      %p68 = scmp.ne.s32.totalorder %s56, %s57
      %p69 = scmp.eq.s32.totalorder %s26, 1
      %p70 = por %p68, %p69
      %p72 = scmp.ne.s32.totalorder %s57, %s71
      %p73 = scmp.eq.s32.totalorder %s26, 0
      %p74 = por %p72, %p73
      %s76 = sadd.s32 %s75, 1
      %p79 = scmp.eq.s32.totalorder %s20, 1
      %p80 = scmp.ne.s32.totalorder %s75, %s77
      %p81 = scmp.eq.s32.totalorder %s20, 0
      %p82 = por %p80, %p81
      %p83 = scmp.ne.s32.totalorder %s75, %s77
      %p84 = scmp.eq.s32.totalorder %s25, 1
      %p85 = por %p83, %p84
      %p86 = scmp.ne.s32.totalorder %s77, %s78
      %p87 = scmp.eq.s32.totalorder %s25, 0
      %p88 = por %p86, %p87
      %p89 = scmp.ne.s32.totalorder %s77, %s78
      %p90 = scmp.eq.s32.totalorder %s26, 1
      %p91 = por %p89, %p90
      %p93 = scmp.ne.s32.totalorder %s78, %s92
      %p94 = scmp.eq.s32.totalorder %s26, 0
      %p95 = por %p93, %p94
      %s97 = sadd.s32 %s96, 1
      %p100 = scmp.eq.s32.totalorder %s20, 1
      %p101 = scmp.ne.s32.totalorder %s96, %s98
      %p102 = scmp.eq.s32.totalorder %s20, 0
      %p103 = por %p101, %p102
      %p104 = scmp.ne.s32.totalorder %s96, %s98
      %p105 = scmp.eq.s32.totalorder %s25, 1
      %p106 = por %p104, %p105
      %p107 = scmp.ne.s32.totalorder %s98, %s99
      %p108 = scmp.eq.s32.totalorder %s25, 0
      %p109 = por %p107, %p108
      %p110 = scmp.ne.s32.totalorder %s98, %s99
      %p111 = scmp.eq.s32.totalorder %s26, 1
      %p112 = por %p110, %p111
      %p114 = scmp.ne.s32.totalorder %s99, %s113
      %p115 = scmp.eq.s32.totalorder %s26, 0
      %p116 = por %p114, %p115
      %s118 = sadd.s32 %s117, 1
      %p121 = scmp.eq.s32.totalorder %s20, 1
      %p122 = scmp.ne.s32.totalorder %s117, %s119
      %p123 = scmp.eq.s32.totalorder %s20, 0
      %p124 = por %p122, %p123
      %p125 = scmp.ne.s32.totalorder %s117, %s119
      %p126 = scmp.eq.s32.totalorder %s25, 1
      %p127 = por %p125, %p126
      %p128 = scmp.ne.s32.totalorder %s119, %s120
      %p129 = scmp.eq.s32.totalorder %s25, 0
      %p130 = por %p128, %p129
      %p131 = scmp.ne.s32.totalorder %s119, %s120
      %p132 = scmp.eq.s32.totalorder %s26, 1
      %p133 = por %p131, %p132
      %p135 = scmp.ne.s32.totalorder %s120, %s134
      %p136 = scmp.eq.s32.totalorder %s26, 0
      %p137 = por %p135, %p136
      %s139 = sadd.s32 %s138, 1
      %p142 = scmp.eq.s32.totalorder %s20, 1
      %p143 = scmp.ne.s32.totalorder %s138, %s140
      %p144 = scmp.eq.s32.totalorder %s20, 0
      %p145 = por %p143, %p144
      %p146 = scmp.ne.s32.totalorder %s138, %s140
      %p147 = scmp.eq.s32.totalorder %s25, 1
      %p148 = por %p146, %p147
      %p149 = scmp.ne.s32.totalorder %s140, %s141
      %p150 = scmp.eq.s32.totalorder %s25, 0
      %p151 = por %p149, %p150
      %p152 = scmp.ne.s32.totalorder %s140, %s141
      %p153 = scmp.eq.s32.totalorder %s26, 1
      %p154 = por %p152, %p153
      %p156 = scmp.ne.s32.totalorder %s141, %s155
      %p157 = scmp.eq.s32.totalorder %s26, 0
      %p158 = por %p156, %p157
      %s160 = sadd.s32 %s159, 1
      %p163 = scmp.eq.s32.totalorder %s20, 1
      %p164 = scmp.ne.s32.totalorder %s159, %s161
      %p165 = scmp.eq.s32.totalorder %s20, 0
      %p166 = por %p164, %p165
      %p167 = scmp.ne.s32.totalorder %s159, %s161
      %p168 = scmp.eq.s32.totalorder %s25, 1
      %p169 = por %p167, %p168
      %p170 = scmp.ne.s32.totalorder %s161, %s162
      %p171 = scmp.eq.s32.totalorder %s25, 0
      %p172 = por %p170, %p171
      %p173 = scmp.ne.s32.totalorder %s161, %s162
      %p174 = scmp.eq.s32.totalorder %s26, 1
      %p175 = por %p173, %p174
      %p177 = scmp.ne.s32.totalorder %s162, %s176
      %p178 = scmp.eq.s32.totalorder %s26, 0
      %p179 = por %p177, %p178
      %s181 = sadd.s32 %s180, 1
      %p184 = scmp.eq.s32.totalorder %s20, 1
      %p185 = scmp.ne.s32.totalorder %s180, %s182
      %p186 = scmp.eq.s32.totalorder %s20, 0
      %p187 = por %p185, %p186
      %p188 = scmp.ne.s32.totalorder %s180, %s182
      %p189 = scmp.eq.s32.totalorder %s25, 1
      %p190 = por %p188, %p189
      %p191 = scmp.ne.s32.totalorder %s182, %s183
      %p192 = scmp.eq.s32.totalorder %s25, 0
      %p193 = por %p191, %p192
      %p194 = scmp.ne.s32.totalorder %s182, %s183
      %p195 = scmp.eq.s32.totalorder %s26, 1
      %p196 = por %p194, %p195
      %p198 = scmp.ne.s32.totalorder %s183, %s197
      %p199 = scmp.eq.s32.totalorder %s26, 0
      %p200 = por %p198, %p199
      %s202 = sadd.s32 %s201, 1
      %p205 = scmp.eq.s32.totalorder %s20, 1
      %p206 = scmp.ne.s32.totalorder %s201, %s203
      %p207 = scmp.eq.s32.totalorder %s20, 0
      %p208 = por %p206, %p207
      %p209 = scmp.ne.s32.totalorder %s201, %s203
      %p210 = scmp.eq.s32.totalorder %s25, 1
      %p211 = por %p209, %p210
      %p212 = scmp.ne.s32.totalorder %s203, %s204
      %p213 = scmp.eq.s32.totalorder %s25, 0
      %p214 = por %p212, %p213
      %p215 = scmp.ne.s32.totalorder %s203, %s204
      %p216 = scmp.eq.s32.totalorder %s26, 1
      %p217 = por %p215, %p216
      %p219 = scmp.ne.s32.totalorder %s204, %s218
      %p220 = scmp.eq.s32.totalorder %s26, 0
      %p221 = por %p219, %p220
      %s223 = sadd.s32 %s222, 1
      %p226 = scmp.eq.s32.totalorder %s20, 1
      %p227 = scmp.ne.s32.totalorder %s222, %s224
      %p228 = scmp.eq.s32.totalorder %s20, 0
      %p229 = por %p227, %p228
      %p230 = scmp.ne.s32.totalorder %s222, %s224
      %p231 = scmp.eq.s32.totalorder %s25, 1
      %p232 = por %p230, %p231
      %p233 = scmp.ne.s32.totalorder %s224, %s225
      %p234 = scmp.eq.s32.totalorder %s25, 0
      %p235 = por %p233, %p234
      %p236 = scmp.ne.s32.totalorder %s224, %s225
      %p237 = scmp.eq.s32.totalorder %s26, 1
      %p238 = por %p236, %p237
      %p240 = scmp.ne.s32.totalorder %s225, %s239
      %p241 = scmp.eq.s32.totalorder %s26, 0
      %p242 = por %p240, %p241
      %s244 = sadd.s32 %s243, 1
      %p247 = scmp.eq.s32.totalorder %s20, 1
      %p248 = scmp.ne.s32.totalorder %s243, %s245
      %p249 = scmp.eq.s32.totalorder %s20, 0
      %p250 = por %p248, %p249
      %p251 = scmp.ne.s32.totalorder %s243, %s245
      %p252 = scmp.eq.s32.totalorder %s25, 1
      %p253 = por %p251, %p252
      %p254 = scmp.ne.s32.totalorder %s245, %s246
      %p255 = scmp.eq.s32.totalorder %s25, 0
      %p256 = por %p254, %p255
      %p257 = scmp.ne.s32.totalorder %s245, %s246
      %p258 = scmp.eq.s32.totalorder %s26, 1
      %p259 = por %p257, %p258
      %p261 = scmp.ne.s32.totalorder %s246, %s260
      %p262 = scmp.eq.s32.totalorder %s26, 0
      %p263 = por %p261, %p262
      %s264 = ssub.s32 %s20, %s27
      %p265 = scmp.eq.s32.totalorder %s264, 0
      %s267 = sadd.s32 %s266, 1
      %s268 = scalar_select %p265, %s266, %s267
      %p271 = pneg %p265
      %p272 = scmp.eq.s32.totalorder %s20, 1
      %p273 = por %p271, %p272
      %p274 = scmp.ne.s32.totalorder %s266, %s269
      %p275 = scmp.eq.s32.totalorder %s20, 0
      %p276 = por %p274, %p275
      %p277 = scmp.ne.s32.totalorder %s266, %s269
      %p278 = scmp.eq.s32.totalorder %s25, 1
      %p279 = por %p277, %p278
      %p280 = scmp.ne.s32.totalorder %s269, %s270
      %p281 = scmp.eq.s32.totalorder %s25, 0
      %p282 = por %p280, %p281
      %p283 = scmp.ne.s32.totalorder %s269, %s270
      %p284 = scmp.eq.s32.totalorder %s26, 1
      %p285 = por %p283, %p284
      %p287 = scmp.ne.s32.totalorder %s270, %s286
      %p288 = scmp.eq.s32.totalorder %s26, 0
      %p289 = por %p287, %p288
      %p290 = scmp.le.s32.totalorder 1, %s20
      %p291 = scmp.lt.s32.totalorder %s20, 3
      %p292 = pnand %p290, %p291
      %p293 = pneg %p292
      // Predicated region
      $region9: #{lenet_multi_forward.1} parent=5 // pred_check
        _
      $region10: #{lenet_multi_forward.1} parent=5 // pred_check_branch
        %295 = sbr.rel (%p292) target = $region12
      $region11: #{lenet_multi_forward.1} parent=5 // pred_region
        %s296 = ssub.s32 %s20, 1
        // Predicated region
        $region13: #{lenet_multi_forward.1} parent=11 // pred_check
          %p297 = pneg %p67
        $region14: #{lenet_multi_forward.1} parent=11 // pred_check_branch
          %299 = sbr.rel (%p297) target = $region16
        $region15: #{lenet_multi_forward.1} parent=11 // pred_region
          _
        $region16: #{lenet_multi_forward.1} parent=11 // pred_fallthru
          _
        // Predicated region
        $region17: #{lenet_multi_forward.1} parent=11 // pred_check
          %p300 = pneg %p88
        $region18: #{lenet_multi_forward.1} parent=11 // pred_check_branch
          %302 = sbr.rel (%p300) target = $region20
        $region19: #{lenet_multi_forward.1} parent=11 // pred_region
          _
        $region20: #{lenet_multi_forward.1} parent=11 // pred_fallthru
          _
        // Predicated region
        $region21: #{lenet_multi_forward.1} parent=11 // pred_check
          %p303 = pneg %p109
        $region22: #{lenet_multi_forward.1} parent=11 // pred_check_branch
          %305 = sbr.rel (%p303) target = $region24
        $region23: #{lenet_multi_forward.1} parent=11 // pred_region
          _
        $region24: #{lenet_multi_forward.1} parent=11 // pred_fallthru
          _
        // Predicated region
        $region25: #{lenet_multi_forward.1} parent=11 // pred_check
          %p306 = pneg %p130
        $region26: #{lenet_multi_forward.1} parent=11 // pred_check_branch
          %308 = sbr.rel (%p306) target = $region28
        $region27: #{lenet_multi_forward.1} parent=11 // pred_region
          _
        $region28: #{lenet_multi_forward.1} parent=11 // pred_fallthru
          _
        // Predicated region
        $region29: #{lenet_multi_forward.1} parent=11 // pred_check
          %p309 = pneg %p151
        $region30: #{lenet_multi_forward.1} parent=11 // pred_check_branch
          %311 = sbr.rel (%p309) target = $region32
        $region31: #{lenet_multi_forward.1} parent=11 // pred_region
          _
        $region32: #{lenet_multi_forward.1} parent=11 // pred_fallthru
          _
        // Predicated region
        $region33: #{lenet_multi_forward.1} parent=11 // pred_check
          %p312 = pneg %p172
        $region34: #{lenet_multi_forward.1} parent=11 // pred_check_branch
          %314 = sbr.rel (%p312) target = $region36
        $region35: #{lenet_multi_forward.1} parent=11 // pred_region
          _
        $region36: #{lenet_multi_forward.1} parent=11 // pred_fallthru
          _
        // Predicated region
        $region37: #{lenet_multi_forward.1} parent=11 // pred_check
          %p315 = pneg %p193
        $region38: #{lenet_multi_forward.1} parent=11 // pred_check_branch
          %317 = sbr.rel (%p315) target = $region40
        $region39: #{lenet_multi_forward.1} parent=11 // pred_region
          _
        $region40: #{lenet_multi_forward.1} parent=11 // pred_fallthru
          _
        // Predicated region
        $region41: #{lenet_multi_forward.1} parent=11 // pred_check
          %p318 = pneg %p214
        $region42: #{lenet_multi_forward.1} parent=11 // pred_check_branch
          %320 = sbr.rel (%p318) target = $region44
        $region43: #{lenet_multi_forward.1} parent=11 // pred_region
          _
        $region44: #{lenet_multi_forward.1} parent=11 // pred_fallthru
          _
        // Predicated region
        $region45: #{lenet_multi_forward.1} parent=11 // pred_check
          %p321 = pneg %p235
        $region46: #{lenet_multi_forward.1} parent=11 // pred_check_branch
          %323 = sbr.rel (%p321) target = $region48
        $region47: #{lenet_multi_forward.1} parent=11 // pred_region
          _
        $region48: #{lenet_multi_forward.1} parent=11 // pred_fallthru
          _
        // Predicated region
        $region49: #{lenet_multi_forward.1} parent=11 // pred_check
          %p324 = pneg %p256
        $region50: #{lenet_multi_forward.1} parent=11 // pred_check_branch
          %326 = sbr.rel (%p324) target = $region52
        $region51: #{lenet_multi_forward.1} parent=11 // pred_region
          _
        $region52: #{lenet_multi_forward.1} parent=11 // pred_fallthru
          _
      $region12: #{lenet_multi_forward.1} parent=5 // pred_fallthru
        _
      %p327 = scmp.lt.s32.totalorder %s20, 2
      // Predicated region
      $region53: #{lenet_multi_forward.1} parent=5 // pred_check
        %p328 = pneg %p327
      $region54: #{lenet_multi_forward.1} parent=5 // pred_check_branch
        %330 = sbr.rel (%p328) target = $region56
      $region55: #{lenet_multi_forward.1} parent=5 // pred_region
        // Predicated region
        $region57: #{lenet_multi_forward.1} parent=55 // pred_check
          %p331 = pneg %p40
        $region58: #{lenet_multi_forward.1} parent=55 // pred_check_branch
          %333 = sbr.rel (%p331) target = $region60
        $region59: #{lenet_multi_forward.1} parent=55 // pred_region
          %p334 = scmp.lt.s32.totalorder %s20, 1
          %s335 = scalar_select %p334, %s20, 1
          %s336 = smul.addr %s335, 4
          %s337 = smul.addr %s336, 8
          %s338 = scalar_lea.vmem %s0, %s337
        $region60: #{lenet_multi_forward.1} parent=55 // pred_fallthru
          _
      $region56: #{lenet_multi_forward.1} parent=5 // pred_fallthru
        _
      %p339 = scmp.le.s32.totalorder 1, %s20
      %p340 = scmp.lt.s32.totalorder %s20, 3
      %p341 = pnand %p339, %p340
      %p342 = pneg %p341
      // Predicated region
      $region61: #{lenet_multi_forward.1} parent=5 // pred_check
        _
      $region62: #{lenet_multi_forward.1} parent=5 // pred_check_branch
        %344 = sbr.rel (%p341) target = $region64
      $region63: #{lenet_multi_forward.1} parent=5 // pred_region
        %s345 = ssub.s32 %s20, 1
        %p346 = scmp.lt.s32.totalorder %s25, 1
        %s347 = scalar_select %p346, %s25, 1
        %s348 = smul.addr %s347, 4
        %s349 = smul.addr %s348, 8
        %s350 = scalar_lea.vmem %s0, %s349
        %p351 = pneg %p46
        %p352 = pneg %p43
        %p353 = pneg %p67
        %p354 = pneg %p64
        %p355 = pneg %p88
        %p356 = pneg %p85
        %p357 = pneg %p109
        %p358 = pneg %p106
        %p359 = pneg %p130
        %p360 = pneg %p127
        %p361 = pneg %p151
        %p362 = pneg %p148
        %p363 = pneg %p172
        %p364 = pneg %p169
        %p365 = pneg %p193
        %p366 = pneg %p190
        %p367 = pneg %p214
        %p368 = pneg %p211
        %p369 = pneg %p235
        %p370 = pneg %p232
        %p371 = pneg %p256
        %p372 = pneg %p253
        %p373 = pneg %p282
        %p374 = pneg %p279
        %s375 = sand.u32 %s269, 1
        %s376 = scalar_lea.sflag [#allocation5], %s375
        %s377 = sand.u32 %s269, 1
        %s378 = scalar_lea.vmem [#allocation4], %s377
        %p379 = scmp.lt.s32.totalorder %s25, 1
        %s380 = scalar_select %p379, %s25, 1
        %s381 = smul.addr %s380, 4
        %s382 = smul.addr %s381, 8
        %s383 = scalar_lea.vmem %s0, %s382
        %v384 = vld [vmem:[%s383] sm:$0xff]
        %v385 = vld [vmem:[%s383 + $0x8] sm:$0xff]
        %v386 = vld [vmem:[%s383 + $0x10] sm:$0xff]
        %v387 = vld [vmem:[%s383 + $0x18] sm:$0xf]
        %v388 = vld [vmem:[%s1] sm:$0xff]
        %v389 = vld [vmem:[%s1 + $0x8] sm:$0xff]
        %v390 = vld [vmem:[%s1 + $0x10] sm:$0xff]
        %v391 = vld [vmem:[%s1 + $0x18] sm:$0xff]
        %v392 = vld [vmem:[%s1 + $0x20] sm:$0xff]
        %v393 = vld [vmem:[%s1 + $0x28] sm:$0xff]
        %v394 = vld [vmem:[%s1 + $0x30] sm:$0xff]
        %v395 = vld [vmem:[%s1 + $0x38] sm:$0xff]
        %v396 = vld [vmem:[%s1 + $0x40] sm:$0xff]
        %v397 = vld [vmem:[%s1 + $0x48] sm:$0xff]
        %v398 = vld [vmem:[%s1 + $0x50] sm:$0xff]
        %v399 = vld [vmem:[%s1 + $0x58] sm:$0xff]
        %v400 = vld [vmem:[%s1 + $0x60] sm:$0xff]
        %v401 = vld [vmem:[%s1 + $0x68] sm:$0xff]
        %v402 = vld [vmem:[%s1 + $0x70] sm:$0xff]
        %v403 = vld [vmem:[%s1 + $0x78] sm:$0xff]
        %v404 = vld [vmem:[%s1 + $0x80] sm:$0xff]
        %v405 = vld [vmem:[%s1 + $0x88] sm:$0xff]
        %v406 = vld [vmem:[%s1 + $0x90] sm:$0xff]
        %v407 = vld [vmem:[%s1 + $0x98] sm:$0xff]
        %v408 = vld [vmem:[%s1 + $0xa0] sm:$0xf]
        %v409 = vld [vmem:[%s1 + $0xa8] sm:$0xf]
        %vm410 = vcmask 687104
        %v412 = vsel %vm410, %v384, 0
        %v415 = vsel %vm410, %v385, 0
        %v418 = vsel %vm410, %v386, 0
        %v421 = vsel %vm410, %v387, 0
        %vm423 = vcmask 1043456
        %v425 = vsel %vm423, %v408, 0
        %v428 = vsel %vm423, %v409, 0
        %430 = vmatprep.subr.mxu0 %v389
        %431 = vmatpush1.msra.mxu0 %v388
        %432 = vmatprep.subr.mxu0 %v391
        %433 = vmatpush1.msra.mxu0 %v390
        %434 = vmatprep.subr.mxu0 %v393
        %435 = vmatpush1.msra.mxu0 %v392
        %436 = vmatprep.subr.mxu0 %v395
        %437 = vmatpush1.msra.mxu0 %v394
        %438 = vmatprep.subr.mxu0 %v397
        %439 = vmatpush1.msra.mxu0 %v396
        %440 = vmatprep.subr.mxu0 %v399
        %441 = vmatpush1.msra.mxu0 %v398
        %442 = vmatprep.subr.mxu0 %v401
        %443 = vmatpush1.msra.mxu0 %v400
        %444 = vmatprep.subr.mxu0 %v403
        %445 = vmatpush1.msra.mxu0 %v402
        %446 = vmatprep.subr.mxu0 %v405
        %447 = vmatpush1.msra.mxu0 %v404
        %448 = vmatprep.subr.mxu0 %v407
        %449 = vmatpush1.msra.mxu0 %v406
        %450 = vmatprep.subr.mxu0 %v428
        %451 = vmatpush1.msra.mxu0 %v425
        %452 = vmatprep.subr.mxu0 0.0
        %453 = vmatpush1.msra.mxu0 0.0
        %454 = vmatprep.subr.mxu0 0.0
        %455 = vmatpush1.msra.mxu0 0.0
        %456 = vmatprep.subr.mxu0 0.0
        %457 = vmatpush1.msra.mxu0 0.0
        %458 = vmatprep.subr.mxu0 0.0
        %459 = vmatpush1.msra.mxu0 0.0
        %460 = vmatprep.subr.mxu0 0.0
        %461 = vmatpush1.msra.mxu0 0.0
        %462 = vmatprep.subr.mxu0 0.0
        %463 = vmatpush1.msra.mxu0 0.0
        %464 = vmatprep.subr.mxu0 0.0
        %465 = vmatpush1.msra.mxu0 0.0
        %466 = vmatprep.subr.mxu0 0.0
        %467 = vmatpush1.msra.mxu0 0.0
        %468 = vmatprep.subr.mxu0 0.0
        %469 = vmatpush1.msra.mxu0 0.0
        %470 = vmatprep.subr.mxu0 0.0
        %471 = vmatpush1.msra.mxu0 0.0
        %472 = vmatprep.subr.mxu0 0.0
        %473 = vmatpush1.msra.mxu0 0.0
        %474 = vmatprep.subr.mxu0 0.0
        %475 = vmatpush1.msra.mxu0 0.0
        %476 = vmatprep.subr.mxu0 0.0
        %477 = vmatpush1.msra.mxu0 0.0
        %478 = vmatprep.subr.mxu0 0.0
        %479 = vmatpush1.msra.mxu0 0.0
        %480 = vmatprep.subr.mxu0 0.0
        %481 = vmatpush1.msra.mxu0 0.0
        %482 = vmatprep.subr.mxu0 0.0
        %483 = vmatpush1.msra.mxu0 0.0
        %484 = vmatprep.subr.mxu0 0.0
        %485 = vmatpush1.msra.mxu0 0.0
        %486 = vmatprep.subr.mxu0 0.0
        %487 = vmatpush1.msra.mxu0 0.0
        %488 = vmatprep.subr.mxu0 0.0
        %489 = vmatpush1.msra.mxu0 0.0
        %490 = vmatprep.subr.mxu0 0.0
        %491 = vmatpush1.msra.mxu0 0.0
        %492 = vmatprep.subr.mxu0 0.0
        %493 = vmatpush1.msra.mxu0 0.0
        %494 = vmatprep.mubr.f32.mxu0 0.0
        %495 = vmatmul.mubr.f32.gmra.mrb[0].mxu0 %v412
        %v496 = vpop.f32.mrb[0].mxu0
        %v497 = vadd.f32 0.0, %v496
        %v498 = vpop.f32.mrb[0].mxu0
        %v499 = vadd.f32 0.0, %v498
        %500 = vmatprep.mubr.f32.mxu0 0.0
        %501 = vmatmul.mubr.f32.gmra.mrb[0].mxu0 %v415
        %v502 = vpop.f32.mrb[0].mxu0
        %v503 = vadd.f32 0.0, %v502
        %v504 = vpop.f32.mrb[0].mxu0
        %v505 = vadd.f32 0.0, %v504
        %506 = vmatprep.mubr.f32.mxu0 0.0
        %507 = vmatmul.mubr.f32.gmra.mrb[0].mxu0 %v418
        %v508 = vpop.f32.mrb[0].mxu0
        %v509 = vadd.f32 0.0, %v508
        %v510 = vpop.f32.mrb[0].mxu0
        %v511 = vadd.f32 0.0, %v510
        %512 = vmatprep.mubr.f32.mxu0 0.0
        %513 = vmatmul.mubr.f32.gmra.mrb[0].mxu0 %v421
        %v514 = vpop.f32.mrb[0].mxu0
        %v515 = vadd.f32 0.0, %v514
        %v516 = vpop.f32.mrb[0].mxu0
        %v517 = vadd.f32 0.0, %v516
        %518 = vdwg.mxu0
        %v519 = vld [vmem:[%s2] sm:$0xff]
        %v520 = vld [vmem:[%s2 + $0x8] sm:$0xff]
        %v521 = vld [vmem:[%s2 + $0x10] sm:$0xff]
        %v522 = vld [vmem:[%s2 + $0x18] sm:$0xff]
        %v523 = vld [vmem:[%s2 + $0x20] sm:$0xff]
        %v524 = vld [vmem:[%s2 + $0x28] sm:$0xff]
        %v525 = vld [vmem:[%s2 + $0x30] sm:$0xff]
        %v526 = vld [vmem:[%s2 + $0x38] sm:$0xff]
        %v527 = vld [vmem:[%s2 + $0x40] sm:$0xff]
        %v528 = vld [vmem:[%s2 + $0x48] sm:$0xff]
        %v529 = vld [vmem:[%s2 + $0x50] sm:$0xff]
        %v530 = vld [vmem:[%s2 + $0x58] sm:$0xff]
        %v531 = vld [vmem:[%s2 + $0x60] sm:$0xff]
        %v532 = vld [vmem:[%s2 + $0x68] sm:$0xff]
        %v533 = vld [vmem:[%s2 + $0x70] sm:$0xff]
        %v534 = vld [vmem:[%s2 + $0x78] sm:$0xff]
        %v535 = vld [vmem:[%s2 + $0x80] sm:$0xff]
        %v536 = vld [vmem:[%s2 + $0x88] sm:$0xff]
        %v537 = vld [vmem:[%s2 + $0x90] sm:$0xff]
        %v538 = vld [vmem:[%s2 + $0x98] sm:$0xff]
        %v539 = vld [vmem:[%s2 + $0xa0] sm:$0xf]
        %v540 = vld [vmem:[%s2 + $0xa8] sm:$0xf]
        %v542 = vsel %vm423, %v539, 0
        %v545 = vsel %vm423, %v540, 0
        %547 = vmatprep.subr.mxu0 %v520
        %548 = vmatpush1.msra.mxu0 %v519
        %549 = vmatprep.subr.mxu0 %v522
        %550 = vmatpush1.msra.mxu0 %v521
        %551 = vmatprep.subr.mxu0 %v524
        %552 = vmatpush1.msra.mxu0 %v523
        %553 = vmatprep.subr.mxu0 %v526
        %554 = vmatpush1.msra.mxu0 %v525
        %555 = vmatprep.subr.mxu0 %v528
        %556 = vmatpush1.msra.mxu0 %v527
        %557 = vmatprep.subr.mxu0 %v530
        %558 = vmatpush1.msra.mxu0 %v529
        %559 = vmatprep.subr.mxu0 %v532
        %560 = vmatpush1.msra.mxu0 %v531
        %561 = vmatprep.subr.mxu0 %v534
        %562 = vmatpush1.msra.mxu0 %v533
        %563 = vmatprep.subr.mxu0 %v536
        %564 = vmatpush1.msra.mxu0 %v535
        %565 = vmatprep.subr.mxu0 %v538
        %566 = vmatpush1.msra.mxu0 %v537
        %567 = vmatprep.subr.mxu0 %v545
        %568 = vmatpush1.msra.mxu0 %v542
        %569 = vmatprep.subr.mxu0 0.0
        %570 = vmatpush1.msra.mxu0 0.0
        %571 = vmatprep.subr.mxu0 0.0
        %572 = vmatpush1.msra.mxu0 0.0
        %573 = vmatprep.subr.mxu0 0.0
        %574 = vmatpush1.msra.mxu0 0.0
        %575 = vmatprep.subr.mxu0 0.0
        %576 = vmatpush1.msra.mxu0 0.0
        %577 = vmatprep.subr.mxu0 0.0
        %578 = vmatpush1.msra.mxu0 0.0
        %579 = vmatprep.subr.mxu0 0.0
        %580 = vmatpush1.msra.mxu0 0.0
        %581 = vmatprep.subr.mxu0 0.0
        %582 = vmatpush1.msra.mxu0 0.0
        %583 = vmatprep.subr.mxu0 0.0
        %584 = vmatpush1.msra.mxu0 0.0
        %585 = vmatprep.subr.mxu0 0.0
        %586 = vmatpush1.msra.mxu0 0.0
        %587 = vmatprep.subr.mxu0 0.0
        %588 = vmatpush1.msra.mxu0 0.0
        %589 = vmatprep.subr.mxu0 0.0
        %590 = vmatpush1.msra.mxu0 0.0
        %591 = vmatprep.subr.mxu0 0.0
        %592 = vmatpush1.msra.mxu0 0.0
        %593 = vmatprep.subr.mxu0 0.0
        %594 = vmatpush1.msra.mxu0 0.0
        %595 = vmatprep.subr.mxu0 0.0
        %596 = vmatpush1.msra.mxu0 0.0
        %597 = vmatprep.subr.mxu0 0.0
        %598 = vmatpush1.msra.mxu0 0.0
        %599 = vmatprep.subr.mxu0 0.0
        %600 = vmatpush1.msra.mxu0 0.0
        %601 = vmatprep.subr.mxu0 0.0
        %602 = vmatpush1.msra.mxu0 0.0
        %603 = vmatprep.subr.mxu0 0.0
        %604 = vmatpush1.msra.mxu0 0.0
        %605 = vmatprep.subr.mxu0 0.0
        %606 = vmatpush1.msra.mxu0 0.0
        %607 = vmatprep.subr.mxu0 0.0
        %608 = vmatpush1.msra.mxu0 0.0
        %609 = vmatprep.subr.mxu0 0.0
        %610 = vmatpush1.msra.mxu0 0.0
        %611 = vmatprep.mubr.f32.mxu0 0.0
        %612 = vmatmul.mubr.f32.gmra.mrb[0].mxu0 %v412
        %v613 = vpop.f32.mrb[0].mxu0
        %v614 = vadd.f32 0.0, %v613
        %v615 = vpop.f32.mrb[0].mxu0
        %v616 = vadd.f32 0.0, %v615
        %617 = vmatprep.mubr.f32.mxu0 0.0
        %618 = vmatmul.mubr.f32.gmra.mrb[0].mxu0 %v415
        %v619 = vpop.f32.mrb[0].mxu0
        %v620 = vadd.f32 0.0, %v619
        %v621 = vpop.f32.mrb[0].mxu0
        %v622 = vadd.f32 0.0, %v621
        %623 = vmatprep.mubr.f32.mxu0 0.0
        %624 = vmatmul.mubr.f32.gmra.mrb[0].mxu0 %v418
        %v625 = vpop.f32.mrb[0].mxu0
        %v626 = vadd.f32 0.0, %v625
        %v627 = vpop.f32.mrb[0].mxu0
        %v628 = vadd.f32 0.0, %v627
        %629 = vmatprep.mubr.f32.mxu0 0.0
        %630 = vmatmul.mubr.f32.gmra.mrb[0].mxu0 %v421
        %v631 = vpop.f32.mrb[0].mxu0
        %v632 = vadd.f32 0.0, %v631
        %v633 = vpop.f32.mrb[0].mxu0
        %v634 = vadd.f32 0.0, %v633
        %635 = vdwg.mxu0
        %v636 = vmax.f32 %v497, %v614
        %v637 = vmax.f32 %v499, %v616
        %v638 = vmax.f32 %v503, %v620
        %v639 = vmax.f32 %v505, %v622
        %v640 = vmax.f32 %v509, %v626
        %v641 = vmax.f32 %v511, %v628
        %v642 = vmax.f32 %v515, %v632
        %v643 = vmax.f32 %v517, %v634
        %vm650 = vcmask 1041408
        %v651 = vrot.slane %v638, 6
        %v652 = vrot.slane %v640, 6
        %v653 = vsel %vm650, %v651, %v652
        %v654 = vrot.slane %v639, 6
        %v655 = vrot.slane %v641, 6
        %v656 = vsel %vm650, %v654, %v655
        %v657 = vrot.slane %v642, 6
        %v658 = vsel %vm650, %v652, %v657
        %v659 = vrot.slane %v643, 6
        %v660 = vsel %vm650, %v655, %v659
        %v665 = vmax.f32 %v636, %v653
        %v666 = vmax.f32 %v637, %v656
        %v667 = vmax.f32 %v638, %v658
        %v668 = vmax.f32 %v639, %v660
        %v669 = vld [vmem:[%s3] sm:$0x3]
        %v671 = vlaneseq
        %v672 = vshrl.u32 %v671, 7
        %v673 = vsub.s32 0, %v672
        %v674 = vrot.slane %v669, %v673
        %v675 = vlaneseq
        %v676 = vshrl.u32 %v675, 7
        %v677 = vsub.s32 1, %v676
        %v678 = vrot.slane %v669, %v677
        %v681 = vadd.f32 %v665, %v674
        %v682 = vadd.f32 %v666, %v678
        %v683 = vadd.f32 %v667, %v674
        %v684 = vadd.f32 %v668, %v678
        %v685 = vmax.f32 %v681, 0.0
        %v686 = vmax.f32 %v682, 0.0
        %v687 = vmax.f32 %v683, 0.0
        %v688 = vmax.f32 %v684, 0.0
        %689 = vst [vmem:[#allocation2] sm:$0xff] 0.0
        %vm690 = vcmask 785408
        %691 = vst.msk [vmem:[#allocation2 + $0x8] sm:$0xff] %vm690, 0.0
        %692 = vst [vmem:[#allocation2 + $0x10] sm:$0x1] 0.0
        %vm693 = vcmask 778240
        %694 = vst.msk [vmem:[#allocation2 + $0x18] sm:$0x1] %vm693, 0.0
        %695 = vst [vmem:[#allocation3] sm:$0xff] 0.0
        %696 = vst.msk [vmem:[#allocation3 + $0x8] sm:$0xff] %vm690, 0.0
        %697 = vst [vmem:[#allocation3 + $0x10] sm:$0x1] 0.0
        %698 = vst.msk [vmem:[#allocation3 + $0x18] sm:$0x1] %vm693, 0.0
        %v701 = vrot.slane %v685, 7
        %v702 = vrot.slane %v686, 7
        %705 = vst [vmem:[#allocation2] sm:$0xfe] %v701
        %vm706 = vcmask 785409
        %707 = vst.msk [vmem:[#allocation2 + $0x8] sm:$0xfe] %vm706, %v702
        %v710 = vrot.slane %v685, 6
        %v711 = vrot.slane %v687, 6
        %v712 = vsel %vm650, %v710, %v711
        %v713 = vrot.slane %v686, 6
        %v714 = vrot.slane %v688, 6
        %v715 = vsel %vm650, %v713, %v714
        %718 = vst [vmem:[#allocation3] sm:$0xfe] %v712
        %719 = vst.msk [vmem:[#allocation3 + $0x8] sm:$0xfe] %vm706, %v715
        %v720 = vld [vmem:[#allocation2] sm:$0x7f]
        %v721 = vld [vmem:[#allocation2 + $0x8] sm:$0x7f]
        %v722 = vld [vmem:[#allocation3] sm:$0x7f]
        %v723 = vld [vmem:[#allocation3 + $0x8] sm:$0x7f]
        %v724 = vld [vmem:[#allocation2] sm:$0xfe]
        %v725 = vld [vmem:[#allocation2 + $0x8] sm:$0xfe]
        %v726 = vld [vmem:[#allocation3] sm:$0xfe]
        %v727 = vld [vmem:[#allocation3 + $0x8] sm:$0xfe]
        %v728 = vld [vmem:[#allocation2] sm:$0xfc]
        %v729 = vld [vmem:[#allocation2 + $0x8] sm:$0xfc]
        %v730 = vld [vmem:[#allocation2 + $0x10] sm:$0x1]
        %v731 = vld [vmem:[#allocation2 + $0x18] sm:$0x1]
        %v732 = vld [vmem:[#allocation3] sm:$0xfc]
        %v733 = vld [vmem:[#allocation3 + $0x8] sm:$0xfc]
        %v734 = vld [vmem:[#allocation3 + $0x10] sm:$0x1]
        %v735 = vld [vmem:[#allocation3 + $0x18] sm:$0x1]
        %v736 = vld [vmem:[%s4] sm:$0xff]
        %v737 = vld [vmem:[%s4 + $0x8] sm:$0xff]
        %v738 = vld [vmem:[%s4 + $0x10] sm:$0xff]
        %v739 = vld [vmem:[%s4 + $0x18] sm:$0xff]
        %v740 = vld [vmem:[%s4 + $0x20] sm:$0xff]
        %v741 = vld [vmem:[%s4 + $0x28] sm:$0xff]
        %v742 = vld [vmem:[%s4 + $0x30] sm:$0xff]
        %v743 = vld [vmem:[%s4 + $0x38] sm:$0xff]
        %v744 = vld [vmem:[%s4 + $0x40] sm:$0xff]
        %v745 = vld [vmem:[%s4 + $0x48] sm:$0xff]
        %v746 = vld [vmem:[%s4 + $0x50] sm:$0xff]
        %v747 = vld [vmem:[%s4 + $0x58] sm:$0xff]
        %v748 = vld [vmem:[%s4 + $0x60] sm:$0xff]
        %v749 = vld [vmem:[%s4 + $0x68] sm:$0xff]
        %v750 = vld [vmem:[%s4 + $0x70] sm:$0xff]
        %v751 = vld [vmem:[%s4 + $0x78] sm:$0xff]
        %v752 = vld [vmem:[%s4 + $0x80] sm:$0xff]
        %v753 = vld [vmem:[%s4 + $0x88] sm:$0xff]
        %v754 = vld [vmem:[%s4 + $0x90] sm:$0xff]
        %v755 = vld [vmem:[%s4 + $0x98] sm:$0xff]
        %v756 = vld [vmem:[%s4 + $0xa0] sm:$0xff]
        %v757 = vld [vmem:[%s4 + $0xa8] sm:$0xff]
        %v758 = vld [vmem:[%s4 + $0xb0] sm:$0xff]
        %v759 = vld [vmem:[%s4 + $0xb8] sm:$0xff]
        %v760 = vld [vmem:[%s4 + $0xc0] sm:$0xff]
        %v761 = vld [vmem:[%s4 + $0xc8] sm:$0xff]
        %v762 = vld [vmem:[%s4 + $0xd0] sm:$0xff]
        %v763 = vld [vmem:[%s4 + $0xd8] sm:$0xff]
        %v764 = vld [vmem:[%s4 + $0xe0] sm:$0xff]
        %v765 = vld [vmem:[%s4 + $0xe8] sm:$0xff]
        %v766 = vld [vmem:[%s4 + $0xf0] sm:$0xff]
        %v767 = vld [vmem:[%s4 + $0xf8] sm:$0xff]
        %v768 = vld [vmem:[%s4 + $0x100] sm:$0xff]
        %v769 = vld [vmem:[%s4 + $0x108] sm:$0xff]
        %v770 = vld [vmem:[%s4 + $0x110] sm:$0xff]
        %v771 = vld [vmem:[%s4 + $0x118] sm:$0xff]
        %v772 = vld [vmem:[%s4 + $0x120] sm:$0xff]
        %v773 = vld [vmem:[%s4 + $0x128] sm:$0xff]
        %v774 = vld [vmem:[%s4 + $0x130] sm:$0xff]
        %v775 = vld [vmem:[%s4 + $0x138] sm:$0xff]
        %v776 = vld [vmem:[%s4 + $0x140] sm:$0xff]
        %v777 = vld [vmem:[%s4 + $0x148] sm:$0xff]
        %v778 = vld [vmem:[%s4 + $0x150] sm:$0xff]
        %v779 = vld [vmem:[%s4 + $0x158] sm:$0xff]
        %v780 = vld [vmem:[%s4 + $0x160] sm:$0xff]
        %v781 = vld [vmem:[%s4 + $0x168] sm:$0xff]
        %v782 = vld [vmem:[%s4 + $0x170] sm:$0xff]
        %v783 = vld [vmem:[%s4 + $0x178] sm:$0xff]
        %v784 = vld [vmem:[%s4 + $0x180] sm:$0xff]
        %v785 = vld [vmem:[%s4 + $0x188] sm:$0xff]
        %v786 = vld [vmem:[%s4 + $0x190] sm:$0xff]
        %v787 = vld [vmem:[%s4 + $0x198] sm:$0xff]
        %v788 = vld [vmem:[%s4 + $0x1a0] sm:$0xff]
        %v789 = vld [vmem:[%s4 + $0x1a8] sm:$0xff]
        %v790 = vld [vmem:[%s4 + $0x1b0] sm:$0xff]
        %v791 = vld [vmem:[%s4 + $0x1b8] sm:$0xff]
        %v792 = vld [vmem:[%s5] sm:$0xff]
        %v793 = vld [vmem:[%s5 + $0x8] sm:$0xff]
        %v794 = vld [vmem:[%s5 + $0x10] sm:$0xff]
        %v795 = vld [vmem:[%s5 + $0x18] sm:$0xff]
        %v796 = vld [vmem:[%s5 + $0x20] sm:$0xff]
        %v797 = vld [vmem:[%s5 + $0x28] sm:$0xff]
        %v798 = vld [vmem:[%s5 + $0x30] sm:$0xff]
        %v799 = vld [vmem:[%s5 + $0x38] sm:$0xff]
        %v800 = vld [vmem:[%s5 + $0x40] sm:$0xff]
        %v801 = vld [vmem:[%s5 + $0x48] sm:$0xff]
        %v802 = vld [vmem:[%s5 + $0x50] sm:$0xff]
        %v803 = vld [vmem:[%s5 + $0x58] sm:$0xff]
        %v804 = vld [vmem:[%s5 + $0x60] sm:$0xff]
        %v805 = vld [vmem:[%s5 + $0x68] sm:$0xff]
        %v806 = vld [vmem:[%s5 + $0x70] sm:$0xff]
        %v807 = vld [vmem:[%s5 + $0x78] sm:$0xff]
        %v808 = vld [vmem:[%s5 + $0x80] sm:$0xff]
        %v809 = vld [vmem:[%s5 + $0x88] sm:$0xff]
        %v810 = vld [vmem:[%s5 + $0x90] sm:$0xff]
        %v811 = vld [vmem:[%s5 + $0x98] sm:$0xff]
        %v812 = vld [vmem:[%s5 + $0xa0] sm:$0xff]
        %v813 = vld [vmem:[%s5 + $0xa8] sm:$0xff]
        %v814 = vld [vmem:[%s5 + $0xb0] sm:$0xff]
        %v815 = vld [vmem:[%s5 + $0xb8] sm:$0xff]
        %v816 = vld [vmem:[%s5 + $0xc0] sm:$0xff]
        %v817 = vld [vmem:[%s5 + $0xc8] sm:$0xff]
        %v818 = vld [vmem:[%s5 + $0xd0] sm:$0xff]
        %v819 = vld [vmem:[%s5 + $0xd8] sm:$0xff]
        %v820 = vld [vmem:[%s5 + $0xe0] sm:$0xff]
        %v821 = vld [vmem:[%s5 + $0xe8] sm:$0xff]
        %v822 = vld [vmem:[%s5 + $0xf0] sm:$0xff]
        %v823 = vld [vmem:[%s5 + $0xf8] sm:$0xff]
        %v824 = vld [vmem:[%s5 + $0x100] sm:$0xff]
        %v825 = vld [vmem:[%s5 + $0x108] sm:$0xff]
        %v826 = vld [vmem:[%s5 + $0x110] sm:$0xff]
        %v827 = vld [vmem:[%s5 + $0x118] sm:$0xff]
        %v828 = vld [vmem:[%s5 + $0x120] sm:$0xff]
        %v829 = vld [vmem:[%s5 + $0x128] sm:$0xff]
        %v830 = vld [vmem:[%s5 + $0x130] sm:$0xff]
        %v831 = vld [vmem:[%s5 + $0x138] sm:$0xff]
        %v832 = vld [vmem:[%s5 + $0x140] sm:$0xff]
        %v833 = vld [vmem:[%s5 + $0x148] sm:$0xff]
        %v834 = vld [vmem:[%s5 + $0x150] sm:$0xff]
        %v835 = vld [vmem:[%s5 + $0x158] sm:$0xff]
        %v836 = vld [vmem:[%s5 + $0x160] sm:$0xff]
        %v837 = vld [vmem:[%s5 + $0x168] sm:$0xff]
        %v838 = vld [vmem:[%s5 + $0x170] sm:$0xff]
        %v839 = vld [vmem:[%s5 + $0x178] sm:$0xff]
        %v840 = vld [vmem:[%s5 + $0x180] sm:$0xff]
        %v841 = vld [vmem:[%s5 + $0x188] sm:$0xff]
        %v842 = vld [vmem:[%s5 + $0x190] sm:$0xff]
        %v843 = vld [vmem:[%s5 + $0x198] sm:$0xff]
        %v844 = vld [vmem:[%s5 + $0x1a0] sm:$0xff]
        %v845 = vld [vmem:[%s5 + $0x1a8] sm:$0xff]
        %v846 = vld [vmem:[%s5 + $0x1b0] sm:$0xff]
        %v847 = vld [vmem:[%s5 + $0x1b8] sm:$0xff]
        %v848 = vld [vmem:[%s4 + $0x1c0] sm:$0xff]
        %v849 = vld [vmem:[%s4 + $0x1c8] sm:$0xff]
        %v850 = vld [vmem:[%s4 + $0x1d0] sm:$0xff]
        %v851 = vld [vmem:[%s4 + $0x1d8] sm:$0xff]
        %v852 = vld [vmem:[%s4 + $0x1e0] sm:$0xff]
        %v853 = vld [vmem:[%s4 + $0x1e8] sm:$0xff]
        %v854 = vld [vmem:[%s4 + $0x1f0] sm:$0xff]
        %v855 = vld [vmem:[%s4 + $0x1f8] sm:$0xff]
        %v856 = vld [vmem:[%s4 + $0x200] sm:$0xff]
        %v857 = vld [vmem:[%s4 + $0x208] sm:$0xff]
        %v858 = vld [vmem:[%s4 + $0x210] sm:$0xff]
        %v859 = vld [vmem:[%s4 + $0x218] sm:$0xff]
        %v860 = vld [vmem:[%s4 + $0x220] sm:$0xff]
        %v861 = vld [vmem:[%s4 + $0x228] sm:$0xff]
        %v862 = vld [vmem:[%s4 + $0x230] sm:$0xff]
        %v863 = vld [vmem:[%s4 + $0x238] sm:$0xff]
        %v864 = vld [vmem:[%s4 + $0x240] sm:$0xff]
        %v865 = vld [vmem:[%s4 + $0x248] sm:$0xff]
        %v866 = vld [vmem:[%s4 + $0x250] sm:$0xff]
        %v867 = vld [vmem:[%s4 + $0x258] sm:$0xff]
        %v868 = vld [vmem:[%s4 + $0x260] sm:$0xff]
        %v869 = vld [vmem:[%s4 + $0x268] sm:$0xff]
        %v870 = vld [vmem:[%s4 + $0x270] sm:$0xff]
        %v871 = vld [vmem:[%s4 + $0x278] sm:$0xff]
        %v872 = vld [vmem:[%s4 + $0x280] sm:$0xff]
        %v873 = vld [vmem:[%s4 + $0x288] sm:$0xff]
        %v874 = vld [vmem:[%s4 + $0x290] sm:$0xff]
        %v875 = vld [vmem:[%s4 + $0x298] sm:$0xff]
        %v876 = vld [vmem:[%s4 + $0x2a0] sm:$0xff]
        %v877 = vld [vmem:[%s4 + $0x2a8] sm:$0xff]
        %v878 = vld [vmem:[%s4 + $0x2b0] sm:$0xff]
        %v879 = vld [vmem:[%s4 + $0x2b8] sm:$0xff]
        %v880 = vld [vmem:[%s4 + $0x2c0] sm:$0xff]
        %v881 = vld [vmem:[%s4 + $0x2c8] sm:$0xff]
        %v882 = vld [vmem:[%s4 + $0x2d0] sm:$0xff]
        %v883 = vld [vmem:[%s4 + $0x2d8] sm:$0xff]
        %v884 = vld [vmem:[%s4 + $0x2e0] sm:$0xff]
        %v885 = vld [vmem:[%s4 + $0x2e8] sm:$0xff]
        %v886 = vld [vmem:[%s4 + $0x2f0] sm:$0xff]
        %v887 = vld [vmem:[%s4 + $0x2f8] sm:$0xff]
        %v888 = vld [vmem:[%s4 + $0x300] sm:$0xff]
        %v889 = vld [vmem:[%s4 + $0x308] sm:$0xff]
        %v890 = vld [vmem:[%s4 + $0x310] sm:$0xff]
        %v891 = vld [vmem:[%s4 + $0x318] sm:$0xff]
        %v892 = vld [vmem:[%s4 + $0x320] sm:$0xff]
        %v893 = vld [vmem:[%s4 + $0x328] sm:$0xff]
        %v894 = vld [vmem:[%s4 + $0x330] sm:$0xff]
        %v895 = vld [vmem:[%s4 + $0x338] sm:$0xff]
        %v896 = vld [vmem:[%s4 + $0x340] sm:$0xff]
        %v897 = vld [vmem:[%s4 + $0x348] sm:$0xff]
        %v898 = vld [vmem:[%s4 + $0x350] sm:$0xff]
        %v899 = vld [vmem:[%s4 + $0x358] sm:$0xff]
        %v900 = vld [vmem:[%s4 + $0x360] sm:$0xff]
        %v901 = vld [vmem:[%s4 + $0x368] sm:$0xff]
        %v902 = vld [vmem:[%s4 + $0x370] sm:$0xff]
        %v903 = vld [vmem:[%s4 + $0x378] sm:$0xff]
        %v904 = vld [vmem:[%s5 + $0x1c0] sm:$0xff]
        %v905 = vld [vmem:[%s5 + $0x1c8] sm:$0xff]
        %v906 = vld [vmem:[%s5 + $0x1d0] sm:$0xff]
        %v907 = vld [vmem:[%s5 + $0x1d8] sm:$0xff]
        %v908 = vld [vmem:[%s5 + $0x1e0] sm:$0xff]
        %v909 = vld [vmem:[%s5 + $0x1e8] sm:$0xff]
        %v910 = vld [vmem:[%s5 + $0x1f0] sm:$0xff]
        %v911 = vld [vmem:[%s5 + $0x1f8] sm:$0xff]
        %v912 = vld [vmem:[%s5 + $0x200] sm:$0xff]
        %v913 = vld [vmem:[%s5 + $0x208] sm:$0xff]
        %v914 = vld [vmem:[%s5 + $0x210] sm:$0xff]
        %v915 = vld [vmem:[%s5 + $0x218] sm:$0xff]
        %v916 = vld [vmem:[%s5 + $0x220] sm:$0xff]
        %v917 = vld [vmem:[%s5 + $0x228] sm:$0xff]
        %v918 = vld [vmem:[%s5 + $0x230] sm:$0xff]
        %v919 = vld [vmem:[%s5 + $0x238] sm:$0xff]
        %v920 = vld [vmem:[%s5 + $0x240] sm:$0xff]
        %v921 = vld [vmem:[%s5 + $0x248] sm:$0xff]
        %v922 = vld [vmem:[%s5 + $0x250] sm:$0xff]
        %v923 = vld [vmem:[%s5 + $0x258] sm:$0xff]
        %v924 = vld [vmem:[%s5 + $0x260] sm:$0xff]
        %v925 = vld [vmem:[%s5 + $0x268] sm:$0xff]
        %v926 = vld [vmem:[%s5 + $0x270] sm:$0xff]
        %v927 = vld [vmem:[%s5 + $0x278] sm:$0xff]
        %v928 = vld [vmem:[%s5 + $0x280] sm:$0xff]
        %v929 = vld [vmem:[%s5 + $0x288] sm:$0xff]
        %v930 = vld [vmem:[%s5 + $0x290] sm:$0xff]
        %v931 = vld [vmem:[%s5 + $0x298] sm:$0xff]
        %v932 = vld [vmem:[%s5 + $0x2a0] sm:$0xff]
        %v933 = vld [vmem:[%s5 + $0x2a8] sm:$0xff]
        %v934 = vld [vmem:[%s5 + $0x2b0] sm:$0xff]
        %v935 = vld [vmem:[%s5 + $0x2b8] sm:$0xff]
        %v936 = vld [vmem:[%s5 + $0x2c0] sm:$0xff]
        %v937 = vld [vmem:[%s5 + $0x2c8] sm:$0xff]
        %v938 = vld [vmem:[%s5 + $0x2d0] sm:$0xff]
        %v939 = vld [vmem:[%s5 + $0x2d8] sm:$0xff]
        %v940 = vld [vmem:[%s5 + $0x2e0] sm:$0xff]
        %v941 = vld [vmem:[%s5 + $0x2e8] sm:$0xff]
        %v942 = vld [vmem:[%s5 + $0x2f0] sm:$0xff]
        %v943 = vld [vmem:[%s5 + $0x2f8] sm:$0xff]
        %v944 = vld [vmem:[%s5 + $0x300] sm:$0xff]
        %v945 = vld [vmem:[%s5 + $0x308] sm:$0xff]
        %v946 = vld [vmem:[%s5 + $0x310] sm:$0xff]
        %v947 = vld [vmem:[%s5 + $0x318] sm:$0xff]
        %v948 = vld [vmem:[%s5 + $0x320] sm:$0xff]
        %v949 = vld [vmem:[%s5 + $0x328] sm:$0xff]
        %v950 = vld [vmem:[%s5 + $0x330] sm:$0xff]
        %v951 = vld [vmem:[%s5 + $0x338] sm:$0xff]
        %v952 = vld [vmem:[%s5 + $0x340] sm:$0xff]
        %v953 = vld [vmem:[%s5 + $0x348] sm:$0xff]
        %v954 = vld [vmem:[%s5 + $0x350] sm:$0xff]
        %v955 = vld [vmem:[%s5 + $0x358] sm:$0xff]
        %v956 = vld [vmem:[%s5 + $0x360] sm:$0xff]
        %v957 = vld [vmem:[%s5 + $0x368] sm:$0xff]
        %v958 = vld [vmem:[%s5 + $0x370] sm:$0xff]
        %v959 = vld [vmem:[%s5 + $0x378] sm:$0xff]
        %v961 = vsel %vm690, %v723, 0
        %963 = vmatprep.subr.mxu0 %v849
        %964 = vmatpush1.msra.mxu0 %v848
        %965 = vmatprep.subr.mxu0 %v851
        %966 = vmatpush1.msra.mxu0 %v850
        %967 = vmatprep.subr.mxu0 %v853
        %968 = vmatpush1.msra.mxu0 %v852
        %969 = vmatprep.subr.mxu0 %v855
        %970 = vmatpush1.msra.mxu0 %v854
        %971 = vmatprep.subr.mxu0 %v857
        %972 = vmatpush1.msra.mxu0 %v856
        %973 = vmatprep.subr.mxu0 %v859
        %974 = vmatpush1.msra.mxu0 %v858
        %975 = vmatprep.subr.mxu0 %v861
        %976 = vmatpush1.msra.mxu0 %v860
        %977 = vmatprep.subr.mxu0 %v863
        %978 = vmatpush1.msra.mxu0 %v862
        %979 = vmatprep.subr.mxu0 %v865
        %980 = vmatpush1.msra.mxu0 %v864
        %981 = vmatprep.subr.mxu0 %v867
        %982 = vmatpush1.msra.mxu0 %v866
        %983 = vmatprep.subr.mxu0 %v869
        %984 = vmatpush1.msra.mxu0 %v868
        %985 = vmatprep.subr.mxu0 %v871
        %986 = vmatpush1.msra.mxu0 %v870
        %987 = vmatprep.subr.mxu0 %v873
        %988 = vmatpush1.msra.mxu0 %v872
        %989 = vmatprep.subr.mxu0 %v875
        %990 = vmatpush1.msra.mxu0 %v874
        %991 = vmatprep.subr.mxu0 %v877
        %992 = vmatpush1.msra.mxu0 %v876
        %993 = vmatprep.subr.mxu0 %v879
        %994 = vmatpush1.msra.mxu0 %v878
        %995 = vmatprep.subr.mxu0 %v881
        %996 = vmatpush1.msra.mxu0 %v880
        %997 = vmatprep.subr.mxu0 %v883
        %998 = vmatpush1.msra.mxu0 %v882
        %999 = vmatprep.subr.mxu0 %v885
        %1000 = vmatpush1.msra.mxu0 %v884
        %1001 = vmatprep.subr.mxu0 %v887
        %1002 = vmatpush1.msra.mxu0 %v886
        %1003 = vmatprep.subr.mxu0 %v889
        %1004 = vmatpush1.msra.mxu0 %v888
        %1005 = vmatprep.subr.mxu0 %v891
        %1006 = vmatpush1.msra.mxu0 %v890
        %1007 = vmatprep.subr.mxu0 %v893
        %1008 = vmatpush1.msra.mxu0 %v892
        %1009 = vmatprep.subr.mxu0 %v895
        %1010 = vmatpush1.msra.mxu0 %v894
        %1011 = vmatprep.subr.mxu0 %v897
        %1012 = vmatpush1.msra.mxu0 %v896
        %1013 = vmatprep.subr.mxu0 %v899
        %1014 = vmatpush1.msra.mxu0 %v898
        %1015 = vmatprep.subr.mxu0 %v901
        %1016 = vmatpush1.msra.mxu0 %v900
        %1017 = vmatprep.subr.mxu0 %v903
        %1018 = vmatpush1.msra.mxu0 %v902
        %1019 = vmatprep.subr.mxu0 0.0
        %1020 = vmatpush1.msra.mxu0 0.0
        %1021 = vmatprep.subr.mxu0 0.0
        %1022 = vmatpush1.msra.mxu0 0.0
        %1023 = vmatprep.subr.mxu0 0.0
        %1024 = vmatpush1.msra.mxu0 0.0
        %1025 = vmatprep.subr.mxu0 0.0
        %1026 = vmatpush1.msra.mxu0 0.0
        %1027 = vmatprep.mubr.f32.mxu0 %v961
        %1028 = vmatmul.mubr.f32.gmra.mrb[0].mxu0 %v722
        %v1029 = vpop.f32.mrb[0].mxu0
        %v1030 = vadd.f32 0.0, %v1029
        %v1031 = vpop.f32.mrb[0].mxu0
        %v1032 = vadd.f32 0.0, %v1031
        %1033 = vdwg.mxu0
        %v1035 = vsel %vm690, %v721, 0
        %1037 = vmatprep.subr.mxu0 %v737
        %1038 = vmatpush1.msra.mxu0 %v736
        %1039 = vmatprep.subr.mxu0 %v739
        %1040 = vmatpush1.msra.mxu0 %v738
        %1041 = vmatprep.subr.mxu0 %v741
        %1042 = vmatpush1.msra.mxu0 %v740
        %1043 = vmatprep.subr.mxu0 %v743
        %1044 = vmatpush1.msra.mxu0 %v742
        %1045 = vmatprep.subr.mxu0 %v745
        %1046 = vmatpush1.msra.mxu0 %v744
        %1047 = vmatprep.subr.mxu0 %v747
        %1048 = vmatpush1.msra.mxu0 %v746
        %1049 = vmatprep.subr.mxu0 %v749
        %1050 = vmatpush1.msra.mxu0 %v748
        %1051 = vmatprep.subr.mxu0 %v751
        %1052 = vmatpush1.msra.mxu0 %v750
        %1053 = vmatprep.subr.mxu0 %v753
        %1054 = vmatpush1.msra.mxu0 %v752
        %1055 = vmatprep.subr.mxu0 %v755
        %1056 = vmatpush1.msra.mxu0 %v754
        %1057 = vmatprep.subr.mxu0 %v757
        %1058 = vmatpush1.msra.mxu0 %v756
        %1059 = vmatprep.subr.mxu0 %v759
        %1060 = vmatpush1.msra.mxu0 %v758
        %1061 = vmatprep.subr.mxu0 %v761
        %1062 = vmatpush1.msra.mxu0 %v760
        %1063 = vmatprep.subr.mxu0 %v763
        %1064 = vmatpush1.msra.mxu0 %v762
        %1065 = vmatprep.subr.mxu0 %v765
        %1066 = vmatpush1.msra.mxu0 %v764
        %1067 = vmatprep.subr.mxu0 %v767
        %1068 = vmatpush1.msra.mxu0 %v766
        %1069 = vmatprep.subr.mxu0 %v769
        %1070 = vmatpush1.msra.mxu0 %v768
        %1071 = vmatprep.subr.mxu0 %v771
        %1072 = vmatpush1.msra.mxu0 %v770
        %1073 = vmatprep.subr.mxu0 %v773
        %1074 = vmatpush1.msra.mxu0 %v772
        %1075 = vmatprep.subr.mxu0 %v775
        %1076 = vmatpush1.msra.mxu0 %v774
        %1077 = vmatprep.subr.mxu0 %v777
        %1078 = vmatpush1.msra.mxu0 %v776
        %1079 = vmatprep.subr.mxu0 %v779
        %1080 = vmatpush1.msra.mxu0 %v778
        %1081 = vmatprep.subr.mxu0 %v781
        %1082 = vmatpush1.msra.mxu0 %v780
        %1083 = vmatprep.subr.mxu0 %v783
        %1084 = vmatpush1.msra.mxu0 %v782
        %1085 = vmatprep.subr.mxu0 %v785
        %1086 = vmatpush1.msra.mxu0 %v784
        %1087 = vmatprep.subr.mxu0 %v787
        %1088 = vmatpush1.msra.mxu0 %v786
        %1089 = vmatprep.subr.mxu0 %v789
        %1090 = vmatpush1.msra.mxu0 %v788
        %1091 = vmatprep.subr.mxu0 %v791
        %1092 = vmatpush1.msra.mxu0 %v790
        %1093 = vmatprep.subr.mxu0 0.0
        %1094 = vmatpush1.msra.mxu0 0.0
        %1095 = vmatprep.subr.mxu0 0.0
        %1096 = vmatpush1.msra.mxu0 0.0
        %1097 = vmatprep.subr.mxu0 0.0
        %1098 = vmatpush1.msra.mxu0 0.0
        %1099 = vmatprep.subr.mxu0 0.0
        %1100 = vmatpush1.msra.mxu0 0.0
        %1101 = vmatprep.mubr.f32.mxu0 %v1035
        %1102 = vmatmul.mubr.f32.gmra.mrb[0].mxu0 %v720
        %v1103 = vpop.f32.mrb[0].mxu0
        %v1104 = vadd.f32 %v1030, %v1103
        %v1105 = vpop.f32.mrb[0].mxu0
        %v1106 = vadd.f32 %v1032, %v1105
        %1107 = vdwg.mxu0
        %1108 = vmatprep.subr.mxu0 %v905
        %1109 = vmatpush1.msra.mxu0 %v904
        %1110 = vmatprep.subr.mxu0 %v907
        %1111 = vmatpush1.msra.mxu0 %v906
        %1112 = vmatprep.subr.mxu0 %v909
        %1113 = vmatpush1.msra.mxu0 %v908
        %1114 = vmatprep.subr.mxu0 %v911
        %1115 = vmatpush1.msra.mxu0 %v910
        %1116 = vmatprep.subr.mxu0 %v913
        %1117 = vmatpush1.msra.mxu0 %v912
        %1118 = vmatprep.subr.mxu0 %v915
        %1119 = vmatpush1.msra.mxu0 %v914
        %1120 = vmatprep.subr.mxu0 %v917
        %1121 = vmatpush1.msra.mxu0 %v916
        %1122 = vmatprep.subr.mxu0 %v919
        %1123 = vmatpush1.msra.mxu0 %v918
        %1124 = vmatprep.subr.mxu0 %v921
        %1125 = vmatpush1.msra.mxu0 %v920
        %1126 = vmatprep.subr.mxu0 %v923
        %1127 = vmatpush1.msra.mxu0 %v922
        %1128 = vmatprep.subr.mxu0 %v925
        %1129 = vmatpush1.msra.mxu0 %v924
        %1130 = vmatprep.subr.mxu0 %v927
        %1131 = vmatpush1.msra.mxu0 %v926
        %1132 = vmatprep.subr.mxu0 %v929
        %1133 = vmatpush1.msra.mxu0 %v928
        %1134 = vmatprep.subr.mxu0 %v931
        %1135 = vmatpush1.msra.mxu0 %v930
        %1136 = vmatprep.subr.mxu0 %v933
        %1137 = vmatpush1.msra.mxu0 %v932
        %1138 = vmatprep.subr.mxu0 %v935
        %1139 = vmatpush1.msra.mxu0 %v934
        %1140 = vmatprep.subr.mxu0 %v937
        %1141 = vmatpush1.msra.mxu0 %v936
        %1142 = vmatprep.subr.mxu0 %v939
        %1143 = vmatpush1.msra.mxu0 %v938
        %1144 = vmatprep.subr.mxu0 %v941
        %1145 = vmatpush1.msra.mxu0 %v940
        %1146 = vmatprep.subr.mxu0 %v943
        %1147 = vmatpush1.msra.mxu0 %v942
        %1148 = vmatprep.subr.mxu0 %v945
        %1149 = vmatpush1.msra.mxu0 %v944
        %1150 = vmatprep.subr.mxu0 %v947
        %1151 = vmatpush1.msra.mxu0 %v946
        %1152 = vmatprep.subr.mxu0 %v949
        %1153 = vmatpush1.msra.mxu0 %v948
        %1154 = vmatprep.subr.mxu0 %v951
        %1155 = vmatpush1.msra.mxu0 %v950
        %1156 = vmatprep.subr.mxu0 %v953
        %1157 = vmatpush1.msra.mxu0 %v952
        %1158 = vmatprep.subr.mxu0 %v955
        %1159 = vmatpush1.msra.mxu0 %v954
        %1160 = vmatprep.subr.mxu0 %v957
        %1161 = vmatpush1.msra.mxu0 %v956
        %1162 = vmatprep.subr.mxu0 %v959
        %1163 = vmatpush1.msra.mxu0 %v958
        %1164 = vmatprep.subr.mxu0 0.0
        %1165 = vmatpush1.msra.mxu0 0.0
        %1166 = vmatprep.subr.mxu0 0.0
        %1167 = vmatpush1.msra.mxu0 0.0
        %1168 = vmatprep.subr.mxu0 0.0
        %1169 = vmatpush1.msra.mxu0 0.0
        %1170 = vmatprep.subr.mxu0 0.0
        %1171 = vmatpush1.msra.mxu0 0.0
        %1172 = vmatprep.mubr.f32.mxu0 %v961
        %1173 = vmatmul.mubr.f32.gmra.mrb[0].mxu0 %v722
        %v1174 = vpop.f32.mrb[0].mxu0
        %v1175 = vadd.f32 0.0, %v1174
        %v1176 = vpop.f32.mrb[0].mxu0
        %v1177 = vadd.f32 0.0, %v1176
        %1178 = vdwg.mxu0
        %1179 = vmatprep.subr.mxu0 %v793
        %1180 = vmatpush1.msra.mxu0 %v792
        %1181 = vmatprep.subr.mxu0 %v795
        %1182 = vmatpush1.msra.mxu0 %v794
        %1183 = vmatprep.subr.mxu0 %v797
        %1184 = vmatpush1.msra.mxu0 %v796
        %1185 = vmatprep.subr.mxu0 %v799
        %1186 = vmatpush1.msra.mxu0 %v798
        %1187 = vmatprep.subr.mxu0 %v801
        %1188 = vmatpush1.msra.mxu0 %v800
        %1189 = vmatprep.subr.mxu0 %v803
        %1190 = vmatpush1.msra.mxu0 %v802
        %1191 = vmatprep.subr.mxu0 %v805
        %1192 = vmatpush1.msra.mxu0 %v804
        %1193 = vmatprep.subr.mxu0 %v807
        %1194 = vmatpush1.msra.mxu0 %v806
        %1195 = vmatprep.subr.mxu0 %v809
        %1196 = vmatpush1.msra.mxu0 %v808
        %1197 = vmatprep.subr.mxu0 %v811
        %1198 = vmatpush1.msra.mxu0 %v810
        %1199 = vmatprep.subr.mxu0 %v813
        %1200 = vmatpush1.msra.mxu0 %v812
        %1201 = vmatprep.subr.mxu0 %v815
        %1202 = vmatpush1.msra.mxu0 %v814
        %1203 = vmatprep.subr.mxu0 %v817
        %1204 = vmatpush1.msra.mxu0 %v816
        %1205 = vmatprep.subr.mxu0 %v819
        %1206 = vmatpush1.msra.mxu0 %v818
        %1207 = vmatprep.subr.mxu0 %v821
        %1208 = vmatpush1.msra.mxu0 %v820
        %1209 = vmatprep.subr.mxu0 %v823
        %1210 = vmatpush1.msra.mxu0 %v822
        %1211 = vmatprep.subr.mxu0 %v825
        %1212 = vmatpush1.msra.mxu0 %v824
        %1213 = vmatprep.subr.mxu0 %v827
        %1214 = vmatpush1.msra.mxu0 %v826
        %1215 = vmatprep.subr.mxu0 %v829
        %1216 = vmatpush1.msra.mxu0 %v828
        %1217 = vmatprep.subr.mxu0 %v831
        %1218 = vmatpush1.msra.mxu0 %v830
        %1219 = vmatprep.subr.mxu0 %v833
        %1220 = vmatpush1.msra.mxu0 %v832
        %1221 = vmatprep.subr.mxu0 %v835
        %1222 = vmatpush1.msra.mxu0 %v834
        %1223 = vmatprep.subr.mxu0 %v837
        %1224 = vmatpush1.msra.mxu0 %v836
        %1225 = vmatprep.subr.mxu0 %v839
        %1226 = vmatpush1.msra.mxu0 %v838
        %1227 = vmatprep.subr.mxu0 %v841
        %1228 = vmatpush1.msra.mxu0 %v840
        %1229 = vmatprep.subr.mxu0 %v843
        %1230 = vmatpush1.msra.mxu0 %v842
        %1231 = vmatprep.subr.mxu0 %v845
        %1232 = vmatpush1.msra.mxu0 %v844
        %1233 = vmatprep.subr.mxu0 %v847
        %1234 = vmatpush1.msra.mxu0 %v846
        %1235 = vmatprep.subr.mxu0 0.0
        %1236 = vmatpush1.msra.mxu0 0.0
        %1237 = vmatprep.subr.mxu0 0.0
        %1238 = vmatpush1.msra.mxu0 0.0
        %1239 = vmatprep.subr.mxu0 0.0
        %1240 = vmatpush1.msra.mxu0 0.0
        %1241 = vmatprep.subr.mxu0 0.0
        %1242 = vmatpush1.msra.mxu0 0.0
        %1243 = vmatprep.mubr.f32.mxu0 %v1035
        %1244 = vmatmul.mubr.f32.gmra.mrb[0].mxu0 %v720
        %v1245 = vpop.f32.mrb[0].mxu0
        %v1246 = vadd.f32 %v1175, %v1245
        %v1247 = vpop.f32.mrb[0].mxu0
        %v1248 = vadd.f32 %v1177, %v1247
        %1249 = vdwg.mxu0
        %v1252 = vrot.slane %v724, 1
        %v1253 = vrot.slane %v725, 1
        %v1255 = vsel %vm690, %v1253, 0
        %1257 = vmatprep.subr.mxu0 %v849
        %1258 = vmatpush1.msra.mxu0 %v848
        %1259 = vmatprep.subr.mxu0 %v851
        %1260 = vmatpush1.msra.mxu0 %v850
        %1261 = vmatprep.subr.mxu0 %v853
        %1262 = vmatpush1.msra.mxu0 %v852
        %1263 = vmatprep.subr.mxu0 %v855
        %1264 = vmatpush1.msra.mxu0 %v854
        %1265 = vmatprep.subr.mxu0 %v857
        %1266 = vmatpush1.msra.mxu0 %v856
        %1267 = vmatprep.subr.mxu0 %v859
        %1268 = vmatpush1.msra.mxu0 %v858
        %1269 = vmatprep.subr.mxu0 %v861
        %1270 = vmatpush1.msra.mxu0 %v860
        %1271 = vmatprep.subr.mxu0 %v863
        %1272 = vmatpush1.msra.mxu0 %v862
        %1273 = vmatprep.subr.mxu0 %v865
        %1274 = vmatpush1.msra.mxu0 %v864
        %1275 = vmatprep.subr.mxu0 %v867
        %1276 = vmatpush1.msra.mxu0 %v866
        %1277 = vmatprep.subr.mxu0 %v869
        %1278 = vmatpush1.msra.mxu0 %v868
        %1279 = vmatprep.subr.mxu0 %v871
        %1280 = vmatpush1.msra.mxu0 %v870
        %1281 = vmatprep.subr.mxu0 %v873
        %1282 = vmatpush1.msra.mxu0 %v872
        %1283 = vmatprep.subr.mxu0 %v875
        %1284 = vmatpush1.msra.mxu0 %v874
        %1285 = vmatprep.subr.mxu0 %v877
        %1286 = vmatpush1.msra.mxu0 %v876
        %1287 = vmatprep.subr.mxu0 %v879
        %1288 = vmatpush1.msra.mxu0 %v878
        %1289 = vmatprep.subr.mxu0 %v881
        %1290 = vmatpush1.msra.mxu0 %v880
        %1291 = vmatprep.subr.mxu0 %v883
        %1292 = vmatpush1.msra.mxu0 %v882
        %1293 = vmatprep.subr.mxu0 %v885
        %1294 = vmatpush1.msra.mxu0 %v884
        %1295 = vmatprep.subr.mxu0 %v887
        %1296 = vmatpush1.msra.mxu0 %v886
        %1297 = vmatprep.subr.mxu0 %v889
        %1298 = vmatpush1.msra.mxu0 %v888
        %1299 = vmatprep.subr.mxu0 %v891
        %1300 = vmatpush1.msra.mxu0 %v890
        %1301 = vmatprep.subr.mxu0 %v893
        %1302 = vmatpush1.msra.mxu0 %v892
        %1303 = vmatprep.subr.mxu0 %v895
        %1304 = vmatpush1.msra.mxu0 %v894
        %1305 = vmatprep.subr.mxu0 %v897
        %1306 = vmatpush1.msra.mxu0 %v896
        %1307 = vmatprep.subr.mxu0 %v899
        %1308 = vmatpush1.msra.mxu0 %v898
        %1309 = vmatprep.subr.mxu0 %v901
        %1310 = vmatpush1.msra.mxu0 %v900
        %1311 = vmatprep.subr.mxu0 %v903
        %1312 = vmatpush1.msra.mxu0 %v902
        %1313 = vmatprep.subr.mxu0 0.0
        %1314 = vmatpush1.msra.mxu0 0.0
        %1315 = vmatprep.subr.mxu0 0.0
        %1316 = vmatpush1.msra.mxu0 0.0
        %1317 = vmatprep.subr.mxu0 0.0
        %1318 = vmatpush1.msra.mxu0 0.0
        %1319 = vmatprep.subr.mxu0 0.0
        %1320 = vmatpush1.msra.mxu0 0.0
        %1321 = vmatprep.mubr.f32.mxu0 %v1255
        %1322 = vmatmul.mubr.f32.gmra.mrb[0].mxu0 %v1252
        %v1323 = vpop.f32.mrb[0].mxu0
        %v1324 = vadd.f32 0.0, %v1323
        %v1325 = vpop.f32.mrb[0].mxu0
        %v1326 = vadd.f32 0.0, %v1325
        %1327 = vdwg.mxu0
        %1328 = vmatprep.subr.mxu0 %v737
        %1329 = vmatpush1.msra.mxu0 %v736
        %1330 = vmatprep.subr.mxu0 %v739
        %1331 = vmatpush1.msra.mxu0 %v738
        %1332 = vmatprep.subr.mxu0 %v741
        %1333 = vmatpush1.msra.mxu0 %v740
        %1334 = vmatprep.subr.mxu0 %v743
        %1335 = vmatpush1.msra.mxu0 %v742
        %1336 = vmatprep.subr.mxu0 %v745
        %1337 = vmatpush1.msra.mxu0 %v744
        %1338 = vmatprep.subr.mxu0 %v747
        %1339 = vmatpush1.msra.mxu0 %v746
        %1340 = vmatprep.subr.mxu0 %v749
        %1341 = vmatpush1.msra.mxu0 %v748
        %1342 = vmatprep.subr.mxu0 %v751
        %1343 = vmatpush1.msra.mxu0 %v750
        %1344 = vmatprep.subr.mxu0 %v753
        %1345 = vmatpush1.msra.mxu0 %v752
        %1346 = vmatprep.subr.mxu0 %v755
        %1347 = vmatpush1.msra.mxu0 %v754
        %1348 = vmatprep.subr.mxu0 %v757
        %1349 = vmatpush1.msra.mxu0 %v756
        %1350 = vmatprep.subr.mxu0 %v759
        %1351 = vmatpush1.msra.mxu0 %v758
        %1352 = vmatprep.subr.mxu0 %v761
        %1353 = vmatpush1.msra.mxu0 %v760
        %1354 = vmatprep.subr.mxu0 %v763
        %1355 = vmatpush1.msra.mxu0 %v762
        %1356 = vmatprep.subr.mxu0 %v765
        %1357 = vmatpush1.msra.mxu0 %v764
        %1358 = vmatprep.subr.mxu0 %v767
        %1359 = vmatpush1.msra.mxu0 %v766
        %1360 = vmatprep.subr.mxu0 %v769
        %1361 = vmatpush1.msra.mxu0 %v768
        %1362 = vmatprep.subr.mxu0 %v771
        %1363 = vmatpush1.msra.mxu0 %v770
        %1364 = vmatprep.subr.mxu0 %v773
        %1365 = vmatpush1.msra.mxu0 %v772
        %1366 = vmatprep.subr.mxu0 %v775
        %1367 = vmatpush1.msra.mxu0 %v774
        %1368 = vmatprep.subr.mxu0 %v777
        %1369 = vmatpush1.msra.mxu0 %v776
        %1370 = vmatprep.subr.mxu0 %v779
        %1371 = vmatpush1.msra.mxu0 %v778
        %1372 = vmatprep.subr.mxu0 %v781
        %1373 = vmatpush1.msra.mxu0 %v780
        %1374 = vmatprep.subr.mxu0 %v783
        %1375 = vmatpush1.msra.mxu0 %v782
        %1376 = vmatprep.subr.mxu0 %v785
        %1377 = vmatpush1.msra.mxu0 %v784
        %1378 = vmatprep.subr.mxu0 %v787
        %1379 = vmatpush1.msra.mxu0 %v786
        %1380 = vmatprep.subr.mxu0 %v789
        %1381 = vmatpush1.msra.mxu0 %v788
        %1382 = vmatprep.subr.mxu0 %v791
        %1383 = vmatpush1.msra.mxu0 %v790
        %1384 = vmatprep.subr.mxu0 0.0
        %1385 = vmatpush1.msra.mxu0 0.0
        %1386 = vmatprep.subr.mxu0 0.0
        %1387 = vmatpush1.msra.mxu0 0.0
        %1388 = vmatprep.subr.mxu0 0.0
        %1389 = vmatpush1.msra.mxu0 0.0
        %1390 = vmatprep.subr.mxu0 0.0
        %1391 = vmatpush1.msra.mxu0 0.0
        %1392 = vmatprep.mubr.f32.mxu0 %v961
        %1393 = vmatmul.mubr.f32.gmra.mrb[0].mxu0 %v722
        %v1394 = vpop.f32.mrb[0].mxu0
        %v1395 = vadd.f32 %v1324, %v1394
        %v1396 = vpop.f32.mrb[0].mxu0
        %v1397 = vadd.f32 %v1326, %v1396
        %1398 = vdwg.mxu0
        %1399 = vmatprep.subr.mxu0 %v905
        %1400 = vmatpush1.msra.mxu0 %v904
        %1401 = vmatprep.subr.mxu0 %v907
        %1402 = vmatpush1.msra.mxu0 %v906
        %1403 = vmatprep.subr.mxu0 %v909
        %1404 = vmatpush1.msra.mxu0 %v908
        %1405 = vmatprep.subr.mxu0 %v911
        %1406 = vmatpush1.msra.mxu0 %v910
        %1407 = vmatprep.subr.mxu0 %v913
        %1408 = vmatpush1.msra.mxu0 %v912
        %1409 = vmatprep.subr.mxu0 %v915
        %1410 = vmatpush1.msra.mxu0 %v914
        %1411 = vmatprep.subr.mxu0 %v917
        %1412 = vmatpush1.msra.mxu0 %v916
        %1413 = vmatprep.subr.mxu0 %v919
        %1414 = vmatpush1.msra.mxu0 %v918
        %1415 = vmatprep.subr.mxu0 %v921
        %1416 = vmatpush1.msra.mxu0 %v920
        %1417 = vmatprep.subr.mxu0 %v923
        %1418 = vmatpush1.msra.mxu0 %v922
        %1419 = vmatprep.subr.mxu0 %v925
        %1420 = vmatpush1.msra.mxu0 %v924
        %1421 = vmatprep.subr.mxu0 %v927
        %1422 = vmatpush1.msra.mxu0 %v926
        %1423 = vmatprep.subr.mxu0 %v929
        %1424 = vmatpush1.msra.mxu0 %v928
        %1425 = vmatprep.subr.mxu0 %v931
        %1426 = vmatpush1.msra.mxu0 %v930
        %1427 = vmatprep.subr.mxu0 %v933
        %1428 = vmatpush1.msra.mxu0 %v932
        %1429 = vmatprep.subr.mxu0 %v935
        %1430 = vmatpush1.msra.mxu0 %v934
        %1431 = vmatprep.subr.mxu0 %v937
        %1432 = vmatpush1.msra.mxu0 %v936
        %1433 = vmatprep.subr.mxu0 %v939
        %1434 = vmatpush1.msra.mxu0 %v938
        %1435 = vmatprep.subr.mxu0 %v941
        %1436 = vmatpush1.msra.mxu0 %v940
        %1437 = vmatprep.subr.mxu0 %v943
        %1438 = vmatpush1.msra.mxu0 %v942
        %1439 = vmatprep.subr.mxu0 %v945
        %1440 = vmatpush1.msra.mxu0 %v944
        %1441 = vmatprep.subr.mxu0 %v947
        %1442 = vmatpush1.msra.mxu0 %v946
        %1443 = vmatprep.subr.mxu0 %v949
        %1444 = vmatpush1.msra.mxu0 %v948
        %1445 = vmatprep.subr.mxu0 %v951
        %1446 = vmatpush1.msra.mxu0 %v950
        %1447 = vmatprep.subr.mxu0 %v953
        %1448 = vmatpush1.msra.mxu0 %v952
        %1449 = vmatprep.subr.mxu0 %v955
        %1450 = vmatpush1.msra.mxu0 %v954
        %1451 = vmatprep.subr.mxu0 %v957
        %1452 = vmatpush1.msra.mxu0 %v956
        %1453 = vmatprep.subr.mxu0 %v959
        %1454 = vmatpush1.msra.mxu0 %v958
        %1455 = vmatprep.subr.mxu0 0.0
        %1456 = vmatpush1.msra.mxu0 0.0
        %1457 = vmatprep.subr.mxu0 0.0
        %1458 = vmatpush1.msra.mxu0 0.0
        %1459 = vmatprep.subr.mxu0 0.0
        %1460 = vmatpush1.msra.mxu0 0.0
        %1461 = vmatprep.subr.mxu0 0.0
        %1462 = vmatpush1.msra.mxu0 0.0
        %1463 = vmatprep.mubr.f32.mxu0 %v1255
        %1464 = vmatmul.mubr.f32.gmra.mrb[0].mxu0 %v1252
        %v1465 = vpop.f32.mrb[0].mxu0
        %v1466 = vadd.f32 0.0, %v1465
        %v1467 = vpop.f32.mrb[0].mxu0
        %v1468 = vadd.f32 0.0, %v1467
        %1469 = vdwg.mxu0
        %1470 = vmatprep.subr.mxu0 %v793
        %1471 = vmatpush1.msra.mxu0 %v792
        %1472 = vmatprep.subr.mxu0 %v795
        %1473 = vmatpush1.msra.mxu0 %v794
        %1474 = vmatprep.subr.mxu0 %v797
        %1475 = vmatpush1.msra.mxu0 %v796
        %1476 = vmatprep.subr.mxu0 %v799
        %1477 = vmatpush1.msra.mxu0 %v798
        %1478 = vmatprep.subr.mxu0 %v801
        %1479 = vmatpush1.msra.mxu0 %v800
        %1480 = vmatprep.subr.mxu0 %v803
        %1481 = vmatpush1.msra.mxu0 %v802
        %1482 = vmatprep.subr.mxu0 %v805
        %1483 = vmatpush1.msra.mxu0 %v804
        %1484 = vmatprep.subr.mxu0 %v807
        %1485 = vmatpush1.msra.mxu0 %v806
        %1486 = vmatprep.subr.mxu0 %v809
        %1487 = vmatpush1.msra.mxu0 %v808
        %1488 = vmatprep.subr.mxu0 %v811
        %1489 = vmatpush1.msra.mxu0 %v810
        %1490 = vmatprep.subr.mxu0 %v813
        %1491 = vmatpush1.msra.mxu0 %v812
        %1492 = vmatprep.subr.mxu0 %v815
        %1493 = vmatpush1.msra.mxu0 %v814
        %1494 = vmatprep.subr.mxu0 %v817
        %1495 = vmatpush1.msra.mxu0 %v816
        %1496 = vmatprep.subr.mxu0 %v819
        %1497 = vmatpush1.msra.mxu0 %v818
        %1498 = vmatprep.subr.mxu0 %v821
        %1499 = vmatpush1.msra.mxu0 %v820
        %1500 = vmatprep.subr.mxu0 %v823
        %1501 = vmatpush1.msra.mxu0 %v822
        %1502 = vmatprep.subr.mxu0 %v825
        %1503 = vmatpush1.msra.mxu0 %v824
        %1504 = vmatprep.subr.mxu0 %v827
        %1505 = vmatpush1.msra.mxu0 %v826
        %1506 = vmatprep.subr.mxu0 %v829
        %1507 = vmatpush1.msra.mxu0 %v828
        %1508 = vmatprep.subr.mxu0 %v831
        %1509 = vmatpush1.msra.mxu0 %v830
        %1510 = vmatprep.subr.mxu0 %v833
        %1511 = vmatpush1.msra.mxu0 %v832
        %1512 = vmatprep.subr.mxu0 %v835
        %1513 = vmatpush1.msra.mxu0 %v834
        %1514 = vmatprep.subr.mxu0 %v837
        %1515 = vmatpush1.msra.mxu0 %v836
        %1516 = vmatprep.subr.mxu0 %v839
        %1517 = vmatpush1.msra.mxu0 %v838
        %1518 = vmatprep.subr.mxu0 %v841
        %1519 = vmatpush1.msra.mxu0 %v840
        %1520 = vmatprep.subr.mxu0 %v843
        %1521 = vmatpush1.msra.mxu0 %v842
        %1522 = vmatprep.subr.mxu0 %v845
        %1523 = vmatpush1.msra.mxu0 %v844
        %1524 = vmatprep.subr.mxu0 %v847
        %1525 = vmatpush1.msra.mxu0 %v846
        %1526 = vmatprep.subr.mxu0 0.0
        %1527 = vmatpush1.msra.mxu0 0.0
        %1528 = vmatprep.subr.mxu0 0.0
        %1529 = vmatpush1.msra.mxu0 0.0
        %1530 = vmatprep.subr.mxu0 0.0
        %1531 = vmatpush1.msra.mxu0 0.0
        %1532 = vmatprep.subr.mxu0 0.0
        %1533 = vmatpush1.msra.mxu0 0.0
        %1534 = vmatprep.mubr.f32.mxu0 %v961
        %1535 = vmatmul.mubr.f32.gmra.mrb[0].mxu0 %v722
        %v1536 = vpop.f32.mrb[0].mxu0
        %v1537 = vadd.f32 %v1466, %v1536
        %v1538 = vpop.f32.mrb[0].mxu0
        %v1539 = vadd.f32 %v1468, %v1538
        %1540 = vdwg.mxu0
        %v1541 = vld [vmem:[%s4 + $0x380] sm:$0xff]
        %v1542 = vld [vmem:[%s4 + $0x388] sm:$0xff]
        %v1543 = vld [vmem:[%s4 + $0x390] sm:$0xff]
        %v1544 = vld [vmem:[%s4 + $0x398] sm:$0xff]
        %v1545 = vld [vmem:[%s4 + $0x3a0] sm:$0xff]
        %v1546 = vld [vmem:[%s4 + $0x3a8] sm:$0xff]
        %v1547 = vld [vmem:[%s4 + $0x3b0] sm:$0xff]
        %v1548 = vld [vmem:[%s4 + $0x3b8] sm:$0xff]
        %v1549 = vld [vmem:[%s4 + $0x3c0] sm:$0xff]
        %v1550 = vld [vmem:[%s4 + $0x3c8] sm:$0xff]
        %v1551 = vld [vmem:[%s4 + $0x3d0] sm:$0xff]
        %v1552 = vld [vmem:[%s4 + $0x3d8] sm:$0xff]
        %v1553 = vld [vmem:[%s4 + $0x3e0] sm:$0xff]
        %v1554 = vld [vmem:[%s4 + $0x3e8] sm:$0xff]
        %v1555 = vld [vmem:[%s4 + $0x3f0] sm:$0xff]
        %v1556 = vld [vmem:[%s4 + $0x3f8] sm:$0xff]
        %v1557 = vld [vmem:[%s4 + $0x400] sm:$0xff]
        %v1558 = vld [vmem:[%s4 + $0x408] sm:$0xff]
        %v1559 = vld [vmem:[%s4 + $0x410] sm:$0xff]
        %v1560 = vld [vmem:[%s4 + $0x418] sm:$0xff]
        %v1561 = vld [vmem:[%s4 + $0x420] sm:$0xff]
        %v1562 = vld [vmem:[%s4 + $0x428] sm:$0xff]
        %v1563 = vld [vmem:[%s4 + $0x430] sm:$0xff]
        %v1564 = vld [vmem:[%s4 + $0x438] sm:$0xff]
        %v1565 = vld [vmem:[%s4 + $0x440] sm:$0xff]
        %v1566 = vld [vmem:[%s4 + $0x448] sm:$0xff]
        %v1567 = vld [vmem:[%s4 + $0x450] sm:$0xff]
        %v1568 = vld [vmem:[%s4 + $0x458] sm:$0xff]
        %v1569 = vld [vmem:[%s4 + $0x460] sm:$0xff]
        %v1570 = vld [vmem:[%s4 + $0x468] sm:$0xff]
        %v1571 = vld [vmem:[%s4 + $0x470] sm:$0xff]
        %v1572 = vld [vmem:[%s4 + $0x478] sm:$0xff]
        %v1573 = vld [vmem:[%s4 + $0x480] sm:$0xff]
        %v1574 = vld [vmem:[%s4 + $0x488] sm:$0xff]
        %v1575 = vld [vmem:[%s4 + $0x490] sm:$0xff]
        %v1576 = vld [vmem:[%s4 + $0x498] sm:$0xff]
        %v1577 = vld [vmem:[%s4 + $0x4a0] sm:$0xff]
        %v1578 = vld [vmem:[%s4 + $0x4a8] sm:$0xff]
        %v1579 = vld [vmem:[%s4 + $0x4b0] sm:$0xff]
        %v1580 = vld [vmem:[%s4 + $0x4b8] sm:$0xff]
        %v1581 = vld [vmem:[%s4 + $0x4c0] sm:$0xff]
        %v1582 = vld [vmem:[%s4 + $0x4c8] sm:$0xff]
        %v1583 = vld [vmem:[%s4 + $0x4d0] sm:$0xff]
        %v1584 = vld [vmem:[%s4 + $0x4d8] sm:$0xff]
        %v1585 = vld [vmem:[%s4 + $0x4e0] sm:$0xff]
        %v1586 = vld [vmem:[%s4 + $0x4e8] sm:$0xff]
        %v1587 = vld [vmem:[%s4 + $0x4f0] sm:$0xff]
        %v1588 = vld [vmem:[%s4 + $0x4f8] sm:$0xff]
        %v1589 = vld [vmem:[%s4 + $0x500] sm:$0xff]
        %v1590 = vld [vmem:[%s4 + $0x508] sm:$0xff]
        %v1591 = vld [vmem:[%s4 + $0x510] sm:$0xff]
        %v1592 = vld [vmem:[%s4 + $0x518] sm:$0xff]
        %v1593 = vld [vmem:[%s4 + $0x520] sm:$0xff]
        %v1594 = vld [vmem:[%s4 + $0x528] sm:$0xff]
        %v1595 = vld [vmem:[%s4 + $0x530] sm:$0xff]
        %v1596 = vld [vmem:[%s4 + $0x538] sm:$0xff]
        %v1597 = vld [vmem:[%s5 + $0x380] sm:$0xff]
        %v1598 = vld [vmem:[%s5 + $0x388] sm:$0xff]
        %v1599 = vld [vmem:[%s5 + $0x390] sm:$0xff]
        %v1600 = vld [vmem:[%s5 + $0x398] sm:$0xff]
        %v1601 = vld [vmem:[%s5 + $0x3a0] sm:$0xff]
        %v1602 = vld [vmem:[%s5 + $0x3a8] sm:$0xff]
        %v1603 = vld [vmem:[%s5 + $0x3b0] sm:$0xff]
        %v1604 = vld [vmem:[%s5 + $0x3b8] sm:$0xff]
        %v1605 = vld [vmem:[%s5 + $0x3c0] sm:$0xff]
        %v1606 = vld [vmem:[%s5 + $0x3c8] sm:$0xff]
        %v1607 = vld [vmem:[%s5 + $0x3d0] sm:$0xff]
        %v1608 = vld [vmem:[%s5 + $0x3d8] sm:$0xff]
        %v1609 = vld [vmem:[%s5 + $0x3e0] sm:$0xff]
        %v1610 = vld [vmem:[%s5 + $0x3e8] sm:$0xff]
        %v1611 = vld [vmem:[%s5 + $0x3f0] sm:$0xff]
        %v1612 = vld [vmem:[%s5 + $0x3f8] sm:$0xff]
        %v1613 = vld [vmem:[%s5 + $0x400] sm:$0xff]
        %v1614 = vld [vmem:[%s5 + $0x408] sm:$0xff]
        %v1615 = vld [vmem:[%s5 + $0x410] sm:$0xff]
        %v1616 = vld [vmem:[%s5 + $0x418] sm:$0xff]
        %v1617 = vld [vmem:[%s5 + $0x420] sm:$0xff]
        %v1618 = vld [vmem:[%s5 + $0x428] sm:$0xff]
        %v1619 = vld [vmem:[%s5 + $0x430] sm:$0xff]
        %v1620 = vld [vmem:[%s5 + $0x438] sm:$0xff]
        %v1621 = vld [vmem:[%s5 + $0x440] sm:$0xff]
        %v1622 = vld [vmem:[%s5 + $0x448] sm:$0xff]
        %v1623 = vld [vmem:[%s5 + $0x450] sm:$0xff]
        %v1624 = vld [vmem:[%s5 + $0x458] sm:$0xff]
        %v1625 = vld [vmem:[%s5 + $0x460] sm:$0xff]
        %v1626 = vld [vmem:[%s5 + $0x468] sm:$0xff]
        %v1627 = vld [vmem:[%s5 + $0x470] sm:$0xff]
        %v1628 = vld [vmem:[%s5 + $0x478] sm:$0xff]
        %v1629 = vld [vmem:[%s5 + $0x480] sm:$0xff]
        %v1630 = vld [vmem:[%s5 + $0x488] sm:$0xff]
        %v1631 = vld [vmem:[%s5 + $0x490] sm:$0xff]
        %v1632 = vld [vmem:[%s5 + $0x498] sm:$0xff]
        %v1633 = vld [vmem:[%s5 + $0x4a0] sm:$0xff]
        %v1634 = vld [vmem:[%s5 + $0x4a8] sm:$0xff]
        %v1635 = vld [vmem:[%s5 + $0x4b0] sm:$0xff]
        %v1636 = vld [vmem:[%s5 + $0x4b8] sm:$0xff]
        %v1637 = vld [vmem:[%s5 + $0x4c0] sm:$0xff]
        %v1638 = vld [vmem:[%s5 + $0x4c8] sm:$0xff]
        %v1639 = vld [vmem:[%s5 + $0x4d0] sm:$0xff]
        %v1640 = vld [vmem:[%s5 + $0x4d8] sm:$0xff]
        %v1641 = vld [vmem:[%s5 + $0x4e0] sm:$0xff]
        %v1642 = vld [vmem:[%s5 + $0x4e8] sm:$0xff]
        %v1643 = vld [vmem:[%s5 + $0x4f0] sm:$0xff]
        %v1644 = vld [vmem:[%s5 + $0x4f8] sm:$0xff]
        %v1645 = vld [vmem:[%s5 + $0x500] sm:$0xff]
        %v1646 = vld [vmem:[%s5 + $0x508] sm:$0xff]
        %v1647 = vld [vmem:[%s5 + $0x510] sm:$0xff]
        %v1648 = vld [vmem:[%s5 + $0x518] sm:$0xff]
        %v1649 = vld [vmem:[%s5 + $0x520] sm:$0xff]
        %v1650 = vld [vmem:[%s5 + $0x528] sm:$0xff]
        %v1651 = vld [vmem:[%s5 + $0x530] sm:$0xff]
        %v1652 = vld [vmem:[%s5 + $0x538] sm:$0xff]
        %1653 = vmatprep.subr.mxu0 %v1542
        %1654 = vmatpush1.msra.mxu0 %v1541
        %1655 = vmatprep.subr.mxu0 %v1544
        %1656 = vmatpush1.msra.mxu0 %v1543
        %1657 = vmatprep.subr.mxu0 %v1546
        %1658 = vmatpush1.msra.mxu0 %v1545
        %1659 = vmatprep.subr.mxu0 %v1548
        %1660 = vmatpush1.msra.mxu0 %v1547
        %1661 = vmatprep.subr.mxu0 %v1550
        %1662 = vmatpush1.msra.mxu0 %v1549
        %1663 = vmatprep.subr.mxu0 %v1552
        %1664 = vmatpush1.msra.mxu0 %v1551
        %1665 = vmatprep.subr.mxu0 %v1554
        %1666 = vmatpush1.msra.mxu0 %v1553
        %1667 = vmatprep.subr.mxu0 %v1556
        %1668 = vmatpush1.msra.mxu0 %v1555
        %1669 = vmatprep.subr.mxu0 %v1558
        %1670 = vmatpush1.msra.mxu0 %v1557
        %1671 = vmatprep.subr.mxu0 %v1560
        %1672 = vmatpush1.msra.mxu0 %v1559
        %1673 = vmatprep.subr.mxu0 %v1562
        %1674 = vmatpush1.msra.mxu0 %v1561
        %1675 = vmatprep.subr.mxu0 %v1564
        %1676 = vmatpush1.msra.mxu0 %v1563
        %1677 = vmatprep.subr.mxu0 %v1566
        %1678 = vmatpush1.msra.mxu0 %v1565
        %1679 = vmatprep.subr.mxu0 %v1568
        %1680 = vmatpush1.msra.mxu0 %v1567
        %1681 = vmatprep.subr.mxu0 %v1570
        %1682 = vmatpush1.msra.mxu0 %v1569
        %1683 = vmatprep.subr.mxu0 %v1572
        %1684 = vmatpush1.msra.mxu0 %v1571
        %1685 = vmatprep.subr.mxu0 %v1574
        %1686 = vmatpush1.msra.mxu0 %v1573
        %1687 = vmatprep.subr.mxu0 %v1576
        %1688 = vmatpush1.msra.mxu0 %v1575
        %1689 = vmatprep.subr.mxu0 %v1578
        %1690 = vmatpush1.msra.mxu0 %v1577
        %1691 = vmatprep.subr.mxu0 %v1580
        %1692 = vmatpush1.msra.mxu0 %v1579
        %1693 = vmatprep.subr.mxu0 %v1582
        %1694 = vmatpush1.msra.mxu0 %v1581
        %1695 = vmatprep.subr.mxu0 %v1584
        %1696 = vmatpush1.msra.mxu0 %v1583
        %1697 = vmatprep.subr.mxu0 %v1586
        %1698 = vmatpush1.msra.mxu0 %v1585
        %1699 = vmatprep.subr.mxu0 %v1588
        %1700 = vmatpush1.msra.mxu0 %v1587
        %1701 = vmatprep.subr.mxu0 %v1590
        %1702 = vmatpush1.msra.mxu0 %v1589
        %1703 = vmatprep.subr.mxu0 %v1592
        %1704 = vmatpush1.msra.mxu0 %v1591
        %1705 = vmatprep.subr.mxu0 %v1594
        %1706 = vmatpush1.msra.mxu0 %v1593
        %1707 = vmatprep.subr.mxu0 %v1596
        %1708 = vmatpush1.msra.mxu0 %v1595
        %1709 = vmatprep.subr.mxu0 0.0
        %1710 = vmatpush1.msra.mxu0 0.0
        %1711 = vmatprep.subr.mxu0 0.0
        %1712 = vmatpush1.msra.mxu0 0.0
        %1713 = vmatprep.subr.mxu0 0.0
        %1714 = vmatpush1.msra.mxu0 0.0
        %1715 = vmatprep.subr.mxu0 0.0
        %1716 = vmatpush1.msra.mxu0 0.0
        %1717 = vmatprep.mubr.f32.mxu0 %v1255
        %1718 = vmatmul.mubr.f32.gmra.mrb[0].mxu0 %v1252
        %v1719 = vpop.f32.mrb[0].mxu0
        %v1720 = vadd.f32 0.0, %v1719
        %v1721 = vpop.f32.mrb[0].mxu0
        %v1722 = vadd.f32 0.0, %v1721
        %1723 = vdwg.mxu0
        %v1724 = vadd.f32 %v1104, %v1720
        %v1725 = vadd.f32 %v1106, %v1722
        %1726 = vmatprep.subr.mxu0 %v1598
        %1727 = vmatpush1.msra.mxu0 %v1597
        %1728 = vmatprep.subr.mxu0 %v1600
        %1729 = vmatpush1.msra.mxu0 %v1599
        %1730 = vmatprep.subr.mxu0 %v1602
        %1731 = vmatpush1.msra.mxu0 %v1601
        %1732 = vmatprep.subr.mxu0 %v1604
        %1733 = vmatpush1.msra.mxu0 %v1603
        %1734 = vmatprep.subr.mxu0 %v1606
        %1735 = vmatpush1.msra.mxu0 %v1605
        %1736 = vmatprep.subr.mxu0 %v1608
        %1737 = vmatpush1.msra.mxu0 %v1607
        %1738 = vmatprep.subr.mxu0 %v1610
        %1739 = vmatpush1.msra.mxu0 %v1609
        %1740 = vmatprep.subr.mxu0 %v1612
        %1741 = vmatpush1.msra.mxu0 %v1611
        %1742 = vmatprep.subr.mxu0 %v1614
        %1743 = vmatpush1.msra.mxu0 %v1613
        %1744 = vmatprep.subr.mxu0 %v1616
        %1745 = vmatpush1.msra.mxu0 %v1615
        %1746 = vmatprep.subr.mxu0 %v1618
        %1747 = vmatpush1.msra.mxu0 %v1617
        %1748 = vmatprep.subr.mxu0 %v1620
        %1749 = vmatpush1.msra.mxu0 %v1619
        %1750 = vmatprep.subr.mxu0 %v1622
        %1751 = vmatpush1.msra.mxu0 %v1621
        %1752 = vmatprep.subr.mxu0 %v1624
        %1753 = vmatpush1.msra.mxu0 %v1623
        %1754 = vmatprep.subr.mxu0 %v1626
        %1755 = vmatpush1.msra.mxu0 %v1625
        %1756 = vmatprep.subr.mxu0 %v1628
        %1757 = vmatpush1.msra.mxu0 %v1627
        %1758 = vmatprep.subr.mxu0 %v1630
        %1759 = vmatpush1.msra.mxu0 %v1629
        %1760 = vmatprep.subr.mxu0 %v1632
        %1761 = vmatpush1.msra.mxu0 %v1631
        %1762 = vmatprep.subr.mxu0 %v1634
        %1763 = vmatpush1.msra.mxu0 %v1633
        %1764 = vmatprep.subr.mxu0 %v1636
        %1765 = vmatpush1.msra.mxu0 %v1635
        %1766 = vmatprep.subr.mxu0 %v1638
        %1767 = vmatpush1.msra.mxu0 %v1637
        %1768 = vmatprep.subr.mxu0 %v1640
        %1769 = vmatpush1.msra.mxu0 %v1639
        %1770 = vmatprep.subr.mxu0 %v1642
        %1771 = vmatpush1.msra.mxu0 %v1641
        %1772 = vmatprep.subr.mxu0 %v1644
        %1773 = vmatpush1.msra.mxu0 %v1643
        %1774 = vmatprep.subr.mxu0 %v1646
        %1775 = vmatpush1.msra.mxu0 %v1645
        %1776 = vmatprep.subr.mxu0 %v1648
        %1777 = vmatpush1.msra.mxu0 %v1647
        %1778 = vmatprep.subr.mxu0 %v1650
        %1779 = vmatpush1.msra.mxu0 %v1649
        %1780 = vmatprep.subr.mxu0 %v1652
        %1781 = vmatpush1.msra.mxu0 %v1651
        %1782 = vmatprep.subr.mxu0 0.0
        %1783 = vmatpush1.msra.mxu0 0.0
        %1784 = vmatprep.subr.mxu0 0.0
        %1785 = vmatpush1.msra.mxu0 0.0
        %1786 = vmatprep.subr.mxu0 0.0
        %1787 = vmatpush1.msra.mxu0 0.0
        %1788 = vmatprep.subr.mxu0 0.0
        %1789 = vmatpush1.msra.mxu0 0.0
        %1790 = vmatprep.mubr.f32.mxu0 %v1255
        %1791 = vmatmul.mubr.f32.gmra.mrb[0].mxu0 %v1252
        %v1792 = vpop.f32.mrb[0].mxu0
        %v1793 = vadd.f32 0.0, %v1792
        %v1794 = vpop.f32.mrb[0].mxu0
        %v1795 = vadd.f32 0.0, %v1794
        %1796 = vdwg.mxu0
        %v1797 = vadd.f32 %v1246, %v1793
        %v1798 = vadd.f32 %v1248, %v1795
        %v1801 = vrot.slane %v726, 1
        %v1802 = vrot.slane %v727, 1
        %v1804 = vsel %vm690, %v1802, 0
        %1806 = vmatprep.subr.mxu0 %v1542
        %1807 = vmatpush1.msra.mxu0 %v1541
        %1808 = vmatprep.subr.mxu0 %v1544
        %1809 = vmatpush1.msra.mxu0 %v1543
        %1810 = vmatprep.subr.mxu0 %v1546
        %1811 = vmatpush1.msra.mxu0 %v1545
        %1812 = vmatprep.subr.mxu0 %v1548
        %1813 = vmatpush1.msra.mxu0 %v1547
        %1814 = vmatprep.subr.mxu0 %v1550
        %1815 = vmatpush1.msra.mxu0 %v1549
        %1816 = vmatprep.subr.mxu0 %v1552
        %1817 = vmatpush1.msra.mxu0 %v1551
        %1818 = vmatprep.subr.mxu0 %v1554
        %1819 = vmatpush1.msra.mxu0 %v1553
        %1820 = vmatprep.subr.mxu0 %v1556
        %1821 = vmatpush1.msra.mxu0 %v1555
        %1822 = vmatprep.subr.mxu0 %v1558
        %1823 = vmatpush1.msra.mxu0 %v1557
        %1824 = vmatprep.subr.mxu0 %v1560
        %1825 = vmatpush1.msra.mxu0 %v1559
        %1826 = vmatprep.subr.mxu0 %v1562
        %1827 = vmatpush1.msra.mxu0 %v1561
        %1828 = vmatprep.subr.mxu0 %v1564
        %1829 = vmatpush1.msra.mxu0 %v1563
        %1830 = vmatprep.subr.mxu0 %v1566
        %1831 = vmatpush1.msra.mxu0 %v1565
        %1832 = vmatprep.subr.mxu0 %v1568
        %1833 = vmatpush1.msra.mxu0 %v1567
        %1834 = vmatprep.subr.mxu0 %v1570
        %1835 = vmatpush1.msra.mxu0 %v1569
        %1836 = vmatprep.subr.mxu0 %v1572
        %1837 = vmatpush1.msra.mxu0 %v1571
        %1838 = vmatprep.subr.mxu0 %v1574
        %1839 = vmatpush1.msra.mxu0 %v1573
        %1840 = vmatprep.subr.mxu0 %v1576
        %1841 = vmatpush1.msra.mxu0 %v1575
        %1842 = vmatprep.subr.mxu0 %v1578
        %1843 = vmatpush1.msra.mxu0 %v1577
        %1844 = vmatprep.subr.mxu0 %v1580
        %1845 = vmatpush1.msra.mxu0 %v1579
        %1846 = vmatprep.subr.mxu0 %v1582
        %1847 = vmatpush1.msra.mxu0 %v1581
        %1848 = vmatprep.subr.mxu0 %v1584
        %1849 = vmatpush1.msra.mxu0 %v1583
        %1850 = vmatprep.subr.mxu0 %v1586
        %1851 = vmatpush1.msra.mxu0 %v1585
        %1852 = vmatprep.subr.mxu0 %v1588
        %1853 = vmatpush1.msra.mxu0 %v1587
        %1854 = vmatprep.subr.mxu0 %v1590
        %1855 = vmatpush1.msra.mxu0 %v1589
        %1856 = vmatprep.subr.mxu0 %v1592
        %1857 = vmatpush1.msra.mxu0 %v1591
        %1858 = vmatprep.subr.mxu0 %v1594
        %1859 = vmatpush1.msra.mxu0 %v1593
        %1860 = vmatprep.subr.mxu0 %v1596
        %1861 = vmatpush1.msra.mxu0 %v1595
        %1862 = vmatprep.subr.mxu0 0.0
        %1863 = vmatpush1.msra.mxu0 0.0
        %1864 = vmatprep.subr.mxu0 0.0
        %1865 = vmatpush1.msra.mxu0 0.0
        %1866 = vmatprep.subr.mxu0 0.0
        %1867 = vmatpush1.msra.mxu0 0.0
        %1868 = vmatprep.subr.mxu0 0.0
        %1869 = vmatpush1.msra.mxu0 0.0
        %1870 = vmatprep.mubr.f32.mxu0 %v1804
        %1871 = vmatmul.mubr.f32.gmra.mrb[0].mxu0 %v1801
        %v1872 = vpop.f32.mrb[0].mxu0
        %v1873 = vadd.f32 0.0, %v1872
        %v1874 = vpop.f32.mrb[0].mxu0
        %v1875 = vadd.f32 0.0, %v1874
        %1876 = vdwg.mxu0
        %v1877 = vadd.f32 %v1395, %v1873
        %v1878 = vadd.f32 %v1397, %v1875
        %1879 = vmatprep.subr.mxu0 %v1598
        %1880 = vmatpush1.msra.mxu0 %v1597
        %1881 = vmatprep.subr.mxu0 %v1600
        %1882 = vmatpush1.msra.mxu0 %v1599
        %1883 = vmatprep.subr.mxu0 %v1602
        %1884 = vmatpush1.msra.mxu0 %v1601
        %1885 = vmatprep.subr.mxu0 %v1604
        %1886 = vmatpush1.msra.mxu0 %v1603
        %1887 = vmatprep.subr.mxu0 %v1606
        %1888 = vmatpush1.msra.mxu0 %v1605
        %1889 = vmatprep.subr.mxu0 %v1608
        %1890 = vmatpush1.msra.mxu0 %v1607
        %1891 = vmatprep.subr.mxu0 %v1610
        %1892 = vmatpush1.msra.mxu0 %v1609
        %1893 = vmatprep.subr.mxu0 %v1612
        %1894 = vmatpush1.msra.mxu0 %v1611
        %1895 = vmatprep.subr.mxu0 %v1614
        %1896 = vmatpush1.msra.mxu0 %v1613
        %1897 = vmatprep.subr.mxu0 %v1616
        %1898 = vmatpush1.msra.mxu0 %v1615
        %1899 = vmatprep.subr.mxu0 %v1618
        %1900 = vmatpush1.msra.mxu0 %v1617
        %1901 = vmatprep.subr.mxu0 %v1620
        %1902 = vmatpush1.msra.mxu0 %v1619
        %1903 = vmatprep.subr.mxu0 %v1622
        %1904 = vmatpush1.msra.mxu0 %v1621
        %1905 = vmatprep.subr.mxu0 %v1624
        %1906 = vmatpush1.msra.mxu0 %v1623
        %1907 = vmatprep.subr.mxu0 %v1626
        %1908 = vmatpush1.msra.mxu0 %v1625
        %1909 = vmatprep.subr.mxu0 %v1628
        %1910 = vmatpush1.msra.mxu0 %v1627
        %1911 = vmatprep.subr.mxu0 %v1630
        %1912 = vmatpush1.msra.mxu0 %v1629
        %1913 = vmatprep.subr.mxu0 %v1632
        %1914 = vmatpush1.msra.mxu0 %v1631
        %1915 = vmatprep.subr.mxu0 %v1634
        %1916 = vmatpush1.msra.mxu0 %v1633
        %1917 = vmatprep.subr.mxu0 %v1636
        %1918 = vmatpush1.msra.mxu0 %v1635
        %1919 = vmatprep.subr.mxu0 %v1638
        %1920 = vmatpush1.msra.mxu0 %v1637
        %1921 = vmatprep.subr.mxu0 %v1640
        %1922 = vmatpush1.msra.mxu0 %v1639
        %1923 = vmatprep.subr.mxu0 %v1642
        %1924 = vmatpush1.msra.mxu0 %v1641
        %1925 = vmatprep.subr.mxu0 %v1644
        %1926 = vmatpush1.msra.mxu0 %v1643
        %1927 = vmatprep.subr.mxu0 %v1646
        %1928 = vmatpush1.msra.mxu0 %v1645
        %1929 = vmatprep.subr.mxu0 %v1648
        %1930 = vmatpush1.msra.mxu0 %v1647
        %1931 = vmatprep.subr.mxu0 %v1650
        %1932 = vmatpush1.msra.mxu0 %v1649
        %1933 = vmatprep.subr.mxu0 %v1652
        %1934 = vmatpush1.msra.mxu0 %v1651
        %1935 = vmatprep.subr.mxu0 0.0
        %1936 = vmatpush1.msra.mxu0 0.0
        %1937 = vmatprep.subr.mxu0 0.0
        %1938 = vmatpush1.msra.mxu0 0.0
        %1939 = vmatprep.subr.mxu0 0.0
        %1940 = vmatpush1.msra.mxu0 0.0
        %1941 = vmatprep.subr.mxu0 0.0
        %1942 = vmatpush1.msra.mxu0 0.0
        %1943 = vmatprep.mubr.f32.mxu0 %v1804
        %1944 = vmatmul.mubr.f32.gmra.mrb[0].mxu0 %v1801
        %v1945 = vpop.f32.mrb[0].mxu0
        %v1946 = vadd.f32 0.0, %v1945
        %v1947 = vpop.f32.mrb[0].mxu0
        %v1948 = vadd.f32 0.0, %v1947
        %1949 = vdwg.mxu0
        %v1950 = vadd.f32 %v1537, %v1946
        %v1951 = vadd.f32 %v1539, %v1948
        %v1952 = vld [vmem:[%s4 + $0x540] sm:$0xff]
        %v1953 = vld [vmem:[%s4 + $0x548] sm:$0xff]
        %v1954 = vld [vmem:[%s4 + $0x550] sm:$0xff]
        %v1955 = vld [vmem:[%s4 + $0x558] sm:$0xff]
        %v1956 = vld [vmem:[%s4 + $0x560] sm:$0xff]
        %v1957 = vld [vmem:[%s4 + $0x568] sm:$0xff]
        %v1958 = vld [vmem:[%s4 + $0x570] sm:$0xff]
        %v1959 = vld [vmem:[%s4 + $0x578] sm:$0xff]
        %v1960 = vld [vmem:[%s4 + $0x580] sm:$0xff]
        %v1961 = vld [vmem:[%s4 + $0x588] sm:$0xff]
        %v1962 = vld [vmem:[%s4 + $0x590] sm:$0xff]
        %v1963 = vld [vmem:[%s4 + $0x598] sm:$0xff]
        %v1964 = vld [vmem:[%s4 + $0x5a0] sm:$0xff]
        %v1965 = vld [vmem:[%s4 + $0x5a8] sm:$0xff]
        %v1966 = vld [vmem:[%s4 + $0x5b0] sm:$0xff]
        %v1967 = vld [vmem:[%s4 + $0x5b8] sm:$0xff]
        %v1968 = vld [vmem:[%s4 + $0x5c0] sm:$0xff]
        %v1969 = vld [vmem:[%s4 + $0x5c8] sm:$0xff]
        %v1970 = vld [vmem:[%s4 + $0x5d0] sm:$0xff]
        %v1971 = vld [vmem:[%s4 + $0x5d8] sm:$0xff]
        %v1972 = vld [vmem:[%s4 + $0x5e0] sm:$0xff]
        %v1973 = vld [vmem:[%s4 + $0x5e8] sm:$0xff]
        %v1974 = vld [vmem:[%s4 + $0x5f0] sm:$0xff]
        %v1975 = vld [vmem:[%s4 + $0x5f8] sm:$0xff]
        %v1976 = vld [vmem:[%s4 + $0x600] sm:$0xff]
        %v1977 = vld [vmem:[%s4 + $0x608] sm:$0xff]
        %v1978 = vld [vmem:[%s4 + $0x610] sm:$0xff]
        %v1979 = vld [vmem:[%s4 + $0x618] sm:$0xff]
        %v1980 = vld [vmem:[%s4 + $0x620] sm:$0xff]
        %v1981 = vld [vmem:[%s4 + $0x628] sm:$0xff]
        %v1982 = vld [vmem:[%s4 + $0x630] sm:$0xff]
        %v1983 = vld [vmem:[%s4 + $0x638] sm:$0xff]
        %v1984 = vld [vmem:[%s4 + $0x640] sm:$0xff]
        %v1985 = vld [vmem:[%s4 + $0x648] sm:$0xff]
        %v1986 = vld [vmem:[%s4 + $0x650] sm:$0xff]
        %v1987 = vld [vmem:[%s4 + $0x658] sm:$0xff]
        %v1988 = vld [vmem:[%s4 + $0x660] sm:$0xff]
        %v1989 = vld [vmem:[%s4 + $0x668] sm:$0xff]
        %v1990 = vld [vmem:[%s4 + $0x670] sm:$0xff]
        %v1991 = vld [vmem:[%s4 + $0x678] sm:$0xff]
        %v1992 = vld [vmem:[%s4 + $0x680] sm:$0xff]
        %v1993 = vld [vmem:[%s4 + $0x688] sm:$0xff]
        %v1994 = vld [vmem:[%s4 + $0x690] sm:$0xff]
        %v1995 = vld [vmem:[%s4 + $0x698] sm:$0xff]
        %v1996 = vld [vmem:[%s4 + $0x6a0] sm:$0xff]
        %v1997 = vld [vmem:[%s4 + $0x6a8] sm:$0xff]
        %v1998 = vld [vmem:[%s4 + $0x6b0] sm:$0xff]
        %v1999 = vld [vmem:[%s4 + $0x6b8] sm:$0xff]
        %v2000 = vld [vmem:[%s4 + $0x6c0] sm:$0xff]
        %v2001 = vld [vmem:[%s4 + $0x6c8] sm:$0xff]
        %v2002 = vld [vmem:[%s4 + $0x6d0] sm:$0xff]
        %v2003 = vld [vmem:[%s4 + $0x6d8] sm:$0xff]
        %v2004 = vld [vmem:[%s4 + $0x6e0] sm:$0xff]
        %v2005 = vld [vmem:[%s4 + $0x6e8] sm:$0xff]
        %v2006 = vld [vmem:[%s4 + $0x6f0] sm:$0xff]
        %v2007 = vld [vmem:[%s4 + $0x6f8] sm:$0xff]
        %v2008 = vld [vmem:[%s5 + $0x540] sm:$0xff]
        %v2009 = vld [vmem:[%s5 + $0x548] sm:$0xff]
        %v2010 = vld [vmem:[%s5 + $0x550] sm:$0xff]
        %v2011 = vld [vmem:[%s5 + $0x558] sm:$0xff]
        %v2012 = vld [vmem:[%s5 + $0x560] sm:$0xff]
        %v2013 = vld [vmem:[%s5 + $0x568] sm:$0xff]
        %v2014 = vld [vmem:[%s5 + $0x570] sm:$0xff]
        %v2015 = vld [vmem:[%s5 + $0x578] sm:$0xff]
        %v2016 = vld [vmem:[%s5 + $0x580] sm:$0xff]
        %v2017 = vld [vmem:[%s5 + $0x588] sm:$0xff]
        %v2018 = vld [vmem:[%s5 + $0x590] sm:$0xff]
        %v2019 = vld [vmem:[%s5 + $0x598] sm:$0xff]
        %v2020 = vld [vmem:[%s5 + $0x5a0] sm:$0xff]
        %v2021 = vld [vmem:[%s5 + $0x5a8] sm:$0xff]
        %v2022 = vld [vmem:[%s5 + $0x5b0] sm:$0xff]
        %v2023 = vld [vmem:[%s5 + $0x5b8] sm:$0xff]
        %v2024 = vld [vmem:[%s5 + $0x5c0] sm:$0xff]
        %v2025 = vld [vmem:[%s5 + $0x5c8] sm:$0xff]
        %v2026 = vld [vmem:[%s5 + $0x5d0] sm:$0xff]
        %v2027 = vld [vmem:[%s5 + $0x5d8] sm:$0xff]
        %v2028 = vld [vmem:[%s5 + $0x5e0] sm:$0xff]
        %v2029 = vld [vmem:[%s5 + $0x5e8] sm:$0xff]
        %v2030 = vld [vmem:[%s5 + $0x5f0] sm:$0xff]
        %v2031 = vld [vmem:[%s5 + $0x5f8] sm:$0xff]
        %v2032 = vld [vmem:[%s5 + $0x600] sm:$0xff]
        %v2033 = vld [vmem:[%s5 + $0x608] sm:$0xff]
        %v2034 = vld [vmem:[%s5 + $0x610] sm:$0xff]
        %v2035 = vld [vmem:[%s5 + $0x618] sm:$0xff]
        %v2036 = vld [vmem:[%s5 + $0x620] sm:$0xff]
        %v2037 = vld [vmem:[%s5 + $0x628] sm:$0xff]
        %v2038 = vld [vmem:[%s5 + $0x630] sm:$0xff]
        %v2039 = vld [vmem:[%s5 + $0x638] sm:$0xff]
        %v2040 = vld [vmem:[%s5 + $0x640] sm:$0xff]
        %v2041 = vld [vmem:[%s5 + $0x648] sm:$0xff]
        %v2042 = vld [vmem:[%s5 + $0x650] sm:$0xff]
        %v2043 = vld [vmem:[%s5 + $0x658] sm:$0xff]
        %v2044 = vld [vmem:[%s5 + $0x660] sm:$0xff]
        %v2045 = vld [vmem:[%s5 + $0x668] sm:$0xff]
        %v2046 = vld [vmem:[%s5 + $0x670] sm:$0xff]
        %v2047 = vld [vmem:[%s5 + $0x678] sm:$0xff]
        %v2048 = vld [vmem:[%s5 + $0x680] sm:$0xff]
        %v2049 = vld [vmem:[%s5 + $0x688] sm:$0xff]
        %v2050 = vld [vmem:[%s5 + $0x690] sm:$0xff]
        %v2051 = vld [vmem:[%s5 + $0x698] sm:$0xff]
        %v2052 = vld [vmem:[%s5 + $0x6a0] sm:$0xff]
        %v2053 = vld [vmem:[%s5 + $0x6a8] sm:$0xff]
        %v2054 = vld [vmem:[%s5 + $0x6b0] sm:$0xff]
        %v2055 = vld [vmem:[%s5 + $0x6b8] sm:$0xff]
        %v2056 = vld [vmem:[%s5 + $0x6c0] sm:$0xff]
        %v2057 = vld [vmem:[%s5 + $0x6c8] sm:$0xff]
        %v2058 = vld [vmem:[%s5 + $0x6d0] sm:$0xff]
        %v2059 = vld [vmem:[%s5 + $0x6d8] sm:$0xff]
        %v2060 = vld [vmem:[%s5 + $0x6e0] sm:$0xff]
        %v2061 = vld [vmem:[%s5 + $0x6e8] sm:$0xff]
        %v2062 = vld [vmem:[%s5 + $0x6f0] sm:$0xff]
        %v2063 = vld [vmem:[%s5 + $0x6f8] sm:$0xff]
        %2064 = vmatprep.subr.mxu0 %v1953
        %2065 = vmatpush1.msra.mxu0 %v1952
        %2066 = vmatprep.subr.mxu0 %v1955
        %2067 = vmatpush1.msra.mxu0 %v1954
        %2068 = vmatprep.subr.mxu0 %v1957
        %2069 = vmatpush1.msra.mxu0 %v1956
        %2070 = vmatprep.subr.mxu0 %v1959
        %2071 = vmatpush1.msra.mxu0 %v1958
        %2072 = vmatprep.subr.mxu0 %v1961
        %2073 = vmatpush1.msra.mxu0 %v1960
        %2074 = vmatprep.subr.mxu0 %v1963
        %2075 = vmatpush1.msra.mxu0 %v1962
        %2076 = vmatprep.subr.mxu0 %v1965
        %2077 = vmatpush1.msra.mxu0 %v1964
        %2078 = vmatprep.subr.mxu0 %v1967
        %2079 = vmatpush1.msra.mxu0 %v1966
        %2080 = vmatprep.subr.mxu0 %v1969
        %2081 = vmatpush1.msra.mxu0 %v1968
        %2082 = vmatprep.subr.mxu0 %v1971
        %2083 = vmatpush1.msra.mxu0 %v1970
        %2084 = vmatprep.subr.mxu0 %v1973
        %2085 = vmatpush1.msra.mxu0 %v1972
        %2086 = vmatprep.subr.mxu0 %v1975
        %2087 = vmatpush1.msra.mxu0 %v1974
        %2088 = vmatprep.subr.mxu0 %v1977
        %2089 = vmatpush1.msra.mxu0 %v1976
        %2090 = vmatprep.subr.mxu0 %v1979
        %2091 = vmatpush1.msra.mxu0 %v1978
        %2092 = vmatprep.subr.mxu0 %v1981
        %2093 = vmatpush1.msra.mxu0 %v1980
        %2094 = vmatprep.subr.mxu0 %v1983
        %2095 = vmatpush1.msra.mxu0 %v1982
        %2096 = vmatprep.subr.mxu0 %v1985
        %2097 = vmatpush1.msra.mxu0 %v1984
        %2098 = vmatprep.subr.mxu0 %v1987
        %2099 = vmatpush1.msra.mxu0 %v1986
        %2100 = vmatprep.subr.mxu0 %v1989
        %2101 = vmatpush1.msra.mxu0 %v1988
        %2102 = vmatprep.subr.mxu0 %v1991
        %2103 = vmatpush1.msra.mxu0 %v1990
        %2104 = vmatprep.subr.mxu0 %v1993
        %2105 = vmatpush1.msra.mxu0 %v1992
        %2106 = vmatprep.subr.mxu0 %v1995
        %2107 = vmatpush1.msra.mxu0 %v1994
        %2108 = vmatprep.subr.mxu0 %v1997
        %2109 = vmatpush1.msra.mxu0 %v1996
        %2110 = vmatprep.subr.mxu0 %v1999
        %2111 = vmatpush1.msra.mxu0 %v1998
        %2112 = vmatprep.subr.mxu0 %v2001
        %2113 = vmatpush1.msra.mxu0 %v2000
        %2114 = vmatprep.subr.mxu0 %v2003
        %2115 = vmatpush1.msra.mxu0 %v2002
        %2116 = vmatprep.subr.mxu0 %v2005
        %2117 = vmatpush1.msra.mxu0 %v2004
        %2118 = vmatprep.subr.mxu0 %v2007
        %2119 = vmatpush1.msra.mxu0 %v2006
        %2120 = vmatprep.subr.mxu0 0.0
        %2121 = vmatpush1.msra.mxu0 0.0
        %2122 = vmatprep.subr.mxu0 0.0
        %2123 = vmatpush1.msra.mxu0 0.0
        %2124 = vmatprep.subr.mxu0 0.0
        %2125 = vmatpush1.msra.mxu0 0.0
        %2126 = vmatprep.subr.mxu0 0.0
        %2127 = vmatpush1.msra.mxu0 0.0
        %2128 = vmatprep.mubr.f32.mxu0 %v1804
        %2129 = vmatmul.mubr.f32.gmra.mrb[0].mxu0 %v1801
        %v2130 = vpop.f32.mrb[0].mxu0
        %v2131 = vadd.f32 0.0, %v2130
        %v2132 = vpop.f32.mrb[0].mxu0
        %v2133 = vadd.f32 0.0, %v2132
        %2134 = vdwg.mxu0
        %v2135 = vadd.f32 %v1724, %v2131
        %v2136 = vadd.f32 %v1725, %v2133
        %2137 = vmatprep.subr.mxu0 %v2009
        %2138 = vmatpush1.msra.mxu0 %v2008
        %2139 = vmatprep.subr.mxu0 %v2011
        %2140 = vmatpush1.msra.mxu0 %v2010
        %2141 = vmatprep.subr.mxu0 %v2013
        %2142 = vmatpush1.msra.mxu0 %v2012
        %2143 = vmatprep.subr.mxu0 %v2015
        %2144 = vmatpush1.msra.mxu0 %v2014
        %2145 = vmatprep.subr.mxu0 %v2017
        %2146 = vmatpush1.msra.mxu0 %v2016
        %2147 = vmatprep.subr.mxu0 %v2019
        %2148 = vmatpush1.msra.mxu0 %v2018
        %2149 = vmatprep.subr.mxu0 %v2021
        %2150 = vmatpush1.msra.mxu0 %v2020
        %2151 = vmatprep.subr.mxu0 %v2023
        %2152 = vmatpush1.msra.mxu0 %v2022
        %2153 = vmatprep.subr.mxu0 %v2025
        %2154 = vmatpush1.msra.mxu0 %v2024
        %2155 = vmatprep.subr.mxu0 %v2027
        %2156 = vmatpush1.msra.mxu0 %v2026
        %2157 = vmatprep.subr.mxu0 %v2029
        %2158 = vmatpush1.msra.mxu0 %v2028
        %2159 = vmatprep.subr.mxu0 %v2031
        %2160 = vmatpush1.msra.mxu0 %v2030
        %2161 = vmatprep.subr.mxu0 %v2033
        %2162 = vmatpush1.msra.mxu0 %v2032
        %2163 = vmatprep.subr.mxu0 %v2035
        %2164 = vmatpush1.msra.mxu0 %v2034
        %2165 = vmatprep.subr.mxu0 %v2037
        %2166 = vmatpush1.msra.mxu0 %v2036
        %2167 = vmatprep.subr.mxu0 %v2039
        %2168 = vmatpush1.msra.mxu0 %v2038
        %2169 = vmatprep.subr.mxu0 %v2041
        %2170 = vmatpush1.msra.mxu0 %v2040
        %2171 = vmatprep.subr.mxu0 %v2043
        %2172 = vmatpush1.msra.mxu0 %v2042
        %2173 = vmatprep.subr.mxu0 %v2045
        %2174 = vmatpush1.msra.mxu0 %v2044
        %2175 = vmatprep.subr.mxu0 %v2047
        %2176 = vmatpush1.msra.mxu0 %v2046
        %2177 = vmatprep.subr.mxu0 %v2049
        %2178 = vmatpush1.msra.mxu0 %v2048
        %2179 = vmatprep.subr.mxu0 %v2051
        %2180 = vmatpush1.msra.mxu0 %v2050
        %2181 = vmatprep.subr.mxu0 %v2053
        %2182 = vmatpush1.msra.mxu0 %v2052
        %2183 = vmatprep.subr.mxu0 %v2055
        %2184 = vmatpush1.msra.mxu0 %v2054
        %2185 = vmatprep.subr.mxu0 %v2057
        %2186 = vmatpush1.msra.mxu0 %v2056
        %2187 = vmatprep.subr.mxu0 %v2059
        %2188 = vmatpush1.msra.mxu0 %v2058
        %2189 = vmatprep.subr.mxu0 %v2061
        %2190 = vmatpush1.msra.mxu0 %v2060
        %2191 = vmatprep.subr.mxu0 %v2063
        %2192 = vmatpush1.msra.mxu0 %v2062
        %2193 = vmatprep.subr.mxu0 0.0
        %2194 = vmatpush1.msra.mxu0 0.0
        %2195 = vmatprep.subr.mxu0 0.0
        %2196 = vmatpush1.msra.mxu0 0.0
        %2197 = vmatprep.subr.mxu0 0.0
        %2198 = vmatpush1.msra.mxu0 0.0
        %2199 = vmatprep.subr.mxu0 0.0
        %2200 = vmatpush1.msra.mxu0 0.0
        %2201 = vmatprep.mubr.f32.mxu0 %v1804
        %2202 = vmatmul.mubr.f32.gmra.mrb[0].mxu0 %v1801
        %v2203 = vpop.f32.mrb[0].mxu0
        %v2204 = vadd.f32 0.0, %v2203
        %v2205 = vpop.f32.mrb[0].mxu0
        %v2206 = vadd.f32 0.0, %v2205
        %2207 = vdwg.mxu0
        %v2208 = vadd.f32 %v1797, %v2204
        %v2209 = vadd.f32 %v1798, %v2206
        %vm2214 = vcmask 1045504
        %v2215 = vrot.slane %v728, 2
        %v2216 = vrot.slane %v730, 2
        %v2217 = vsel %vm2214, %v2215, %v2216
        %v2218 = vrot.slane %v729, 2
        %v2219 = vrot.slane %v731, 2
        %v2220 = vsel %vm2214, %v2218, %v2219
        %v2222 = vsel %vm690, %v2220, 0
        %2224 = vmatprep.subr.mxu0 %v1953
        %2225 = vmatpush1.msra.mxu0 %v1952
        %2226 = vmatprep.subr.mxu0 %v1955
        %2227 = vmatpush1.msra.mxu0 %v1954
        %2228 = vmatprep.subr.mxu0 %v1957
        %2229 = vmatpush1.msra.mxu0 %v1956
        %2230 = vmatprep.subr.mxu0 %v1959
        %2231 = vmatpush1.msra.mxu0 %v1958
        %2232 = vmatprep.subr.mxu0 %v1961
        %2233 = vmatpush1.msra.mxu0 %v1960
        %2234 = vmatprep.subr.mxu0 %v1963
        %2235 = vmatpush1.msra.mxu0 %v1962
        %2236 = vmatprep.subr.mxu0 %v1965
        %2237 = vmatpush1.msra.mxu0 %v1964
        %2238 = vmatprep.subr.mxu0 %v1967
        %2239 = vmatpush1.msra.mxu0 %v1966
        %2240 = vmatprep.subr.mxu0 %v1969
        %2241 = vmatpush1.msra.mxu0 %v1968
        %2242 = vmatprep.subr.mxu0 %v1971
        %2243 = vmatpush1.msra.mxu0 %v1970
        %2244 = vmatprep.subr.mxu0 %v1973
        %2245 = vmatpush1.msra.mxu0 %v1972
        %2246 = vmatprep.subr.mxu0 %v1975
        %2247 = vmatpush1.msra.mxu0 %v1974
        %2248 = vmatprep.subr.mxu0 %v1977
        %2249 = vmatpush1.msra.mxu0 %v1976
        %2250 = vmatprep.subr.mxu0 %v1979
        %2251 = vmatpush1.msra.mxu0 %v1978
        %2252 = vmatprep.subr.mxu0 %v1981
        %2253 = vmatpush1.msra.mxu0 %v1980
        %2254 = vmatprep.subr.mxu0 %v1983
        %2255 = vmatpush1.msra.mxu0 %v1982
        %2256 = vmatprep.subr.mxu0 %v1985
        %2257 = vmatpush1.msra.mxu0 %v1984
        %2258 = vmatprep.subr.mxu0 %v1987
        %2259 = vmatpush1.msra.mxu0 %v1986
        %2260 = vmatprep.subr.mxu0 %v1989
        %2261 = vmatpush1.msra.mxu0 %v1988
        %2262 = vmatprep.subr.mxu0 %v1991
        %2263 = vmatpush1.msra.mxu0 %v1990
        %2264 = vmatprep.subr.mxu0 %v1993
        %2265 = vmatpush1.msra.mxu0 %v1992
        %2266 = vmatprep.subr.mxu0 %v1995
        %2267 = vmatpush1.msra.mxu0 %v1994
        %2268 = vmatprep.subr.mxu0 %v1997
        %2269 = vmatpush1.msra.mxu0 %v1996
        %2270 = vmatprep.subr.mxu0 %v1999
        %2271 = vmatpush1.msra.mxu0 %v1998
        %2272 = vmatprep.subr.mxu0 %v2001
        %2273 = vmatpush1.msra.mxu0 %v2000
        %2274 = vmatprep.subr.mxu0 %v2003
        %2275 = vmatpush1.msra.mxu0 %v2002
        %2276 = vmatprep.subr.mxu0 %v2005
        %2277 = vmatpush1.msra.mxu0 %v2004
        %2278 = vmatprep.subr.mxu0 %v2007
        %2279 = vmatpush1.msra.mxu0 %v2006
        %2280 = vmatprep.subr.mxu0 0.0
        %2281 = vmatpush1.msra.mxu0 0.0
        %2282 = vmatprep.subr.mxu0 0.0
        %2283 = vmatpush1.msra.mxu0 0.0
        %2284 = vmatprep.subr.mxu0 0.0
        %2285 = vmatpush1.msra.mxu0 0.0
        %2286 = vmatprep.subr.mxu0 0.0
        %2287 = vmatpush1.msra.mxu0 0.0
        %2288 = vmatprep.mubr.f32.mxu0 %v2222
        %2289 = vmatmul.mubr.f32.gmra.mrb[0].mxu0 %v2217
        %v2290 = vpop.f32.mrb[0].mxu0
        %v2291 = vadd.f32 0.0, %v2290
        %v2292 = vpop.f32.mrb[0].mxu0
        %v2293 = vadd.f32 0.0, %v2292
        %2294 = vdwg.mxu0
        %v2295 = vadd.f32 %v1877, %v2291
        %v2296 = vadd.f32 %v1878, %v2293
        %2297 = vmatprep.subr.mxu0 %v2009
        %2298 = vmatpush1.msra.mxu0 %v2008
        %2299 = vmatprep.subr.mxu0 %v2011
        %2300 = vmatpush1.msra.mxu0 %v2010
        %2301 = vmatprep.subr.mxu0 %v2013
        %2302 = vmatpush1.msra.mxu0 %v2012
        %2303 = vmatprep.subr.mxu0 %v2015
        %2304 = vmatpush1.msra.mxu0 %v2014
        %2305 = vmatprep.subr.mxu0 %v2017
        %2306 = vmatpush1.msra.mxu0 %v2016
        %2307 = vmatprep.subr.mxu0 %v2019
        %2308 = vmatpush1.msra.mxu0 %v2018
        %2309 = vmatprep.subr.mxu0 %v2021
        %2310 = vmatpush1.msra.mxu0 %v2020
        %2311 = vmatprep.subr.mxu0 %v2023
        %2312 = vmatpush1.msra.mxu0 %v2022
        %2313 = vmatprep.subr.mxu0 %v2025
        %2314 = vmatpush1.msra.mxu0 %v2024
        %2315 = vmatprep.subr.mxu0 %v2027
        %2316 = vmatpush1.msra.mxu0 %v2026
        %2317 = vmatprep.subr.mxu0 %v2029
        %2318 = vmatpush1.msra.mxu0 %v2028
        %2319 = vmatprep.subr.mxu0 %v2031
        %2320 = vmatpush1.msra.mxu0 %v2030
        %2321 = vmatprep.subr.mxu0 %v2033
        %2322 = vmatpush1.msra.mxu0 %v2032
        %2323 = vmatprep.subr.mxu0 %v2035
        %2324 = vmatpush1.msra.mxu0 %v2034
        %2325 = vmatprep.subr.mxu0 %v2037
        %2326 = vmatpush1.msra.mxu0 %v2036
        %2327 = vmatprep.subr.mxu0 %v2039
        %2328 = vmatpush1.msra.mxu0 %v2038
        %2329 = vmatprep.subr.mxu0 %v2041
        %2330 = vmatpush1.msra.mxu0 %v2040
        %2331 = vmatprep.subr.mxu0 %v2043
        %2332 = vmatpush1.msra.mxu0 %v2042
        %2333 = vmatprep.subr.mxu0 %v2045
        %2334 = vmatpush1.msra.mxu0 %v2044
        %2335 = vmatprep.subr.mxu0 %v2047
        %2336 = vmatpush1.msra.mxu0 %v2046
        %2337 = vmatprep.subr.mxu0 %v2049
        %2338 = vmatpush1.msra.mxu0 %v2048
        %2339 = vmatprep.subr.mxu0 %v2051
        %2340 = vmatpush1.msra.mxu0 %v2050
        %2341 = vmatprep.subr.mxu0 %v2053
        %2342 = vmatpush1.msra.mxu0 %v2052
        %2343 = vmatprep.subr.mxu0 %v2055
        %2344 = vmatpush1.msra.mxu0 %v2054
        %2345 = vmatprep.subr.mxu0 %v2057
        %2346 = vmatpush1.msra.mxu0 %v2056
        %2347 = vmatprep.subr.mxu0 %v2059
        %2348 = vmatpush1.msra.mxu0 %v2058
        %2349 = vmatprep.subr.mxu0 %v2061
        %2350 = vmatpush1.msra.mxu0 %v2060
        %2351 = vmatprep.subr.mxu0 %v2063
        %2352 = vmatpush1.msra.mxu0 %v2062
        %2353 = vmatprep.subr.mxu0 0.0
        %2354 = vmatpush1.msra.mxu0 0.0
        %2355 = vmatprep.subr.mxu0 0.0
        %2356 = vmatpush1.msra.mxu0 0.0
        %2357 = vmatprep.subr.mxu0 0.0
        %2358 = vmatpush1.msra.mxu0 0.0
        %2359 = vmatprep.subr.mxu0 0.0
        %2360 = vmatpush1.msra.mxu0 0.0
        %2361 = vmatprep.mubr.f32.mxu0 %v2222
        %2362 = vmatmul.mubr.f32.gmra.mrb[0].mxu0 %v2217
        %v2363 = vpop.f32.mrb[0].mxu0
        %v2364 = vadd.f32 0.0, %v2363
        %v2365 = vpop.f32.mrb[0].mxu0
        %v2366 = vadd.f32 0.0, %v2365
        %2367 = vdwg.mxu0
        %v2368 = vadd.f32 %v1950, %v2364
        %v2369 = vadd.f32 %v1951, %v2366
        %v2370 = vld [vmem:[%s4 + $0x700] sm:$0xff]
        %v2371 = vld [vmem:[%s4 + $0x708] sm:$0xff]
        %v2372 = vld [vmem:[%s4 + $0x710] sm:$0xff]
        %v2373 = vld [vmem:[%s4 + $0x718] sm:$0xff]
        %v2374 = vld [vmem:[%s4 + $0x720] sm:$0xff]
        %v2375 = vld [vmem:[%s4 + $0x728] sm:$0xff]
        %v2376 = vld [vmem:[%s4 + $0x730] sm:$0xff]
        %v2377 = vld [vmem:[%s4 + $0x738] sm:$0xff]
        %v2378 = vld [vmem:[%s4 + $0x740] sm:$0xff]
        %v2379 = vld [vmem:[%s4 + $0x748] sm:$0xff]
        %v2380 = vld [vmem:[%s4 + $0x750] sm:$0xff]
        %v2381 = vld [vmem:[%s4 + $0x758] sm:$0xff]
        %v2382 = vld [vmem:[%s4 + $0x760] sm:$0xff]
        %v2383 = vld [vmem:[%s4 + $0x768] sm:$0xff]
        %v2384 = vld [vmem:[%s4 + $0x770] sm:$0xff]
        %v2385 = vld [vmem:[%s4 + $0x778] sm:$0xff]
        %v2386 = vld [vmem:[%s4 + $0x780] sm:$0xff]
        %v2387 = vld [vmem:[%s4 + $0x788] sm:$0xff]
        %v2388 = vld [vmem:[%s4 + $0x790] sm:$0xff]
        %v2389 = vld [vmem:[%s4 + $0x798] sm:$0xff]
        %v2390 = vld [vmem:[%s4 + $0x7a0] sm:$0xff]
        %v2391 = vld [vmem:[%s4 + $0x7a8] sm:$0xff]
        %v2392 = vld [vmem:[%s4 + $0x7b0] sm:$0xff]
        %v2393 = vld [vmem:[%s4 + $0x7b8] sm:$0xff]
        %v2394 = vld [vmem:[%s4 + $0x7c0] sm:$0xff]
        %v2395 = vld [vmem:[%s4 + $0x7c8] sm:$0xff]
        %v2396 = vld [vmem:[%s4 + $0x7d0] sm:$0xff]
        %v2397 = vld [vmem:[%s4 + $0x7d8] sm:$0xff]
        %v2398 = vld [vmem:[%s4 + $0x7e0] sm:$0xff]
        %v2399 = vld [vmem:[%s4 + $0x7e8] sm:$0xff]
        %v2400 = vld [vmem:[%s4 + $0x7f0] sm:$0xff]
        %v2401 = vld [vmem:[%s4 + $0x7f8] sm:$0xff]
        %v2402 = vld [vmem:[%s4 + $0x800] sm:$0xff]
        %v2403 = vld [vmem:[%s4 + $0x808] sm:$0xff]
        %v2404 = vld [vmem:[%s4 + $0x810] sm:$0xff]
        %v2405 = vld [vmem:[%s4 + $0x818] sm:$0xff]
        %v2406 = vld [vmem:[%s4 + $0x820] sm:$0xff]
        %v2407 = vld [vmem:[%s4 + $0x828] sm:$0xff]
        %v2408 = vld [vmem:[%s4 + $0x830] sm:$0xff]
        %v2409 = vld [vmem:[%s4 + $0x838] sm:$0xff]
        %v2410 = vld [vmem:[%s4 + $0x840] sm:$0xff]
        %v2411 = vld [vmem:[%s4 + $0x848] sm:$0xff]
        %v2412 = vld [vmem:[%s4 + $0x850] sm:$0xff]
        %v2413 = vld [vmem:[%s4 + $0x858] sm:$0xff]
        %v2414 = vld [vmem:[%s4 + $0x860] sm:$0xff]
        %v2415 = vld [vmem:[%s4 + $0x868] sm:$0xff]
        %v2416 = vld [vmem:[%s4 + $0x870] sm:$0xff]
        %v2417 = vld [vmem:[%s4 + $0x878] sm:$0xff]
        %v2418 = vld [vmem:[%s4 + $0x880] sm:$0xff]
        %v2419 = vld [vmem:[%s4 + $0x888] sm:$0xff]
        %v2420 = vld [vmem:[%s4 + $0x890] sm:$0xff]
        %v2421 = vld [vmem:[%s4 + $0x898] sm:$0xff]
        %v2422 = vld [vmem:[%s4 + $0x8a0] sm:$0xff]
        %v2423 = vld [vmem:[%s4 + $0x8a8] sm:$0xff]
        %v2424 = vld [vmem:[%s4 + $0x8b0] sm:$0xff]
        %v2425 = vld [vmem:[%s4 + $0x8b8] sm:$0xff]
        %v2426 = vld [vmem:[%s5 + $0x700] sm:$0xff]
        %v2427 = vld [vmem:[%s5 + $0x708] sm:$0xff]
        %v2428 = vld [vmem:[%s5 + $0x710] sm:$0xff]
        %v2429 = vld [vmem:[%s5 + $0x718] sm:$0xff]
        %v2430 = vld [vmem:[%s5 + $0x720] sm:$0xff]
        %v2431 = vld [vmem:[%s5 + $0x728] sm:$0xff]
        %v2432 = vld [vmem:[%s5 + $0x730] sm:$0xff]
        %v2433 = vld [vmem:[%s5 + $0x738] sm:$0xff]
        %v2434 = vld [vmem:[%s5 + $0x740] sm:$0xff]
        %v2435 = vld [vmem:[%s5 + $0x748] sm:$0xff]
        %v2436 = vld [vmem:[%s5 + $0x750] sm:$0xff]
        %v2437 = vld [vmem:[%s5 + $0x758] sm:$0xff]
        %v2438 = vld [vmem:[%s5 + $0x760] sm:$0xff]
        %v2439 = vld [vmem:[%s5 + $0x768] sm:$0xff]
        %v2440 = vld [vmem:[%s5 + $0x770] sm:$0xff]
        %v2441 = vld [vmem:[%s5 + $0x778] sm:$0xff]
        %v2442 = vld [vmem:[%s5 + $0x780] sm:$0xff]
        %v2443 = vld [vmem:[%s5 + $0x788] sm:$0xff]
        %v2444 = vld [vmem:[%s5 + $0x790] sm:$0xff]
        %v2445 = vld [vmem:[%s5 + $0x798] sm:$0xff]
        %v2446 = vld [vmem:[%s5 + $0x7a0] sm:$0xff]
        %v2447 = vld [vmem:[%s5 + $0x7a8] sm:$0xff]
        %v2448 = vld [vmem:[%s5 + $0x7b0] sm:$0xff]
        %v2449 = vld [vmem:[%s5 + $0x7b8] sm:$0xff]
        %v2450 = vld [vmem:[%s5 + $0x7c0] sm:$0xff]
        %v2451 = vld [vmem:[%s5 + $0x7c8] sm:$0xff]
        %v2452 = vld [vmem:[%s5 + $0x7d0] sm:$0xff]
        %v2453 = vld [vmem:[%s5 + $0x7d8] sm:$0xff]
        %v2454 = vld [vmem:[%s5 + $0x7e0] sm:$0xff]
        %v2455 = vld [vmem:[%s5 + $0x7e8] sm:$0xff]
        %v2456 = vld [vmem:[%s5 + $0x7f0] sm:$0xff]
        %v2457 = vld [vmem:[%s5 + $0x7f8] sm:$0xff]
        %v2458 = vld [vmem:[%s5 + $0x800] sm:$0xff]
        %v2459 = vld [vmem:[%s5 + $0x808] sm:$0xff]
        %v2460 = vld [vmem:[%s5 + $0x810] sm:$0xff]
        %v2461 = vld [vmem:[%s5 + $0x818] sm:$0xff]
        %v2462 = vld [vmem:[%s5 + $0x820] sm:$0xff]
        %v2463 = vld [vmem:[%s5 + $0x828] sm:$0xff]
        %v2464 = vld [vmem:[%s5 + $0x830] sm:$0xff]
        %v2465 = vld [vmem:[%s5 + $0x838] sm:$0xff]
        %v2466 = vld [vmem:[%s5 + $0x840] sm:$0xff]
        %v2467 = vld [vmem:[%s5 + $0x848] sm:$0xff]
        %v2468 = vld [vmem:[%s5 + $0x850] sm:$0xff]
        %v2469 = vld [vmem:[%s5 + $0x858] sm:$0xff]
        %v2470 = vld [vmem:[%s5 + $0x860] sm:$0xff]
        %v2471 = vld [vmem:[%s5 + $0x868] sm:$0xff]
        %v2472 = vld [vmem:[%s5 + $0x870] sm:$0xff]
        %v2473 = vld [vmem:[%s5 + $0x878] sm:$0xff]
        %v2474 = vld [vmem:[%s5 + $0x880] sm:$0xff]
        %v2475 = vld [vmem:[%s5 + $0x888] sm:$0xff]
        %v2476 = vld [vmem:[%s5 + $0x890] sm:$0xff]
        %v2477 = vld [vmem:[%s5 + $0x898] sm:$0xff]
        %v2478 = vld [vmem:[%s5 + $0x8a0] sm:$0xff]
        %v2479 = vld [vmem:[%s5 + $0x8a8] sm:$0xff]
        %v2480 = vld [vmem:[%s5 + $0x8b0] sm:$0xff]
        %v2481 = vld [vmem:[%s5 + $0x8b8] sm:$0xff]
        %2482 = vmatprep.subr.mxu0 %v2371
        %2483 = vmatpush1.msra.mxu0 %v2370
        %2484 = vmatprep.subr.mxu0 %v2373
        %2485 = vmatpush1.msra.mxu0 %v2372
        %2486 = vmatprep.subr.mxu0 %v2375
        %2487 = vmatpush1.msra.mxu0 %v2374
        %2488 = vmatprep.subr.mxu0 %v2377
        %2489 = vmatpush1.msra.mxu0 %v2376
        %2490 = vmatprep.subr.mxu0 %v2379
        %2491 = vmatpush1.msra.mxu0 %v2378
        %2492 = vmatprep.subr.mxu0 %v2381
        %2493 = vmatpush1.msra.mxu0 %v2380
        %2494 = vmatprep.subr.mxu0 %v2383
        %2495 = vmatpush1.msra.mxu0 %v2382
        %2496 = vmatprep.subr.mxu0 %v2385
        %2497 = vmatpush1.msra.mxu0 %v2384
        %2498 = vmatprep.subr.mxu0 %v2387
        %2499 = vmatpush1.msra.mxu0 %v2386
        %2500 = vmatprep.subr.mxu0 %v2389
        %2501 = vmatpush1.msra.mxu0 %v2388
        %2502 = vmatprep.subr.mxu0 %v2391
        %2503 = vmatpush1.msra.mxu0 %v2390
        %2504 = vmatprep.subr.mxu0 %v2393
        %2505 = vmatpush1.msra.mxu0 %v2392
        %2506 = vmatprep.subr.mxu0 %v2395
        %2507 = vmatpush1.msra.mxu0 %v2394
        %2508 = vmatprep.subr.mxu0 %v2397
        %2509 = vmatpush1.msra.mxu0 %v2396
        %2510 = vmatprep.subr.mxu0 %v2399
        %2511 = vmatpush1.msra.mxu0 %v2398
        %2512 = vmatprep.subr.mxu0 %v2401
        %2513 = vmatpush1.msra.mxu0 %v2400
        %2514 = vmatprep.subr.mxu0 %v2403
        %2515 = vmatpush1.msra.mxu0 %v2402
        %2516 = vmatprep.subr.mxu0 %v2405
        %2517 = vmatpush1.msra.mxu0 %v2404
        %2518 = vmatprep.subr.mxu0 %v2407
        %2519 = vmatpush1.msra.mxu0 %v2406
        %2520 = vmatprep.subr.mxu0 %v2409
        %2521 = vmatpush1.msra.mxu0 %v2408
        %2522 = vmatprep.subr.mxu0 %v2411
        %2523 = vmatpush1.msra.mxu0 %v2410
        %2524 = vmatprep.subr.mxu0 %v2413
        %2525 = vmatpush1.msra.mxu0 %v2412
        %2526 = vmatprep.subr.mxu0 %v2415
        %2527 = vmatpush1.msra.mxu0 %v2414
        %2528 = vmatprep.subr.mxu0 %v2417
        %2529 = vmatpush1.msra.mxu0 %v2416
        %2530 = vmatprep.subr.mxu0 %v2419
        %2531 = vmatpush1.msra.mxu0 %v2418
        %2532 = vmatprep.subr.mxu0 %v2421
        %2533 = vmatpush1.msra.mxu0 %v2420
        %2534 = vmatprep.subr.mxu0 %v2423
        %2535 = vmatpush1.msra.mxu0 %v2422
        %2536 = vmatprep.subr.mxu0 %v2425
        %2537 = vmatpush1.msra.mxu0 %v2424
        %2538 = vmatprep.subr.mxu0 0.0
        %2539 = vmatpush1.msra.mxu0 0.0
        %2540 = vmatprep.subr.mxu0 0.0
        %2541 = vmatpush1.msra.mxu0 0.0
        %2542 = vmatprep.subr.mxu0 0.0
        %2543 = vmatpush1.msra.mxu0 0.0
        %2544 = vmatprep.subr.mxu0 0.0
        %2545 = vmatpush1.msra.mxu0 0.0
        %2546 = vmatprep.mubr.f32.mxu0 %v2222
        %2547 = vmatmul.mubr.f32.gmra.mrb[0].mxu0 %v2217
        %v2548 = vpop.f32.mrb[0].mxu0
        %v2549 = vadd.f32 0.0, %v2548
        %v2550 = vpop.f32.mrb[0].mxu0
        %v2551 = vadd.f32 0.0, %v2550
        %2552 = vdwg.mxu0
        %v2553 = vadd.f32 %v2135, %v2549
        %v2554 = vadd.f32 %v2136, %v2551
        %2555 = vmatprep.subr.mxu0 %v2427
        %2556 = vmatpush1.msra.mxu0 %v2426
        %2557 = vmatprep.subr.mxu0 %v2429
        %2558 = vmatpush1.msra.mxu0 %v2428
        %2559 = vmatprep.subr.mxu0 %v2431
        %2560 = vmatpush1.msra.mxu0 %v2430
        %2561 = vmatprep.subr.mxu0 %v2433
        %2562 = vmatpush1.msra.mxu0 %v2432
        %2563 = vmatprep.subr.mxu0 %v2435
        %2564 = vmatpush1.msra.mxu0 %v2434
        %2565 = vmatprep.subr.mxu0 %v2437
        %2566 = vmatpush1.msra.mxu0 %v2436
        %2567 = vmatprep.subr.mxu0 %v2439
        %2568 = vmatpush1.msra.mxu0 %v2438
        %2569 = vmatprep.subr.mxu0 %v2441
        %2570 = vmatpush1.msra.mxu0 %v2440
        %2571 = vmatprep.subr.mxu0 %v2443
        %2572 = vmatpush1.msra.mxu0 %v2442
        %2573 = vmatprep.subr.mxu0 %v2445
        %2574 = vmatpush1.msra.mxu0 %v2444
        %2575 = vmatprep.subr.mxu0 %v2447
        %2576 = vmatpush1.msra.mxu0 %v2446
        %2577 = vmatprep.subr.mxu0 %v2449
        %2578 = vmatpush1.msra.mxu0 %v2448
        %2579 = vmatprep.subr.mxu0 %v2451
        %2580 = vmatpush1.msra.mxu0 %v2450
        %2581 = vmatprep.subr.mxu0 %v2453
        %2582 = vmatpush1.msra.mxu0 %v2452
        %2583 = vmatprep.subr.mxu0 %v2455
        %2584 = vmatpush1.msra.mxu0 %v2454
        %2585 = vmatprep.subr.mxu0 %v2457
        %2586 = vmatpush1.msra.mxu0 %v2456
        %2587 = vmatprep.subr.mxu0 %v2459
        %2588 = vmatpush1.msra.mxu0 %v2458
        %2589 = vmatprep.subr.mxu0 %v2461
        %2590 = vmatpush1.msra.mxu0 %v2460
        %2591 = vmatprep.subr.mxu0 %v2463
        %2592 = vmatpush1.msra.mxu0 %v2462
        %2593 = vmatprep.subr.mxu0 %v2465
        %2594 = vmatpush1.msra.mxu0 %v2464
        %2595 = vmatprep.subr.mxu0 %v2467
        %2596 = vmatpush1.msra.mxu0 %v2466
        %2597 = vmatprep.subr.mxu0 %v2469
        %2598 = vmatpush1.msra.mxu0 %v2468
        %2599 = vmatprep.subr.mxu0 %v2471
        %2600 = vmatpush1.msra.mxu0 %v2470
        %2601 = vmatprep.subr.mxu0 %v2473
        %2602 = vmatpush1.msra.mxu0 %v2472
        %2603 = vmatprep.subr.mxu0 %v2475
        %2604 = vmatpush1.msra.mxu0 %v2474
        %2605 = vmatprep.subr.mxu0 %v2477
        %2606 = vmatpush1.msra.mxu0 %v2476
        %2607 = vmatprep.subr.mxu0 %v2479
        %2608 = vmatpush1.msra.mxu0 %v2478
        %2609 = vmatprep.subr.mxu0 %v2481
        %2610 = vmatpush1.msra.mxu0 %v2480
        %2611 = vmatprep.subr.mxu0 0.0
        %2612 = vmatpush1.msra.mxu0 0.0
        %2613 = vmatprep.subr.mxu0 0.0
        %2614 = vmatpush1.msra.mxu0 0.0
        %2615 = vmatprep.subr.mxu0 0.0
        %2616 = vmatpush1.msra.mxu0 0.0
        %2617 = vmatprep.subr.mxu0 0.0
        %2618 = vmatpush1.msra.mxu0 0.0
        %2619 = vmatprep.mubr.f32.mxu0 %v2222
        %2620 = vmatmul.mubr.f32.gmra.mrb[0].mxu0 %v2217
        %v2621 = vpop.f32.mrb[0].mxu0
        %v2622 = vadd.f32 0.0, %v2621
        %v2623 = vpop.f32.mrb[0].mxu0
        %v2624 = vadd.f32 0.0, %v2623
        %2625 = vdwg.mxu0
        %v2626 = vadd.f32 %v2208, %v2622
        %v2627 = vadd.f32 %v2209, %v2624
        %v2632 = vrot.slane %v732, 2
        %v2633 = vrot.slane %v734, 2
        %v2634 = vsel %vm2214, %v2632, %v2633
        %v2635 = vrot.slane %v733, 2
        %v2636 = vrot.slane %v735, 2
        %v2637 = vsel %vm2214, %v2635, %v2636
        %v2639 = vsel %vm690, %v2637, 0
        %2641 = vmatprep.subr.mxu0 %v2371
        %2642 = vmatpush1.msra.mxu0 %v2370
        %2643 = vmatprep.subr.mxu0 %v2373
        %2644 = vmatpush1.msra.mxu0 %v2372
        %2645 = vmatprep.subr.mxu0 %v2375
        %2646 = vmatpush1.msra.mxu0 %v2374
        %2647 = vmatprep.subr.mxu0 %v2377
        %2648 = vmatpush1.msra.mxu0 %v2376
        %2649 = vmatprep.subr.mxu0 %v2379
        %2650 = vmatpush1.msra.mxu0 %v2378
        %2651 = vmatprep.subr.mxu0 %v2381
        %2652 = vmatpush1.msra.mxu0 %v2380
        %2653 = vmatprep.subr.mxu0 %v2383
        %2654 = vmatpush1.msra.mxu0 %v2382
        %2655 = vmatprep.subr.mxu0 %v2385
        %2656 = vmatpush1.msra.mxu0 %v2384
        %2657 = vmatprep.subr.mxu0 %v2387
        %2658 = vmatpush1.msra.mxu0 %v2386
        %2659 = vmatprep.subr.mxu0 %v2389
        %2660 = vmatpush1.msra.mxu0 %v2388
        %2661 = vmatprep.subr.mxu0 %v2391
        %2662 = vmatpush1.msra.mxu0 %v2390
        %2663 = vmatprep.subr.mxu0 %v2393
        %2664 = vmatpush1.msra.mxu0 %v2392
        %2665 = vmatprep.subr.mxu0 %v2395
        %2666 = vmatpush1.msra.mxu0 %v2394
        %2667 = vmatprep.subr.mxu0 %v2397
        %2668 = vmatpush1.msra.mxu0 %v2396
        %2669 = vmatprep.subr.mxu0 %v2399
        %2670 = vmatpush1.msra.mxu0 %v2398
        %2671 = vmatprep.subr.mxu0 %v2401
        %2672 = vmatpush1.msra.mxu0 %v2400
        %2673 = vmatprep.subr.mxu0 %v2403
        %2674 = vmatpush1.msra.mxu0 %v2402
        %2675 = vmatprep.subr.mxu0 %v2405
        %2676 = vmatpush1.msra.mxu0 %v2404
        %2677 = vmatprep.subr.mxu0 %v2407
        %2678 = vmatpush1.msra.mxu0 %v2406
        %2679 = vmatprep.subr.mxu0 %v2409
        %2680 = vmatpush1.msra.mxu0 %v2408
        %2681 = vmatprep.subr.mxu0 %v2411
        %2682 = vmatpush1.msra.mxu0 %v2410
        %2683 = vmatprep.subr.mxu0 %v2413
        %2684 = vmatpush1.msra.mxu0 %v2412
        %2685 = vmatprep.subr.mxu0 %v2415
        %2686 = vmatpush1.msra.mxu0 %v2414
        %2687 = vmatprep.subr.mxu0 %v2417
        %2688 = vmatpush1.msra.mxu0 %v2416
        %2689 = vmatprep.subr.mxu0 %v2419
        %2690 = vmatpush1.msra.mxu0 %v2418
        %2691 = vmatprep.subr.mxu0 %v2421
        %2692 = vmatpush1.msra.mxu0 %v2420
        %2693 = vmatprep.subr.mxu0 %v2423
        %2694 = vmatpush1.msra.mxu0 %v2422
        %2695 = vmatprep.subr.mxu0 %v2425
        %2696 = vmatpush1.msra.mxu0 %v2424
        %2697 = vmatprep.subr.mxu0 0.0
        %2698 = vmatpush1.msra.mxu0 0.0
        %2699 = vmatprep.subr.mxu0 0.0
        %2700 = vmatpush1.msra.mxu0 0.0
        %2701 = vmatprep.subr.mxu0 0.0
        %2702 = vmatpush1.msra.mxu0 0.0
        %2703 = vmatprep.subr.mxu0 0.0
        %2704 = vmatpush1.msra.mxu0 0.0
        %2705 = vmatprep.mubr.f32.mxu0 %v2639
        %2706 = vmatmul.mubr.f32.gmra.mrb[0].mxu0 %v2634
        %v2707 = vpop.f32.mrb[0].mxu0
        %v2708 = vadd.f32 0.0, %v2707
        %v2709 = vpop.f32.mrb[0].mxu0
        %v2710 = vadd.f32 0.0, %v2709
        %2711 = vdwg.mxu0
        %v2712 = vadd.f32 %v2295, %v2708
        %v2713 = vadd.f32 %v2296, %v2710
        %2714 = vmatprep.subr.mxu0 %v2427
        %2715 = vmatpush1.msra.mxu0 %v2426
        %2716 = vmatprep.subr.mxu0 %v2429
        %2717 = vmatpush1.msra.mxu0 %v2428
        %2718 = vmatprep.subr.mxu0 %v2431
        %2719 = vmatpush1.msra.mxu0 %v2430
        %2720 = vmatprep.subr.mxu0 %v2433
        %2721 = vmatpush1.msra.mxu0 %v2432
        %2722 = vmatprep.subr.mxu0 %v2435
        %2723 = vmatpush1.msra.mxu0 %v2434
        %2724 = vmatprep.subr.mxu0 %v2437
        %2725 = vmatpush1.msra.mxu0 %v2436
        %2726 = vmatprep.subr.mxu0 %v2439
        %2727 = vmatpush1.msra.mxu0 %v2438
        %2728 = vmatprep.subr.mxu0 %v2441
        %2729 = vmatpush1.msra.mxu0 %v2440
        %2730 = vmatprep.subr.mxu0 %v2443
        %2731 = vmatpush1.msra.mxu0 %v2442
        %2732 = vmatprep.subr.mxu0 %v2445
        %2733 = vmatpush1.msra.mxu0 %v2444
        %2734 = vmatprep.subr.mxu0 %v2447
        %2735 = vmatpush1.msra.mxu0 %v2446
        %2736 = vmatprep.subr.mxu0 %v2449
        %2737 = vmatpush1.msra.mxu0 %v2448
        %2738 = vmatprep.subr.mxu0 %v2451
        %2739 = vmatpush1.msra.mxu0 %v2450
        %2740 = vmatprep.subr.mxu0 %v2453
        %2741 = vmatpush1.msra.mxu0 %v2452
        %2742 = vmatprep.subr.mxu0 %v2455
        %2743 = vmatpush1.msra.mxu0 %v2454
        %2744 = vmatprep.subr.mxu0 %v2457
        %2745 = vmatpush1.msra.mxu0 %v2456
        %2746 = vmatprep.subr.mxu0 %v2459
        %2747 = vmatpush1.msra.mxu0 %v2458
        %2748 = vmatprep.subr.mxu0 %v2461
        %2749 = vmatpush1.msra.mxu0 %v2460
        %2750 = vmatprep.subr.mxu0 %v2463
        %2751 = vmatpush1.msra.mxu0 %v2462
        %2752 = vmatprep.subr.mxu0 %v2465
        %2753 = vmatpush1.msra.mxu0 %v2464
        %2754 = vmatprep.subr.mxu0 %v2467
        %2755 = vmatpush1.msra.mxu0 %v2466
        %2756 = vmatprep.subr.mxu0 %v2469
        %2757 = vmatpush1.msra.mxu0 %v2468
        %2758 = vmatprep.subr.mxu0 %v2471
        %2759 = vmatpush1.msra.mxu0 %v2470
        %2760 = vmatprep.subr.mxu0 %v2473
        %2761 = vmatpush1.msra.mxu0 %v2472
        %2762 = vmatprep.subr.mxu0 %v2475
        %2763 = vmatpush1.msra.mxu0 %v2474
        %2764 = vmatprep.subr.mxu0 %v2477
        %2765 = vmatpush1.msra.mxu0 %v2476
        %2766 = vmatprep.subr.mxu0 %v2479
        %2767 = vmatpush1.msra.mxu0 %v2478
        %2768 = vmatprep.subr.mxu0 %v2481
        %2769 = vmatpush1.msra.mxu0 %v2480
        %2770 = vmatprep.subr.mxu0 0.0
        %2771 = vmatpush1.msra.mxu0 0.0
        %2772 = vmatprep.subr.mxu0 0.0
        %2773 = vmatpush1.msra.mxu0 0.0
        %2774 = vmatprep.subr.mxu0 0.0
        %2775 = vmatpush1.msra.mxu0 0.0
        %2776 = vmatprep.subr.mxu0 0.0
        %2777 = vmatpush1.msra.mxu0 0.0
        %2778 = vmatprep.mubr.f32.mxu0 %v2639
        %2779 = vmatmul.mubr.f32.gmra.mrb[0].mxu0 %v2634
        %v2780 = vpop.f32.mrb[0].mxu0
        %v2781 = vadd.f32 0.0, %v2780
        %v2782 = vpop.f32.mrb[0].mxu0
        %v2783 = vadd.f32 0.0, %v2782
        %2784 = vdwg.mxu0
        %v2785 = vadd.f32 %v2368, %v2781
        %v2786 = vadd.f32 %v2369, %v2783
        %v2787 = vmax.f32 %v2553, %v2626
        %v2788 = vmax.f32 %v2554, %v2627
        %v2789 = vmax.f32 %v2712, %v2785
        %v2790 = vmax.f32 %v2713, %v2786
        %v2791 = vmax.f32 %v2787, %v2789
        %v2792 = vmax.f32 %v2788, %v2790
        %v2793 = vld [vmem:[%s6] sm:$0x3]
        %v2795 = vlaneseq
        %v2796 = vshrl.u32 %v2795, 7
        %v2797 = vsub.s32 0, %v2796
        %v2798 = vrot.slane %v2793, %v2797
        %v2799 = vlaneseq
        %v2800 = vshrl.u32 %v2799, 7
        %v2801 = vsub.s32 1, %v2800
        %v2802 = vrot.slane %v2793, %v2801
        %v2805 = vadd.f32 %v2791, %v2798
        %v2806 = vadd.f32 %v2792, %v2802
        %v2807 = vmax.f32 %v2805, 0.0
        %v2808 = vmax.f32 %v2806, 0.0
        %v2809 = vld [vmem:[%s7] sm:$0xff]
        %v2810 = vld [vmem:[%s7 + $0x8] sm:$0xff]
        %v2811 = vld [vmem:[%s7 + $0x10] sm:$0xff]
        %v2812 = vld [vmem:[%s7 + $0x18] sm:$0xff]
        %v2813 = vld [vmem:[%s7 + $0x20] sm:$0xff]
        %v2814 = vld [vmem:[%s7 + $0x28] sm:$0xff]
        %v2815 = vld [vmem:[%s7 + $0x30] sm:$0xff]
        %v2816 = vld [vmem:[%s7 + $0x38] sm:$0xff]
        %v2817 = vld [vmem:[%s7 + $0x40] sm:$0xff]
        %v2818 = vld [vmem:[%s7 + $0x48] sm:$0xff]
        %v2819 = vld [vmem:[%s7 + $0x50] sm:$0xff]
        %v2820 = vld [vmem:[%s7 + $0x58] sm:$0xff]
        %v2821 = vld [vmem:[%s7 + $0x60] sm:$0xff]
        %v2822 = vld [vmem:[%s7 + $0x68] sm:$0xff]
        %v2823 = vld [vmem:[%s7 + $0x70] sm:$0xff]
        %v2824 = vld [vmem:[%s7 + $0x78] sm:$0xff]
        %v2825 = vld [vmem:[%s7 + $0x80] sm:$0xff]
        %v2826 = vld [vmem:[%s7 + $0x88] sm:$0xff]
        %v2827 = vld [vmem:[%s7 + $0x90] sm:$0xff]
        %v2828 = vld [vmem:[%s7 + $0x98] sm:$0xff]
        %v2829 = vld [vmem:[%s7 + $0xa0] sm:$0xff]
        %v2830 = vld [vmem:[%s7 + $0xa8] sm:$0xff]
        %v2831 = vld [vmem:[%s7 + $0xb0] sm:$0xff]
        %v2832 = vld [vmem:[%s7 + $0xb8] sm:$0xff]
        %v2833 = vld [vmem:[%s7 + $0xc0] sm:$0xff]
        %v2834 = vld [vmem:[%s7 + $0xc8] sm:$0xff]
        %v2835 = vld [vmem:[%s7 + $0xd0] sm:$0xff]
        %v2836 = vld [vmem:[%s7 + $0xd8] sm:$0xff]
        %v2837 = vld [vmem:[%s7 + $0xe0] sm:$0xff]
        %v2838 = vld [vmem:[%s7 + $0xe8] sm:$0xff]
        %v2839 = vld [vmem:[%s7 + $0xf0] sm:$0xff]
        %v2840 = vld [vmem:[%s7 + $0xf8] sm:$0xff]
        %v2841 = vld [vmem:[%s7 + $0x100] sm:$0xff]
        %v2842 = vld [vmem:[%s7 + $0x108] sm:$0xff]
        %v2843 = vld [vmem:[%s7 + $0x110] sm:$0xff]
        %v2844 = vld [vmem:[%s7 + $0x118] sm:$0xff]
        %v2845 = vld [vmem:[%s7 + $0x120] sm:$0xff]
        %v2846 = vld [vmem:[%s7 + $0x128] sm:$0xff]
        %v2847 = vld [vmem:[%s7 + $0x130] sm:$0xff]
        %v2848 = vld [vmem:[%s7 + $0x138] sm:$0xff]
        %v2849 = vld [vmem:[%s7 + $0x140] sm:$0xff]
        %v2850 = vld [vmem:[%s7 + $0x148] sm:$0xff]
        %v2851 = vld [vmem:[%s7 + $0x150] sm:$0xff]
        %v2852 = vld [vmem:[%s7 + $0x158] sm:$0xff]
        %v2853 = vld [vmem:[%s7 + $0x160] sm:$0xff]
        %v2854 = vld [vmem:[%s7 + $0x168] sm:$0xff]
        %v2855 = vld [vmem:[%s7 + $0x170] sm:$0xff]
        %v2856 = vld [vmem:[%s7 + $0x178] sm:$0xff]
        %v2857 = vld [vmem:[%s7 + $0x180] sm:$0xff]
        %v2858 = vld [vmem:[%s7 + $0x188] sm:$0xff]
        %v2859 = vld [vmem:[%s7 + $0x190] sm:$0xff]
        %v2860 = vld [vmem:[%s7 + $0x198] sm:$0xff]
        %v2861 = vld [vmem:[%s7 + $0x1a0] sm:$0xff]
        %v2862 = vld [vmem:[%s7 + $0x1a8] sm:$0xff]
        %v2863 = vld [vmem:[%s7 + $0x1b0] sm:$0xff]
        %v2864 = vld [vmem:[%s7 + $0x1b8] sm:$0xff]
        %v2867 = vrot.slane %v2807, 1
        %v2868 = vrot.slane %v2808, 1
        %v2870 = vsel %vm690, %v2868, 0
        %2872 = vmatprep.subr.mxu0 0.0
        %2873 = vmatpush1.msra.mxu0 %v2837
        %2874 = vmatprep.subr.mxu0 0.0
        %2875 = vmatpush1.msra.mxu0 %v2838
        %2876 = vmatprep.subr.mxu0 0.0
        %2877 = vmatpush1.msra.mxu0 %v2839
        %2878 = vmatprep.subr.mxu0 0.0
        %2879 = vmatpush1.msra.mxu0 %v2840
        %2880 = vmatprep.subr.mxu0 0.0
        %2881 = vmatpush1.msra.mxu0 %v2841
        %2882 = vmatprep.subr.mxu0 0.0
        %2883 = vmatpush1.msra.mxu0 %v2842
        %2884 = vmatprep.subr.mxu0 0.0
        %2885 = vmatpush1.msra.mxu0 %v2843
        %2886 = vmatprep.subr.mxu0 0.0
        %2887 = vmatpush1.msra.mxu0 %v2844
        %2888 = vmatprep.subr.mxu0 0.0
        %2889 = vmatpush1.msra.mxu0 %v2845
        %2890 = vmatprep.subr.mxu0 0.0
        %2891 = vmatpush1.msra.mxu0 %v2846
        %2892 = vmatprep.subr.mxu0 0.0
        %2893 = vmatpush1.msra.mxu0 %v2847
        %2894 = vmatprep.subr.mxu0 0.0
        %2895 = vmatpush1.msra.mxu0 %v2848
        %2896 = vmatprep.subr.mxu0 0.0
        %2897 = vmatpush1.msra.mxu0 %v2849
        %2898 = vmatprep.subr.mxu0 0.0
        %2899 = vmatpush1.msra.mxu0 %v2850
        %2900 = vmatprep.subr.mxu0 0.0
        %2901 = vmatpush1.msra.mxu0 %v2851
        %2902 = vmatprep.subr.mxu0 0.0
        %2903 = vmatpush1.msra.mxu0 %v2852
        %2904 = vmatprep.subr.mxu0 0.0
        %2905 = vmatpush1.msra.mxu0 %v2853
        %2906 = vmatprep.subr.mxu0 0.0
        %2907 = vmatpush1.msra.mxu0 %v2854
        %2908 = vmatprep.subr.mxu0 0.0
        %2909 = vmatpush1.msra.mxu0 %v2855
        %2910 = vmatprep.subr.mxu0 0.0
        %2911 = vmatpush1.msra.mxu0 %v2856
        %2912 = vmatprep.subr.mxu0 0.0
        %2913 = vmatpush1.msra.mxu0 %v2857
        %2914 = vmatprep.subr.mxu0 0.0
        %2915 = vmatpush1.msra.mxu0 %v2858
        %2916 = vmatprep.subr.mxu0 0.0
        %2917 = vmatpush1.msra.mxu0 %v2859
        %2918 = vmatprep.subr.mxu0 0.0
        %2919 = vmatpush1.msra.mxu0 %v2860
        %2920 = vmatprep.subr.mxu0 0.0
        %2921 = vmatpush1.msra.mxu0 %v2861
        %2922 = vmatprep.subr.mxu0 0.0
        %2923 = vmatpush1.msra.mxu0 %v2862
        %2924 = vmatprep.subr.mxu0 0.0
        %2925 = vmatpush1.msra.mxu0 %v2863
        %2926 = vmatprep.subr.mxu0 0.0
        %2927 = vmatpush1.msra.mxu0 %v2864
        %2928 = vmatprep.subr.mxu0 0.0
        %2929 = vmatpush1.msra.mxu0 0.0
        %2930 = vmatprep.subr.mxu0 0.0
        %2931 = vmatpush1.msra.mxu0 0.0
        %2932 = vmatprep.subr.mxu0 0.0
        %2933 = vmatpush1.msra.mxu0 0.0
        %2934 = vmatprep.subr.mxu0 0.0
        %2935 = vmatpush1.msra.mxu0 0.0
        %2936 = vmatprep.mubr.f32.mxu0 %v2870
        %2937 = vmatmul.mubr.f32.gmra.mrb[0].mxu0 %v2867
        %v2938 = vpop.f32.mrb[0].mxu0
        %v2939 = vadd.f32 0.0, %v2938
        %v2940 = vpop.f32.mrb[0].mxu0
        %2941 = vdwg.mxu0
        %v2942 = vsel %vm690, %v2808, 0
        %2944 = vmatprep.subr.mxu0 0.0
        %2945 = vmatpush1.msra.mxu0 %v2809
        %2946 = vmatprep.subr.mxu0 0.0
        %2947 = vmatpush1.msra.mxu0 %v2810
        %2948 = vmatprep.subr.mxu0 0.0
        %2949 = vmatpush1.msra.mxu0 %v2811
        %2950 = vmatprep.subr.mxu0 0.0
        %2951 = vmatpush1.msra.mxu0 %v2812
        %2952 = vmatprep.subr.mxu0 0.0
        %2953 = vmatpush1.msra.mxu0 %v2813
        %2954 = vmatprep.subr.mxu0 0.0
        %2955 = vmatpush1.msra.mxu0 %v2814
        %2956 = vmatprep.subr.mxu0 0.0
        %2957 = vmatpush1.msra.mxu0 %v2815
        %2958 = vmatprep.subr.mxu0 0.0
        %2959 = vmatpush1.msra.mxu0 %v2816
        %2960 = vmatprep.subr.mxu0 0.0
        %2961 = vmatpush1.msra.mxu0 %v2817
        %2962 = vmatprep.subr.mxu0 0.0
        %2963 = vmatpush1.msra.mxu0 %v2818
        %2964 = vmatprep.subr.mxu0 0.0
        %2965 = vmatpush1.msra.mxu0 %v2819
        %2966 = vmatprep.subr.mxu0 0.0
        %2967 = vmatpush1.msra.mxu0 %v2820
        %2968 = vmatprep.subr.mxu0 0.0
        %2969 = vmatpush1.msra.mxu0 %v2821
        %2970 = vmatprep.subr.mxu0 0.0
        %2971 = vmatpush1.msra.mxu0 %v2822
        %2972 = vmatprep.subr.mxu0 0.0
        %2973 = vmatpush1.msra.mxu0 %v2823
        %2974 = vmatprep.subr.mxu0 0.0
        %2975 = vmatpush1.msra.mxu0 %v2824
        %2976 = vmatprep.subr.mxu0 0.0
        %2977 = vmatpush1.msra.mxu0 %v2825
        %2978 = vmatprep.subr.mxu0 0.0
        %2979 = vmatpush1.msra.mxu0 %v2826
        %2980 = vmatprep.subr.mxu0 0.0
        %2981 = vmatpush1.msra.mxu0 %v2827
        %2982 = vmatprep.subr.mxu0 0.0
        %2983 = vmatpush1.msra.mxu0 %v2828
        %2984 = vmatprep.subr.mxu0 0.0
        %2985 = vmatpush1.msra.mxu0 %v2829
        %2986 = vmatprep.subr.mxu0 0.0
        %2987 = vmatpush1.msra.mxu0 %v2830
        %2988 = vmatprep.subr.mxu0 0.0
        %2989 = vmatpush1.msra.mxu0 %v2831
        %2990 = vmatprep.subr.mxu0 0.0
        %2991 = vmatpush1.msra.mxu0 %v2832
        %2992 = vmatprep.subr.mxu0 0.0
        %2993 = vmatpush1.msra.mxu0 %v2833
        %2994 = vmatprep.subr.mxu0 0.0
        %2995 = vmatpush1.msra.mxu0 %v2834
        %2996 = vmatprep.subr.mxu0 0.0
        %2997 = vmatpush1.msra.mxu0 %v2835
        %2998 = vmatprep.subr.mxu0 0.0
        %2999 = vmatpush1.msra.mxu0 %v2836
        %3000 = vmatprep.subr.mxu0 0.0
        %3001 = vmatpush1.msra.mxu0 0.0
        %3002 = vmatprep.subr.mxu0 0.0
        %3003 = vmatpush1.msra.mxu0 0.0
        %3004 = vmatprep.subr.mxu0 0.0
        %3005 = vmatpush1.msra.mxu0 0.0
        %3006 = vmatprep.subr.mxu0 0.0
        %3007 = vmatpush1.msra.mxu0 0.0
        %3008 = vmatprep.mubr.f32.mxu0 %v2942
        %3009 = vmatmul.mubr.f32.gmra.mrb[0].mxu0 %v2807
        %v3010 = vpop.f32.mrb[0].mxu0
        %v3011 = vadd.f32 %v2939, %v3010
        %v3012 = vpop.f32.mrb[0].mxu0
        %3013 = vdwg.mxu0
        %v3014 = vld [vmem:[%s7 + $0x1c0] sm:$0xff]
        %v3015 = vld [vmem:[%s7 + $0x1c8] sm:$0xff]
        %v3016 = vld [vmem:[%s7 + $0x1d0] sm:$0xff]
        %v3017 = vld [vmem:[%s7 + $0x1d8] sm:$0xff]
        %v3018 = vld [vmem:[%s7 + $0x1e0] sm:$0xff]
        %v3019 = vld [vmem:[%s7 + $0x1e8] sm:$0xff]
        %v3020 = vld [vmem:[%s7 + $0x1f0] sm:$0xff]
        %v3021 = vld [vmem:[%s7 + $0x1f8] sm:$0xff]
        %v3022 = vld [vmem:[%s7 + $0x200] sm:$0xff]
        %v3023 = vld [vmem:[%s7 + $0x208] sm:$0xff]
        %v3024 = vld [vmem:[%s7 + $0x210] sm:$0xff]
        %v3025 = vld [vmem:[%s7 + $0x218] sm:$0xff]
        %v3026 = vld [vmem:[%s7 + $0x220] sm:$0xff]
        %v3027 = vld [vmem:[%s7 + $0x228] sm:$0xff]
        %v3028 = vld [vmem:[%s7 + $0x230] sm:$0xff]
        %v3029 = vld [vmem:[%s7 + $0x238] sm:$0xff]
        %v3030 = vld [vmem:[%s7 + $0x240] sm:$0xff]
        %v3031 = vld [vmem:[%s7 + $0x248] sm:$0xff]
        %v3032 = vld [vmem:[%s7 + $0x250] sm:$0xff]
        %v3033 = vld [vmem:[%s7 + $0x258] sm:$0xff]
        %v3034 = vld [vmem:[%s7 + $0x260] sm:$0xff]
        %v3035 = vld [vmem:[%s7 + $0x268] sm:$0xff]
        %v3036 = vld [vmem:[%s7 + $0x270] sm:$0xff]
        %v3037 = vld [vmem:[%s7 + $0x278] sm:$0xff]
        %v3038 = vld [vmem:[%s7 + $0x280] sm:$0xff]
        %v3039 = vld [vmem:[%s7 + $0x288] sm:$0xff]
        %v3040 = vld [vmem:[%s7 + $0x290] sm:$0xff]
        %v3041 = vld [vmem:[%s7 + $0x298] sm:$0xff]
        %v3042 = vrot.slane %v2807, 2
        %v3043 = vrot.slane %v2808, 2
        %v3045 = vsel %vm690, %v3043, 0
        %3047 = vmatprep.subr.mxu0 0.0
        %3048 = vmatpush1.msra.mxu0 %v3014
        %3049 = vmatprep.subr.mxu0 0.0
        %3050 = vmatpush1.msra.mxu0 %v3015
        %3051 = vmatprep.subr.mxu0 0.0
        %3052 = vmatpush1.msra.mxu0 %v3016
        %3053 = vmatprep.subr.mxu0 0.0
        %3054 = vmatpush1.msra.mxu0 %v3017
        %3055 = vmatprep.subr.mxu0 0.0
        %3056 = vmatpush1.msra.mxu0 %v3018
        %3057 = vmatprep.subr.mxu0 0.0
        %3058 = vmatpush1.msra.mxu0 %v3019
        %3059 = vmatprep.subr.mxu0 0.0
        %3060 = vmatpush1.msra.mxu0 %v3020
        %3061 = vmatprep.subr.mxu0 0.0
        %3062 = vmatpush1.msra.mxu0 %v3021
        %3063 = vmatprep.subr.mxu0 0.0
        %3064 = vmatpush1.msra.mxu0 %v3022
        %3065 = vmatprep.subr.mxu0 0.0
        %3066 = vmatpush1.msra.mxu0 %v3023
        %3067 = vmatprep.subr.mxu0 0.0
        %3068 = vmatpush1.msra.mxu0 %v3024
        %3069 = vmatprep.subr.mxu0 0.0
        %3070 = vmatpush1.msra.mxu0 %v3025
        %3071 = vmatprep.subr.mxu0 0.0
        %3072 = vmatpush1.msra.mxu0 %v3026
        %3073 = vmatprep.subr.mxu0 0.0
        %3074 = vmatpush1.msra.mxu0 %v3027
        %3075 = vmatprep.subr.mxu0 0.0
        %3076 = vmatpush1.msra.mxu0 %v3028
        %3077 = vmatprep.subr.mxu0 0.0
        %3078 = vmatpush1.msra.mxu0 %v3029
        %3079 = vmatprep.subr.mxu0 0.0
        %3080 = vmatpush1.msra.mxu0 %v3030
        %3081 = vmatprep.subr.mxu0 0.0
        %3082 = vmatpush1.msra.mxu0 %v3031
        %3083 = vmatprep.subr.mxu0 0.0
        %3084 = vmatpush1.msra.mxu0 %v3032
        %3085 = vmatprep.subr.mxu0 0.0
        %3086 = vmatpush1.msra.mxu0 %v3033
        %3087 = vmatprep.subr.mxu0 0.0
        %3088 = vmatpush1.msra.mxu0 %v3034
        %3089 = vmatprep.subr.mxu0 0.0
        %3090 = vmatpush1.msra.mxu0 %v3035
        %3091 = vmatprep.subr.mxu0 0.0
        %3092 = vmatpush1.msra.mxu0 %v3036
        %3093 = vmatprep.subr.mxu0 0.0
        %3094 = vmatpush1.msra.mxu0 %v3037
        %3095 = vmatprep.subr.mxu0 0.0
        %3096 = vmatpush1.msra.mxu0 %v3038
        %3097 = vmatprep.subr.mxu0 0.0
        %3098 = vmatpush1.msra.mxu0 %v3039
        %3099 = vmatprep.subr.mxu0 0.0
        %3100 = vmatpush1.msra.mxu0 %v3040
        %3101 = vmatprep.subr.mxu0 0.0
        %3102 = vmatpush1.msra.mxu0 %v3041
        %3103 = vmatprep.subr.mxu0 0.0
        %3104 = vmatpush1.msra.mxu0 0.0
        %3105 = vmatprep.subr.mxu0 0.0
        %3106 = vmatpush1.msra.mxu0 0.0
        %3107 = vmatprep.subr.mxu0 0.0
        %3108 = vmatpush1.msra.mxu0 0.0
        %3109 = vmatprep.subr.mxu0 0.0
        %3110 = vmatpush1.msra.mxu0 0.0
        %3111 = vmatprep.mubr.f32.mxu0 %v3045
        %3112 = vmatmul.mubr.f32.gmra.mrb[0].mxu0 %v3042
        %v3113 = vpop.f32.mrb[0].mxu0
        %v3114 = vadd.f32 0.0, %v3113
        %v3115 = vpop.f32.mrb[0].mxu0
        %3116 = vdwg.mxu0
        %v3117 = vadd.f32 %v3011, %v3114
        %v3118 = vld [vmem:[%s7 + $0x2a0] sm:$0xff]
        %v3119 = vld [vmem:[%s7 + $0x2a8] sm:$0xff]
        %v3120 = vld [vmem:[%s7 + $0x2b0] sm:$0xff]
        %v3121 = vld [vmem:[%s7 + $0x2b8] sm:$0xff]
        %v3122 = vld [vmem:[%s7 + $0x2c0] sm:$0xff]
        %v3123 = vld [vmem:[%s7 + $0x2c8] sm:$0xff]
        %v3124 = vld [vmem:[%s7 + $0x2d0] sm:$0xff]
        %v3125 = vld [vmem:[%s7 + $0x2d8] sm:$0xff]
        %v3126 = vld [vmem:[%s7 + $0x2e0] sm:$0xff]
        %v3127 = vld [vmem:[%s7 + $0x2e8] sm:$0xff]
        %v3128 = vld [vmem:[%s7 + $0x2f0] sm:$0xff]
        %v3129 = vld [vmem:[%s7 + $0x2f8] sm:$0xff]
        %v3130 = vld [vmem:[%s7 + $0x300] sm:$0xff]
        %v3131 = vld [vmem:[%s7 + $0x308] sm:$0xff]
        %v3132 = vld [vmem:[%s7 + $0x310] sm:$0xff]
        %v3133 = vld [vmem:[%s7 + $0x318] sm:$0xff]
        %v3134 = vld [vmem:[%s7 + $0x320] sm:$0xff]
        %v3135 = vld [vmem:[%s7 + $0x328] sm:$0xff]
        %v3136 = vld [vmem:[%s7 + $0x330] sm:$0xff]
        %v3137 = vld [vmem:[%s7 + $0x338] sm:$0xff]
        %v3138 = vld [vmem:[%s7 + $0x340] sm:$0xff]
        %v3139 = vld [vmem:[%s7 + $0x348] sm:$0xff]
        %v3140 = vld [vmem:[%s7 + $0x350] sm:$0xff]
        %v3141 = vld [vmem:[%s7 + $0x358] sm:$0xff]
        %v3142 = vld [vmem:[%s7 + $0x360] sm:$0xff]
        %v3143 = vld [vmem:[%s7 + $0x368] sm:$0xff]
        %v3144 = vld [vmem:[%s7 + $0x370] sm:$0xff]
        %v3145 = vld [vmem:[%s7 + $0x378] sm:$0xff]
        %v3146 = vrot.slane %v2807, 3
        %v3147 = vrot.slane %v2808, 3
        %v3149 = vsel %vm690, %v3147, 0
        %3151 = vmatprep.subr.mxu0 0.0
        %3152 = vmatpush1.msra.mxu0 %v3118
        %3153 = vmatprep.subr.mxu0 0.0
        %3154 = vmatpush1.msra.mxu0 %v3119
        %3155 = vmatprep.subr.mxu0 0.0
        %3156 = vmatpush1.msra.mxu0 %v3120
        %3157 = vmatprep.subr.mxu0 0.0
        %3158 = vmatpush1.msra.mxu0 %v3121
        %3159 = vmatprep.subr.mxu0 0.0
        %3160 = vmatpush1.msra.mxu0 %v3122
        %3161 = vmatprep.subr.mxu0 0.0
        %3162 = vmatpush1.msra.mxu0 %v3123
        %3163 = vmatprep.subr.mxu0 0.0
        %3164 = vmatpush1.msra.mxu0 %v3124
        %3165 = vmatprep.subr.mxu0 0.0
        %3166 = vmatpush1.msra.mxu0 %v3125
        %3167 = vmatprep.subr.mxu0 0.0
        %3168 = vmatpush1.msra.mxu0 %v3126
        %3169 = vmatprep.subr.mxu0 0.0
        %3170 = vmatpush1.msra.mxu0 %v3127
        %3171 = vmatprep.subr.mxu0 0.0
        %3172 = vmatpush1.msra.mxu0 %v3128
        %3173 = vmatprep.subr.mxu0 0.0
        %3174 = vmatpush1.msra.mxu0 %v3129
        %3175 = vmatprep.subr.mxu0 0.0
        %3176 = vmatpush1.msra.mxu0 %v3130
        %3177 = vmatprep.subr.mxu0 0.0
        %3178 = vmatpush1.msra.mxu0 %v3131
        %3179 = vmatprep.subr.mxu0 0.0
        %3180 = vmatpush1.msra.mxu0 %v3132
        %3181 = vmatprep.subr.mxu0 0.0
        %3182 = vmatpush1.msra.mxu0 %v3133
        %3183 = vmatprep.subr.mxu0 0.0
        %3184 = vmatpush1.msra.mxu0 %v3134
        %3185 = vmatprep.subr.mxu0 0.0
        %3186 = vmatpush1.msra.mxu0 %v3135
        %3187 = vmatprep.subr.mxu0 0.0
        %3188 = vmatpush1.msra.mxu0 %v3136
        %3189 = vmatprep.subr.mxu0 0.0
        %3190 = vmatpush1.msra.mxu0 %v3137
        %3191 = vmatprep.subr.mxu0 0.0
        %3192 = vmatpush1.msra.mxu0 %v3138
        %3193 = vmatprep.subr.mxu0 0.0
        %3194 = vmatpush1.msra.mxu0 %v3139
        %3195 = vmatprep.subr.mxu0 0.0
        %3196 = vmatpush1.msra.mxu0 %v3140
        %3197 = vmatprep.subr.mxu0 0.0
        %3198 = vmatpush1.msra.mxu0 %v3141
        %3199 = vmatprep.subr.mxu0 0.0
        %3200 = vmatpush1.msra.mxu0 %v3142
        %3201 = vmatprep.subr.mxu0 0.0
        %3202 = vmatpush1.msra.mxu0 %v3143
        %3203 = vmatprep.subr.mxu0 0.0
        %3204 = vmatpush1.msra.mxu0 %v3144
        %3205 = vmatprep.subr.mxu0 0.0
        %3206 = vmatpush1.msra.mxu0 %v3145
        %3207 = vmatprep.subr.mxu0 0.0
        %3208 = vmatpush1.msra.mxu0 0.0
        %3209 = vmatprep.subr.mxu0 0.0
        %3210 = vmatpush1.msra.mxu0 0.0
        %3211 = vmatprep.subr.mxu0 0.0
        %3212 = vmatpush1.msra.mxu0 0.0
        %3213 = vmatprep.subr.mxu0 0.0
        %3214 = vmatpush1.msra.mxu0 0.0
        %3215 = vmatprep.mubr.f32.mxu0 %v3149
        %3216 = vmatmul.mubr.f32.gmra.mrb[0].mxu0 %v3146
        %v3217 = vpop.f32.mrb[0].mxu0
        %v3218 = vadd.f32 0.0, %v3217
        %v3219 = vpop.f32.mrb[0].mxu0
        %3220 = vdwg.mxu0
        %v3221 = vadd.f32 %v3117, %v3218
        %v3222 = vld [vmem:[%s7 + $0x380] sm:$0xff]
        %v3223 = vld [vmem:[%s7 + $0x388] sm:$0xff]
        %v3224 = vld [vmem:[%s7 + $0x390] sm:$0xff]
        %v3225 = vld [vmem:[%s7 + $0x398] sm:$0xff]
        %v3226 = vld [vmem:[%s7 + $0x3a0] sm:$0xff]
        %v3227 = vld [vmem:[%s7 + $0x3a8] sm:$0xff]
        %v3228 = vld [vmem:[%s7 + $0x3b0] sm:$0xff]
        %v3229 = vld [vmem:[%s7 + $0x3b8] sm:$0xff]
        %v3230 = vld [vmem:[%s7 + $0x3c0] sm:$0xff]
        %v3231 = vld [vmem:[%s7 + $0x3c8] sm:$0xff]
        %v3232 = vld [vmem:[%s7 + $0x3d0] sm:$0xff]
        %v3233 = vld [vmem:[%s7 + $0x3d8] sm:$0xff]
        %v3234 = vld [vmem:[%s7 + $0x3e0] sm:$0xff]
        %v3235 = vld [vmem:[%s7 + $0x3e8] sm:$0xff]
        %v3236 = vld [vmem:[%s7 + $0x3f0] sm:$0xff]
        %v3237 = vld [vmem:[%s7 + $0x3f8] sm:$0xff]
        %v3238 = vld [vmem:[%s7 + $0x400] sm:$0xff]
        %v3239 = vld [vmem:[%s7 + $0x408] sm:$0xff]
        %v3240 = vld [vmem:[%s7 + $0x410] sm:$0xff]
        %v3241 = vld [vmem:[%s7 + $0x418] sm:$0xff]
        %v3242 = vld [vmem:[%s7 + $0x420] sm:$0xff]
        %v3243 = vld [vmem:[%s7 + $0x428] sm:$0xff]
        %v3244 = vld [vmem:[%s7 + $0x430] sm:$0xff]
        %v3245 = vld [vmem:[%s7 + $0x438] sm:$0xff]
        %v3246 = vld [vmem:[%s7 + $0x440] sm:$0xff]
        %v3247 = vld [vmem:[%s7 + $0x448] sm:$0xff]
        %v3248 = vld [vmem:[%s7 + $0x450] sm:$0xff]
        %v3249 = vld [vmem:[%s7 + $0x458] sm:$0xff]
        %v3250 = vrot.slane %v2807, 4
        %v3251 = vrot.slane %v2808, 4
        %v3253 = vsel %vm690, %v3251, 0
        %3255 = vmatprep.subr.mxu0 0.0
        %3256 = vmatpush1.msra.mxu0 %v3222
        %3257 = vmatprep.subr.mxu0 0.0
        %3258 = vmatpush1.msra.mxu0 %v3223
        %3259 = vmatprep.subr.mxu0 0.0
        %3260 = vmatpush1.msra.mxu0 %v3224
        %3261 = vmatprep.subr.mxu0 0.0
        %3262 = vmatpush1.msra.mxu0 %v3225
        %3263 = vmatprep.subr.mxu0 0.0
        %3264 = vmatpush1.msra.mxu0 %v3226
        %3265 = vmatprep.subr.mxu0 0.0
        %3266 = vmatpush1.msra.mxu0 %v3227
        %3267 = vmatprep.subr.mxu0 0.0
        %3268 = vmatpush1.msra.mxu0 %v3228
        %3269 = vmatprep.subr.mxu0 0.0
        %3270 = vmatpush1.msra.mxu0 %v3229
        %3271 = vmatprep.subr.mxu0 0.0
        %3272 = vmatpush1.msra.mxu0 %v3230
        %3273 = vmatprep.subr.mxu0 0.0
        %3274 = vmatpush1.msra.mxu0 %v3231
        %3275 = vmatprep.subr.mxu0 0.0
        %3276 = vmatpush1.msra.mxu0 %v3232
        %3277 = vmatprep.subr.mxu0 0.0
        %3278 = vmatpush1.msra.mxu0 %v3233
        %3279 = vmatprep.subr.mxu0 0.0
        %3280 = vmatpush1.msra.mxu0 %v3234
        %3281 = vmatprep.subr.mxu0 0.0
        %3282 = vmatpush1.msra.mxu0 %v3235
        %3283 = vmatprep.subr.mxu0 0.0
        %3284 = vmatpush1.msra.mxu0 %v3236
        %3285 = vmatprep.subr.mxu0 0.0
        %3286 = vmatpush1.msra.mxu0 %v3237
        %3287 = vmatprep.subr.mxu0 0.0
        %3288 = vmatpush1.msra.mxu0 %v3238
        %3289 = vmatprep.subr.mxu0 0.0
        %3290 = vmatpush1.msra.mxu0 %v3239
        %3291 = vmatprep.subr.mxu0 0.0
        %3292 = vmatpush1.msra.mxu0 %v3240
        %3293 = vmatprep.subr.mxu0 0.0
        %3294 = vmatpush1.msra.mxu0 %v3241
        %3295 = vmatprep.subr.mxu0 0.0
        %3296 = vmatpush1.msra.mxu0 %v3242
        %3297 = vmatprep.subr.mxu0 0.0
        %3298 = vmatpush1.msra.mxu0 %v3243
        %3299 = vmatprep.subr.mxu0 0.0
        %3300 = vmatpush1.msra.mxu0 %v3244
        %3301 = vmatprep.subr.mxu0 0.0
        %3302 = vmatpush1.msra.mxu0 %v3245
        %3303 = vmatprep.subr.mxu0 0.0
        %3304 = vmatpush1.msra.mxu0 %v3246
        %3305 = vmatprep.subr.mxu0 0.0
        %3306 = vmatpush1.msra.mxu0 %v3247
        %3307 = vmatprep.subr.mxu0 0.0
        %3308 = vmatpush1.msra.mxu0 %v3248
        %3309 = vmatprep.subr.mxu0 0.0
        %3310 = vmatpush1.msra.mxu0 %v3249
        %3311 = vmatprep.subr.mxu0 0.0
        %3312 = vmatpush1.msra.mxu0 0.0
        %3313 = vmatprep.subr.mxu0 0.0
        %3314 = vmatpush1.msra.mxu0 0.0
        %3315 = vmatprep.subr.mxu0 0.0
        %3316 = vmatpush1.msra.mxu0 0.0
        %3317 = vmatprep.subr.mxu0 0.0
        %3318 = vmatpush1.msra.mxu0 0.0
        %3319 = vmatprep.mubr.f32.mxu0 %v3253
        %3320 = vmatmul.mubr.f32.gmra.mrb[0].mxu0 %v3250
        %v3321 = vpop.f32.mrb[0].mxu0
        %v3322 = vadd.f32 0.0, %v3321
        %v3323 = vpop.f32.mrb[0].mxu0
        %3324 = vdwg.mxu0
        %v3325 = vadd.f32 %v3221, %v3322
        %v3326 = vld [vmem:[%s7 + $0x460] sm:$0xff]
        %v3327 = vld [vmem:[%s7 + $0x468] sm:$0xff]
        %v3328 = vld [vmem:[%s7 + $0x470] sm:$0xff]
        %v3329 = vld [vmem:[%s7 + $0x478] sm:$0xff]
        %v3330 = vld [vmem:[%s7 + $0x480] sm:$0xff]
        %v3331 = vld [vmem:[%s7 + $0x488] sm:$0xff]
        %v3332 = vld [vmem:[%s7 + $0x490] sm:$0xff]
        %v3333 = vld [vmem:[%s7 + $0x498] sm:$0xff]
        %v3334 = vld [vmem:[%s7 + $0x4a0] sm:$0xff]
        %v3335 = vld [vmem:[%s7 + $0x4a8] sm:$0xff]
        %v3336 = vld [vmem:[%s7 + $0x4b0] sm:$0xff]
        %v3337 = vld [vmem:[%s7 + $0x4b8] sm:$0xff]
        %v3338 = vld [vmem:[%s7 + $0x4c0] sm:$0xff]
        %v3339 = vld [vmem:[%s7 + $0x4c8] sm:$0xff]
        %v3340 = vld [vmem:[%s7 + $0x4d0] sm:$0xff]
        %v3341 = vld [vmem:[%s7 + $0x4d8] sm:$0xff]
        %v3342 = vld [vmem:[%s7 + $0x4e0] sm:$0xff]
        %v3343 = vld [vmem:[%s7 + $0x4e8] sm:$0xff]
        %v3344 = vld [vmem:[%s7 + $0x4f0] sm:$0xff]
        %v3345 = vld [vmem:[%s7 + $0x4f8] sm:$0xff]
        %v3346 = vld [vmem:[%s7 + $0x500] sm:$0xff]
        %v3347 = vld [vmem:[%s7 + $0x508] sm:$0xff]
        %v3348 = vld [vmem:[%s7 + $0x510] sm:$0xff]
        %v3349 = vld [vmem:[%s7 + $0x518] sm:$0xff]
        %v3350 = vld [vmem:[%s7 + $0x520] sm:$0xff]
        %v3351 = vld [vmem:[%s7 + $0x528] sm:$0xff]
        %v3352 = vld [vmem:[%s7 + $0x530] sm:$0xff]
        %v3353 = vld [vmem:[%s7 + $0x538] sm:$0xff]
        %v3354 = vrot.slane %v2807, 5
        %v3355 = vrot.slane %v2808, 5
        %v3357 = vsel %vm690, %v3355, 0
        %3359 = vmatprep.subr.mxu0 0.0
        %3360 = vmatpush1.msra.mxu0 %v3326
        %3361 = vmatprep.subr.mxu0 0.0
        %3362 = vmatpush1.msra.mxu0 %v3327
        %3363 = vmatprep.subr.mxu0 0.0
        %3364 = vmatpush1.msra.mxu0 %v3328
        %3365 = vmatprep.subr.mxu0 0.0
        %3366 = vmatpush1.msra.mxu0 %v3329
        %3367 = vmatprep.subr.mxu0 0.0
        %3368 = vmatpush1.msra.mxu0 %v3330
        %3369 = vmatprep.subr.mxu0 0.0
        %3370 = vmatpush1.msra.mxu0 %v3331
        %3371 = vmatprep.subr.mxu0 0.0
        %3372 = vmatpush1.msra.mxu0 %v3332
        %3373 = vmatprep.subr.mxu0 0.0
        %3374 = vmatpush1.msra.mxu0 %v3333
        %3375 = vmatprep.subr.mxu0 0.0
        %3376 = vmatpush1.msra.mxu0 %v3334
        %3377 = vmatprep.subr.mxu0 0.0
        %3378 = vmatpush1.msra.mxu0 %v3335
        %3379 = vmatprep.subr.mxu0 0.0
        %3380 = vmatpush1.msra.mxu0 %v3336
        %3381 = vmatprep.subr.mxu0 0.0
        %3382 = vmatpush1.msra.mxu0 %v3337
        %3383 = vmatprep.subr.mxu0 0.0
        %3384 = vmatpush1.msra.mxu0 %v3338
        %3385 = vmatprep.subr.mxu0 0.0
        %3386 = vmatpush1.msra.mxu0 %v3339
        %3387 = vmatprep.subr.mxu0 0.0
        %3388 = vmatpush1.msra.mxu0 %v3340
        %3389 = vmatprep.subr.mxu0 0.0
        %3390 = vmatpush1.msra.mxu0 %v3341
        %3391 = vmatprep.subr.mxu0 0.0
        %3392 = vmatpush1.msra.mxu0 %v3342
        %3393 = vmatprep.subr.mxu0 0.0
        %3394 = vmatpush1.msra.mxu0 %v3343
        %3395 = vmatprep.subr.mxu0 0.0
        %3396 = vmatpush1.msra.mxu0 %v3344
        %3397 = vmatprep.subr.mxu0 0.0
        %3398 = vmatpush1.msra.mxu0 %v3345
        %3399 = vmatprep.subr.mxu0 0.0
        %3400 = vmatpush1.msra.mxu0 %v3346
        %3401 = vmatprep.subr.mxu0 0.0
        %3402 = vmatpush1.msra.mxu0 %v3347
        %3403 = vmatprep.subr.mxu0 0.0
        %3404 = vmatpush1.msra.mxu0 %v3348
        %3405 = vmatprep.subr.mxu0 0.0
        %3406 = vmatpush1.msra.mxu0 %v3349
        %3407 = vmatprep.subr.mxu0 0.0
        %3408 = vmatpush1.msra.mxu0 %v3350
        %3409 = vmatprep.subr.mxu0 0.0
        %3410 = vmatpush1.msra.mxu0 %v3351
        %3411 = vmatprep.subr.mxu0 0.0
        %3412 = vmatpush1.msra.mxu0 %v3352
        %3413 = vmatprep.subr.mxu0 0.0
        %3414 = vmatpush1.msra.mxu0 %v3353
        %3415 = vmatprep.subr.mxu0 0.0
        %3416 = vmatpush1.msra.mxu0 0.0
        %3417 = vmatprep.subr.mxu0 0.0
        %3418 = vmatpush1.msra.mxu0 0.0
        %3419 = vmatprep.subr.mxu0 0.0
        %3420 = vmatpush1.msra.mxu0 0.0
        %3421 = vmatprep.subr.mxu0 0.0
        %3422 = vmatpush1.msra.mxu0 0.0
        %3423 = vmatprep.mubr.f32.mxu0 %v3357
        %3424 = vmatmul.mubr.f32.gmra.mrb[0].mxu0 %v3354
        %v3425 = vpop.f32.mrb[0].mxu0
        %v3426 = vadd.f32 0.0, %v3425
        %v3427 = vpop.f32.mrb[0].mxu0
        %3428 = vdwg.mxu0
        %v3429 = vadd.f32 %v3325, %v3426
        %v3430 = vld [vmem:[%s7 + $0x540] sm:$0xff]
        %v3431 = vld [vmem:[%s7 + $0x548] sm:$0xff]
        %v3432 = vld [vmem:[%s7 + $0x550] sm:$0xff]
        %v3433 = vld [vmem:[%s7 + $0x558] sm:$0xff]
        %v3434 = vld [vmem:[%s7 + $0x560] sm:$0xff]
        %v3435 = vld [vmem:[%s7 + $0x568] sm:$0xff]
        %v3436 = vld [vmem:[%s7 + $0x570] sm:$0xff]
        %v3437 = vld [vmem:[%s7 + $0x578] sm:$0xff]
        %v3438 = vld [vmem:[%s7 + $0x580] sm:$0xff]
        %v3439 = vld [vmem:[%s7 + $0x588] sm:$0xff]
        %v3440 = vld [vmem:[%s7 + $0x590] sm:$0xff]
        %v3441 = vld [vmem:[%s7 + $0x598] sm:$0xff]
        %v3442 = vld [vmem:[%s7 + $0x5a0] sm:$0xff]
        %v3443 = vld [vmem:[%s7 + $0x5a8] sm:$0xff]
        %v3444 = vld [vmem:[%s7 + $0x5b0] sm:$0xff]
        %v3445 = vld [vmem:[%s7 + $0x5b8] sm:$0xff]
        %v3446 = vld [vmem:[%s7 + $0x5c0] sm:$0xff]
        %v3447 = vld [vmem:[%s7 + $0x5c8] sm:$0xff]
        %v3448 = vld [vmem:[%s7 + $0x5d0] sm:$0xff]
        %v3449 = vld [vmem:[%s7 + $0x5d8] sm:$0xff]
        %v3450 = vld [vmem:[%s7 + $0x5e0] sm:$0xff]
        %v3451 = vld [vmem:[%s7 + $0x5e8] sm:$0xff]
        %v3452 = vld [vmem:[%s7 + $0x5f0] sm:$0xff]
        %v3453 = vld [vmem:[%s7 + $0x5f8] sm:$0xff]
        %v3454 = vld [vmem:[%s7 + $0x600] sm:$0xff]
        %v3455 = vld [vmem:[%s7 + $0x608] sm:$0xff]
        %v3456 = vld [vmem:[%s7 + $0x610] sm:$0xff]
        %v3457 = vld [vmem:[%s7 + $0x618] sm:$0xff]
        %v3458 = vrot.slane %v2807, 6
        %v3459 = vrot.slane %v2808, 6
        %v3461 = vsel %vm690, %v3459, 0
        %3463 = vmatprep.subr.mxu0 0.0
        %3464 = vmatpush1.msra.mxu0 %v3430
        %3465 = vmatprep.subr.mxu0 0.0
        %3466 = vmatpush1.msra.mxu0 %v3431
        %3467 = vmatprep.subr.mxu0 0.0
        %3468 = vmatpush1.msra.mxu0 %v3432
        %3469 = vmatprep.subr.mxu0 0.0
        %3470 = vmatpush1.msra.mxu0 %v3433
        %3471 = vmatprep.subr.mxu0 0.0
        %3472 = vmatpush1.msra.mxu0 %v3434
        %3473 = vmatprep.subr.mxu0 0.0
        %3474 = vmatpush1.msra.mxu0 %v3435
        %3475 = vmatprep.subr.mxu0 0.0
        %3476 = vmatpush1.msra.mxu0 %v3436
        %3477 = vmatprep.subr.mxu0 0.0
        %3478 = vmatpush1.msra.mxu0 %v3437
        %3479 = vmatprep.subr.mxu0 0.0
        %3480 = vmatpush1.msra.mxu0 %v3438
        %3481 = vmatprep.subr.mxu0 0.0
        %3482 = vmatpush1.msra.mxu0 %v3439
        %3483 = vmatprep.subr.mxu0 0.0
        %3484 = vmatpush1.msra.mxu0 %v3440
        %3485 = vmatprep.subr.mxu0 0.0
        %3486 = vmatpush1.msra.mxu0 %v3441
        %3487 = vmatprep.subr.mxu0 0.0
        %3488 = vmatpush1.msra.mxu0 %v3442
        %3489 = vmatprep.subr.mxu0 0.0
        %3490 = vmatpush1.msra.mxu0 %v3443
        %3491 = vmatprep.subr.mxu0 0.0
        %3492 = vmatpush1.msra.mxu0 %v3444
        %3493 = vmatprep.subr.mxu0 0.0
        %3494 = vmatpush1.msra.mxu0 %v3445
        %3495 = vmatprep.subr.mxu0 0.0
        %3496 = vmatpush1.msra.mxu0 %v3446
        %3497 = vmatprep.subr.mxu0 0.0
        %3498 = vmatpush1.msra.mxu0 %v3447
        %3499 = vmatprep.subr.mxu0 0.0
        %3500 = vmatpush1.msra.mxu0 %v3448
        %3501 = vmatprep.subr.mxu0 0.0
        %3502 = vmatpush1.msra.mxu0 %v3449
        %3503 = vmatprep.subr.mxu0 0.0
        %3504 = vmatpush1.msra.mxu0 %v3450
        %3505 = vmatprep.subr.mxu0 0.0
        %3506 = vmatpush1.msra.mxu0 %v3451
        %3507 = vmatprep.subr.mxu0 0.0
        %3508 = vmatpush1.msra.mxu0 %v3452
        %3509 = vmatprep.subr.mxu0 0.0
        %3510 = vmatpush1.msra.mxu0 %v3453
        %3511 = vmatprep.subr.mxu0 0.0
        %3512 = vmatpush1.msra.mxu0 %v3454
        %3513 = vmatprep.subr.mxu0 0.0
        %3514 = vmatpush1.msra.mxu0 %v3455
        %3515 = vmatprep.subr.mxu0 0.0
        %3516 = vmatpush1.msra.mxu0 %v3456
        %3517 = vmatprep.subr.mxu0 0.0
        %3518 = vmatpush1.msra.mxu0 %v3457
        %3519 = vmatprep.subr.mxu0 0.0
        %3520 = vmatpush1.msra.mxu0 0.0
        %3521 = vmatprep.subr.mxu0 0.0
        %3522 = vmatpush1.msra.mxu0 0.0
        %3523 = vmatprep.subr.mxu0 0.0
        %3524 = vmatpush1.msra.mxu0 0.0
        %3525 = vmatprep.subr.mxu0 0.0
        %3526 = vmatpush1.msra.mxu0 0.0
        %3527 = vmatprep.mubr.f32.mxu0 %v3461
        %3528 = vmatmul.mubr.f32.gmra.mrb[0].mxu0 %v3458
        %v3529 = vpop.f32.mrb[0].mxu0
        %v3530 = vadd.f32 0.0, %v3529
        %v3531 = vpop.f32.mrb[0].mxu0
        %3532 = vdwg.mxu0
        %v3533 = vadd.f32 %v3429, %v3530
        %v3534 = vld [vmem:[%s8] sm:$0x1]
        %v3535 = vadd.f32 %v3533, %v3534
        %v3536 = vmax.f32 %v3535, 0.0
        %v3537 = vld [vmem:[%s9] sm:$0xff]
        %v3538 = vld [vmem:[%s9 + $0x8] sm:$0xff]
        %v3539 = vld [vmem:[%s9 + $0x10] sm:$0xff]
        %v3540 = vld [vmem:[%s9 + $0x18] sm:$0xff]
        %v3541 = vld [vmem:[%s9 + $0x20] sm:$0xff]
        %v3542 = vld [vmem:[%s9 + $0x28] sm:$0xff]
        %v3543 = vld [vmem:[%s9 + $0x30] sm:$0xff]
        %v3544 = vld [vmem:[%s9 + $0x38] sm:$0xff]
        %v3545 = vld [vmem:[%s9 + $0x40] sm:$0xff]
        %v3546 = vld [vmem:[%s9 + $0x48] sm:$0xff]
        %v3547 = vld [vmem:[%s9 + $0x50] sm:$0xff]
        %v3548 = vld [vmem:[%s9 + $0x58] sm:$0xff]
        %v3549 = vld [vmem:[%s9 + $0x60] sm:$0xff]
        %v3550 = vld [vmem:[%s9 + $0x68] sm:$0xff]
        %v3551 = vld [vmem:[%s9 + $0x70] sm:$0xff]
        %v3552 = vld [vmem:[%s9 + $0x78] sm:$0xff]
        %v3553 = vld [vmem:[%s10] sm:$0x1]
        %3554 = vmatprep.subr.mxu0 0.0
        %3555 = vmatpush1.msra.mxu0 %v3537
        %3556 = vmatprep.subr.mxu0 0.0
        %3557 = vmatpush1.msra.mxu0 %v3538
        %3558 = vmatprep.subr.mxu0 0.0
        %3559 = vmatpush1.msra.mxu0 %v3539
        %3560 = vmatprep.subr.mxu0 0.0
        %3561 = vmatpush1.msra.mxu0 %v3540
        %3562 = vmatprep.subr.mxu0 0.0
        %3563 = vmatpush1.msra.mxu0 %v3541
        %3564 = vmatprep.subr.mxu0 0.0
        %3565 = vmatpush1.msra.mxu0 %v3542
        %3566 = vmatprep.subr.mxu0 0.0
        %3567 = vmatpush1.msra.mxu0 %v3543
        %3568 = vmatprep.subr.mxu0 0.0
        %3569 = vmatpush1.msra.mxu0 %v3544
        %3570 = vmatprep.subr.mxu0 0.0
        %3571 = vmatpush1.msra.mxu0 %v3545
        %3572 = vmatprep.subr.mxu0 0.0
        %3573 = vmatpush1.msra.mxu0 %v3546
        %3574 = vmatprep.subr.mxu0 0.0
        %3575 = vmatpush1.msra.mxu0 %v3547
        %3576 = vmatprep.subr.mxu0 0.0
        %3577 = vmatpush1.msra.mxu0 %v3548
        %3578 = vmatprep.subr.mxu0 0.0
        %3579 = vmatpush1.msra.mxu0 %v3549
        %3580 = vmatprep.subr.mxu0 0.0
        %3581 = vmatpush1.msra.mxu0 %v3550
        %3582 = vmatprep.subr.mxu0 0.0
        %3583 = vmatpush1.msra.mxu0 %v3551
        %3584 = vmatprep.subr.mxu0 0.0
        %3585 = vmatpush1.msra.mxu0 %v3552
        %3586 = vmatprep.subr.mxu0 0.0
        %3587 = vmatpush1.msra.mxu0 0.0
        %3588 = vmatprep.subr.mxu0 0.0
        %3589 = vmatpush1.msra.mxu0 0.0
        %3590 = vmatprep.subr.mxu0 0.0
        %3591 = vmatpush1.msra.mxu0 0.0
        %3592 = vmatprep.subr.mxu0 0.0
        %3593 = vmatpush1.msra.mxu0 0.0
        %3594 = vmatprep.subr.mxu0 0.0
        %3595 = vmatpush1.msra.mxu0 0.0
        %3596 = vmatprep.subr.mxu0 0.0
        %3597 = vmatpush1.msra.mxu0 0.0
        %3598 = vmatprep.subr.mxu0 0.0
        %3599 = vmatpush1.msra.mxu0 0.0
        %3600 = vmatprep.subr.mxu0 0.0
        %3601 = vmatpush1.msra.mxu0 0.0
        %3602 = vmatprep.subr.mxu0 0.0
        %3603 = vmatpush1.msra.mxu0 0.0
        %3604 = vmatprep.subr.mxu0 0.0
        %3605 = vmatpush1.msra.mxu0 0.0
        %3606 = vmatprep.subr.mxu0 0.0
        %3607 = vmatpush1.msra.mxu0 0.0
        %3608 = vmatprep.subr.mxu0 0.0
        %3609 = vmatpush1.msra.mxu0 0.0
        %3610 = vmatprep.subr.mxu0 0.0
        %3611 = vmatpush1.msra.mxu0 0.0
        %3612 = vmatprep.subr.mxu0 0.0
        %3613 = vmatpush1.msra.mxu0 0.0
        %3614 = vmatprep.subr.mxu0 0.0
        %3615 = vmatpush1.msra.mxu0 0.0
        %3616 = vmatprep.subr.mxu0 0.0
        %3617 = vmatpush1.msra.mxu0 0.0
        %3618 = vmatprep.mubr.f32.mxu0 0.0
        %3619 = vmatmul.mubr.f32.gmra.mrb[0].mxu0 %v3536
        %v3620 = vpop.f32.mrb[0].mxu0
        %v3621 = vadd.f32 %v3553, %v3620
        %v3622 = vpop.f32.mrb[0].mxu0
        %3623 = vdwg.mxu0
        %vm3624 = vcmask 73728
        %v3625 = vsel %vm3624, %v3621, -inf
        %3626 = vmax.xlane.f32.xlu0 %v3625
        %v3627 = vpop.xlane.xlu0 %3626
        %v3628 = vsub.f32 %v3621, %v3627
        %v3629 = vmul.f32 %v3628, 1.442695
        %v3630 = vpow.pop %v3629
        %v3631 = vsel %vm3624, %v3630, 0.0
        %3632 = vadd.xlane.f32.xlu0 %v3631
        %v3633 = vpop.xlane.xlu0 %3632
        %v3634 = vlog2.pop %v3633
        %v3635 = vmul.f32 %v3634, 0.6931472
        %v3636 = vsub.f32 %v3628, %v3635
        %3637 = vst.msk [vmem:[%s378] sm:$0x1] %vm3624, %v3636
        %s3638 = sand.u32 %s269, 1
        %s3639 = scalar_lea.sflag [#allocation5], %s3638
        %s3640 = sand.u32 %s269, 1
        %s3641 = scalar_lea.vmem [#allocation4], %s3640
        // Predicated region
        $region65: #{lenet_multi_forward.1} parent=63 // pred_check
          %p3642 = pneg %p279
        $region66: #{lenet_multi_forward.1} parent=63 // pred_check_branch
          %3644 = sbr.rel (%p3642) target = $region68
        $region67: #{lenet_multi_forward.1} parent=63 // pred_region
          %s3646 = ssub.s32 16, 16
          %3647 = vsyncadd %s3639, %s3646
          %s3648 = smul.addr %s25, 16
          %s3649 = scalar_lea.hbm %s11, %s3648
          %s3651 = sshll.u32 %s3641, 4
          %s3652 = int_to_ptr.vmem [resolvable:$true] %s3651
          %3654 = dma.vmem_to_hbm [thread:$0]  %s3652, 16, %s3649, %s3639
        $region68: #{lenet_multi_forward.1} parent=63 // pred_fallthru
          _
      $region64: #{lenet_multi_forward.1} parent=5 // pred_fallthru
        _
      %p3655 = scmp.le.s32.totalorder 2, %s20
      // Predicated region
      $region69: #{lenet_multi_forward.1} parent=5 // pred_check
        %p3656 = pneg %p3655
      $region70: #{lenet_multi_forward.1} parent=5 // pred_check_branch
        %3658 = sbr.rel (%p3656) target = $region72
      $region71: #{lenet_multi_forward.1} parent=5 // pred_region
        %s3659 = ssub.s32 %s20, 2
        // Predicated region
        $region73: #{lenet_multi_forward.1} parent=71 // pred_check
          %p3660 = pneg %p285
        $region74: #{lenet_multi_forward.1} parent=71 // pred_check_branch
          %3662 = sbr.rel (%p3660) target = $region76
        $region75: #{lenet_multi_forward.1} parent=71 // pred_region
          %s3663 = sand.u32 %s270, 1
          %s3664 = scalar_lea.sflag [#allocation5], %s3663
          %s3665 = sand.u32 %s270, 1
          %s3666 = scalar_lea.vmem [#allocation4], %s3665
          %3667 = dma.done %s3664, 16
        $region76: #{lenet_multi_forward.1} parent=71 // pred_fallthru
          _
      $region72: #{lenet_multi_forward.1} parent=5 // pred_fallthru
        _
    $region6: #{lenet_multi_forward.1} parent=1 // loop_footer
      %s24 = sadd.s32 1, %s20
    $region7: #{lenet_multi_forward.1} parent=1 // loop_footer_branch
      %19 = sbr.rel target = $region3
    $region8: #{lenet_multi_forward.1} parent=1 // loop_exit
      _
    %3668 = vsyncpa [#allocation5], 1
    %s3669 = scalar_lea.sflag [#allocation5], 1
    %3670 = vsyncpa %s3669, 1

</llo_original>
